<compile_context>
chip_gen: v5e
topology: v5e:2x2
jax: 0.10.0
libtpu: 0.0.40
codegen_flags: <defaults>
</compile_context>

<pallas_src>
import functools
import math

import jax
import jax.numpy as jnp
from jax.experimental import pallas as pl
from jax.experimental.pallas import tpu as pltpu

VOCAB = 256          # vocab_size (small, lane-aligned)
EMB = 128            # emb_size (module default)
NHEAD = 4            # nhead    (module default)
NHID = 256           # nhid     (module default)
NLAYERS = 2          # nlayers  (module default)
HEAD_DIM = EMB // NHEAD
LN_EPS = 1e-5
_ATTN_SCALE = 1.0 / math.sqrt(HEAD_DIM)


# --------------------------------------------------------------------------
# Fused Pallas kernel (one batch-block of Bb elements per grid step)
# --------------------------------------------------------------------------
def _layernorm(x, g, b):
    mu = jnp.mean(x, axis=-1, keepdims=True)
    var = jnp.mean((x - mu) ** 2, axis=-1, keepdims=True)
    return (x - mu) * jax.lax.rsqrt(var + LN_EPS) * g + b


def fused_transformer_kernel(seq_len, tok_ref, emb_ref, wqkv_ref, bqkv_ref,
                             wo_ref, bo_ref, g1_ref, be1_ref, w1_ref, b1_ref,
                             w2_ref, b2_ref, g2_ref, be2_ref, fcw_ref, fcb_ref,
                             out_ref):
    M = tok_ref.shape[0]                  # Bb * S tokens handled by this grid step
    S = seq_len
    Bb = M // S

    # ---- embedding lookup: in-kernel one-hot (iota compare) @ pre-scaled table ----
    ids = tok_ref[...]                                                # (M, 1) int32
    iot = jax.lax.broadcasted_iota(jnp.int32, (M, VOCAB), 1)
    onehot = (iot == ids).astype(jnp.bfloat16)                        # (M, VOCAB)
    x = jnp.dot(onehot, emb_ref[...],
                preferred_element_type=jnp.float32)                   # (M, E) f32

    dn_qkt = (((2,), (2,)), ((0,), (0,)))   # (Bb,S,D) @ (Bb,S,D) -> (Bb,S,S)
    dn_pv = (((2,), (1,)), ((0,), (0,)))    # (Bb,S,S) @ (Bb,S,D) -> (Bb,S,D)

    for l in range(NLAYERS):                # static unroll over the 2 layers
        xb = x.astype(jnp.bfloat16)                                   # (M, E)

        # ---- fused QKV: single lane-dense (M,128)@(128,384) MXU pass + one bias add
        qkv = jnp.dot(xb, wqkv_ref[l],
                      preferred_element_type=jnp.float32) + bqkv_ref[l]   # (M, 3E)

        q = (qkv[:, 0 * EMB:1 * EMB] * _ATTN_SCALE).astype(jnp.bfloat16)
        k = qkv[:, 1 * EMB:2 * EMB].astype(jnp.bfloat16)
        v = qkv[:, 2 * EMB:3 * EMB].astype(jnp.bfloat16)

        # (M, E) -> (Bb, S, E): leading-dim split only (no lane relayout)
        q = q.reshape(Bb, S, EMB)
        k = k.reshape(Bb, S, EMB)
        v = v.reshape(Bb, S, EMB)

        # ---- multi-head self attention (per-head score matmuls are inherently K=32)
        head_outs = []
        for h in range(NHEAD):
            sl = slice(h * HEAD_DIM, (h + 1) * HEAD_DIM)
            qh, kh, vh = q[:, :, sl], k[:, :, sl], v[:, :, sl]        # (Bb, S, D)
            s = jax.lax.dot_general(qh, kh, dn_qkt,
                                    preferred_element_type=jnp.float32)  # (Bb,S,S)
            s = s - jnp.max(s, axis=-1, keepdims=True)
            p = jnp.exp(s)
            p = p * pl.reciprocal(jnp.sum(p, axis=-1, keepdims=True), approx=True)
            ao = jax.lax.dot_general(p.astype(jnp.bfloat16), vh, dn_pv,
                                     preferred_element_type=jnp.float32)  # (Bb,S,D)
            head_outs.append(ao.reshape(M, HEAD_DIM).astype(jnp.bfloat16))

        # heads concatenated along lanes -> one K=128 lane-dense output projection
        ao_cat = jnp.concatenate(head_outs, axis=-1)                   # (M, E) bf16
        attn = jnp.dot(ao_cat, wo_ref[l],
                       preferred_element_type=jnp.float32) + bo_ref[l]    # (M, E)

        # ---- residual + LayerNorm1 (f32) ----
        x1 = _layernorm(x + attn, g1_ref[l], be1_ref[l])

        # ---- feed-forward (ReLU) + residual + LayerNorm2 ----
        h1 = jnp.dot(x1.astype(jnp.bfloat16), w1_ref[l],
                     preferred_element_type=jnp.float32) + b1_ref[l]
        h1 = jnp.maximum(h1, 0.0)
        h2 = jnp.dot(h1.astype(jnp.bfloat16), w2_ref[l],
                     preferred_element_type=jnp.float32) + b2_ref[l]
        x = _layernorm(x1 + h2, g2_ref[l], be2_ref[l])

    # ---- final vocab projection (lane-dense, N = 256) ----
    logits = jnp.dot(x.astype(jnp.bfloat16), fcw_ref[...],
                     preferred_element_type=jnp.float32) + fcb_ref[...]
    out_ref[...] = logits.astype(out_ref.dtype)


# --------------------------------------------------------------------------
# Wrapper (single pallas_call)
# --------------------------------------------------------------------------
_WEIGHT_ORDER = ("embed", "wqkv", "bqkv", "wo", "bo", "g1", "be1",
                 "w1", "b1", "w2", "b2", "g2", "be2", "fc_w", "fc_b")


def _full_spec(shape):
    nd = len(shape)
    return pl.BlockSpec(shape, lambda g, _nd=nd: (0,) * _nd)


def _num_grid_steps(batch):
    # v7x has 2 TensorCores -> 2 balanced "parallel" batch blocks; v5e/v6e have a
    # single TC -> 1 grid step (stack the whole batch for full sublane/MXU fill).
    try:
        kind = jax.devices()[0].device_kind.lower()
    except Exception:
        kind = ""
    if "v7" in kind and batch % 2 == 0:
        return 2
    return 1


def simple_transformer_forward(src, params):
    # src: (S, B) int32 token ids (PyTorch batch_first=False layout)
    S, B = src.shape
    G = _num_grid_steps(B)
    Bb = B // G
    tokens = jnp.transpose(src).reshape(B * S, 1)          # batch-major token stream

    weights = [params[k] for k in _WEIGHT_ORDER]
    kernel = functools.partial(fused_transformer_kernel, S)

    logits = pl.pallas_call(
        kernel,
        out_shape=jax.ShapeDtypeStruct((B * S, VOCAB), jnp.float32),
        grid=(G,),
        in_specs=[pl.BlockSpec((Bb * S, 1), lambda g: (g, 0))]
                 + [_full_spec(w.shape) for w in weights],
        out_specs=pl.BlockSpec((Bb * S, VOCAB), lambda g: (g, 0)),
        compiler_params=pltpu.CompilerParams(dimension_semantics=("parallel",)),
    )(tokens, *weights)
    return jnp.transpose(logits.reshape(B, S, VOCAB), (1, 0, 2))   # (S, B, vocab)


# --------------------------------------------------------------------------
# Deterministic parameter initialization
#   - matmul weights stored in bf16; QKV fused as (E, 3E); W_o in concat-head layout
#   - sqrt(EMB) embedding scale folded into the table
#   - biases / LayerNorm params kept in f32
# --------------------------------------------------------------------------
def init_params(key):
    ks = jax.random.split(key, 6)

    def rnd(k, shape, scale=0.05):
        return (jax.random.normal(k, shape, jnp.float32) * scale).astype(jnp.bfloat16)

    embed = jax.random.normal(ks[0], (VOCAB, EMB), jnp.float32)
    return {
        "embed": (embed * math.sqrt(EMB)).astype(jnp.bfloat16),
        "wqkv": rnd(ks[1], (NLAYERS, EMB, 3 * EMB)),       # fused Q|K|V
        "bqkv": jnp.zeros((NLAYERS, 1, 3 * EMB), jnp.float32),
        "wo":   rnd(ks[2], (NLAYERS, EMB, EMB)),            # concat-head layout
        "bo":   jnp.zeros((NLAYERS, 1, EMB), jnp.float32),
        "g1":   jnp.ones((NLAYERS, 1, EMB), jnp.float32),
        "be1":  jnp.zeros((NLAYERS, 1, EMB), jnp.float32),
        "w1":   rnd(ks[3], (NLAYERS, EMB, NHID)),
        "b1":   jnp.zeros((NLAYERS, 1, NHID), jnp.float32),
        "w2":   rnd(ks[4], (NLAYERS, NHID, EMB)),
        "b2":   jnp.zeros((NLAYERS, 1, EMB), jnp.float32),
        "g2":   jnp.ones((NLAYERS, 1, EMB), jnp.float32),
        "be2":  jnp.zeros((NLAYERS, 1, EMB), jnp.float32),
        "fc_w": rnd(ks[5], (EMB, VOCAB)),
        "fc_b": jnp.zeros((1, VOCAB), jnp.float32),
    }


if __name__ == "__main__":
    key = jax.random.PRNGKey(0)
    pkey, dkey = jax.random.split(key)
    params = init_params(pkey)

    S, B = 8, 2
    src = jax.random.randint(dkey, (S, B), 0, VOCAB, dtype=jnp.int32)

    fwd = jax.jit(simple_transformer_forward)
    out = jax.block_until_ready(fwd(src, params))
    assert out.shape == (S, B, VOCAB), out.shape
    assert bool(jnp.all(jnp.isfinite(out)))
    print("KERNEL_OK")
</pallas_src>

<mosaic_0001>
module attributes {stable_mosaic.version = 11 : i64} {
  func.func @fused_transformer_kernel(%arg0: i32, %arg1: memref<16x1xi32, #tpu.memory_space<vmem>>, %arg2: memref<256x128xbf16, #tpu.memory_space<vmem>>, %arg3: memref<2x128x384xbf16, #tpu.memory_space<vmem>>, %arg4: memref<2x1x384xf32, #tpu.memory_space<vmem>>, %arg5: memref<2x128x128xbf16, #tpu.memory_space<vmem>>, %arg6: memref<2x1x128xf32, #tpu.memory_space<vmem>>, %arg7: memref<2x1x128xf32, #tpu.memory_space<vmem>>, %arg8: memref<2x1x128xf32, #tpu.memory_space<vmem>>, %arg9: memref<2x128x256xbf16, #tpu.memory_space<vmem>>, %arg10: memref<2x1x256xf32, #tpu.memory_space<vmem>>, %arg11: memref<2x256x128xbf16, #tpu.memory_space<vmem>>, %arg12: memref<2x1x128xf32, #tpu.memory_space<vmem>>, %arg13: memref<2x1x128xf32, #tpu.memory_space<vmem>>, %arg14: memref<2x1x128xf32, #tpu.memory_space<vmem>>, %arg15: memref<128x256xbf16, #tpu.memory_space<vmem>>, %arg16: memref<1x256xf32, #tpu.memory_space<vmem>>, %arg17: memref<16x256xf32, #tpu.memory_space<vmem>>) attributes {dimension_semantics = [#tpu.dimension_semantics<parallel>], iteration_bounds = array<i64: 1>, scalar_prefetch = 0 : i64, scratch_operands = 0 : i64, tpu.core_type = #tpu.core_type<tc>, window_params = [{transform_indices = @transform_0, window_bounds = array<i64: 16, 1>}, {pipeline_mode = #tpu.pipeline_mode<synchronous>, transform_indices = @transform_1, window_bounds = array<i64: 256, 128>}, {pipeline_mode = #tpu.pipeline_mode<synchronous>, transform_indices = @transform_2, window_bounds = array<i64: 2, 128, 384>}, {pipeline_mode = #tpu.pipeline_mode<synchronous>, transform_indices = @transform_3, window_bounds = array<i64: 2, 1, 384>}, {pipeline_mode = #tpu.pipeline_mode<synchronous>, transform_indices = @transform_4, window_bounds = array<i64: 2, 128, 128>}, {pipeline_mode = #tpu.pipeline_mode<synchronous>, transform_indices = @transform_5, window_bounds = array<i64: 2, 1, 128>}, {pipeline_mode = #tpu.pipeline_mode<synchronous>, transform_indices = @transform_6, window_bounds = array<i64: 2, 1, 128>}, {pipeline_mode = #tpu.pipeline_mode<synchronous>, transform_indices = @transform_7, window_bounds = array<i64: 2, 1, 128>}, {pipeline_mode = #tpu.pipeline_mode<synchronous>, transform_indices = @transform_8, window_bounds = array<i64: 2, 128, 256>}, {pipeline_mode = #tpu.pipeline_mode<synchronous>, transform_indices = @transform_9, window_bounds = array<i64: 2, 1, 256>}, {pipeline_mode = #tpu.pipeline_mode<synchronous>, transform_indices = @transform_10, window_bounds = array<i64: 2, 256, 128>}, {pipeline_mode = #tpu.pipeline_mode<synchronous>, transform_indices = @transform_11, window_bounds = array<i64: 2, 1, 128>}, {pipeline_mode = #tpu.pipeline_mode<synchronous>, transform_indices = @transform_12, window_bounds = array<i64: 2, 1, 128>}, {pipeline_mode = #tpu.pipeline_mode<synchronous>, transform_indices = @transform_13, window_bounds = array<i64: 2, 1, 128>}, {pipeline_mode = #tpu.pipeline_mode<synchronous>, transform_indices = @transform_14, window_bounds = array<i64: 128, 256>}, {pipeline_mode = #tpu.pipeline_mode<synchronous>, transform_indices = @transform_15, window_bounds = array<i64: 1, 256>}, {transform_indices = @transform_16, window_bounds = array<i64: 16, 256>}]} {
    %c0 = arith.constant 0 : index
    %c0_0 = arith.constant 0 : index
    %0 = vector.load %arg1[%c0, %c0_0] : memref<16x1xi32, #tpu.memory_space<vmem>>, vector<16x1xi32>
    %1 = tpu.iota {dimensions = array<i32: 1>} : vector<16x256xi32>
    %2 = vector.broadcast %0 : vector<16x1xi32> to vector<16x256xi32>
    %3 = arith.cmpi eq, %1, %2 : vector<16x256xi32>
    %4 = arith.extui %3 : vector<16x256xi1> to vector<16x256xi32>
    %5 = arith.sitofp %4 : vector<16x256xi32> to vector<16x256xf32>
    %6 = arith.truncf %5 : vector<16x256xf32> to vector<16x256xbf16>
    %c0_1 = arith.constant 0 : index
    %c0_2 = arith.constant 0 : index
    %7 = vector.load %arg2[%c0_1, %c0_2] : memref<256x128xbf16, #tpu.memory_space<vmem>>, vector<256x128xbf16>
    %cst = arith.constant dense<0.000000e+00> : vector<16x128xf32>
    %8 = tpu.matmul %6, %7, %cst {dimension_numbers = #tpu.dot_dimension_numbers<[1], [0], [0], [1], [0, 0, 1, 1], [], []>} : vector<16x256xbf16>, vector<256x128xbf16>, vector<16x128xf32> -> vector<16x128xf32>
    %9 = arith.truncf %8 : vector<16x128xf32> to vector<16x128xbf16>
    %c0_3 = arith.constant 0 : index
    %c0_4 = arith.constant 0 : index
    %c0_5 = arith.constant 0 : index
    %10 = vector.load %arg3[%c0_3, %c0_4, %c0_5] : memref<2x128x384xbf16, #tpu.memory_space<vmem>>, vector<1x128x384xbf16>
    %11 = vector.shape_cast %10 : vector<1x128x384xbf16> to vector<128x384xbf16>
    %cst_6 = arith.constant dense<0.000000e+00> : vector<16x384xf32>
    %12 = tpu.matmul %9, %11, %cst_6 {dimension_numbers = #tpu.dot_dimension_numbers<[1], [0], [0], [1], [0, 0, 1, 1], [], []>} : vector<16x128xbf16>, vector<128x384xbf16>, vector<16x384xf32> -> vector<16x384xf32>
    %c0_7 = arith.constant 0 : index
    %c0_8 = arith.constant 0 : index
    %c0_9 = arith.constant 0 : index
    %13 = vector.load %arg4[%c0_7, %c0_8, %c0_9] : memref<2x1x384xf32, #tpu.memory_space<vmem>>, vector<1x1x384xf32>
    %14 = vector.shape_cast %13 : vector<1x1x384xf32> to vector<1x384xf32>
    %15 = vector.broadcast %14 : vector<1x384xf32> to vector<16x384xf32>
    %16 = arith.addf %12, %15 : vector<16x384xf32>
    %17 = vector.extract_strided_slice %16 {offsets = [0, 0], sizes = [16, 128], strides = [1, 1]} : vector<16x384xf32> to vector<16x128xf32>
    %cst_10 = arith.constant 0.176776692 : f32
    %18 = vector.broadcast %cst_10 : f32 to vector<16x128xf32>
    %19 = arith.mulf %17, %18 : vector<16x128xf32>
    %20 = arith.truncf %19 : vector<16x128xf32> to vector<16x128xbf16>
    %21 = vector.extract_strided_slice %16 {offsets = [0, 128], sizes = [16, 128], strides = [1, 1]} : vector<16x384xf32> to vector<16x128xf32>
    %22 = arith.truncf %21 : vector<16x128xf32> to vector<16x128xbf16>
    %23 = vector.extract_strided_slice %16 {offsets = [0, 256], sizes = [16, 128], strides = [1, 1]} : vector<16x384xf32> to vector<16x128xf32>
    %24 = arith.truncf %23 : vector<16x128xf32> to vector<16x128xbf16>
    %25 = vector.shape_cast %20 : vector<16x128xbf16> to vector<2x8x128xbf16>
    %26 = vector.shape_cast %22 : vector<16x128xbf16> to vector<2x8x128xbf16>
    %27 = vector.shape_cast %24 : vector<16x128xbf16> to vector<2x8x128xbf16>
    %28 = vector.extract_strided_slice %25 {offsets = [0, 0, 0], sizes = [2, 8, 32], strides = [1, 1, 1]} : vector<2x8x128xbf16> to vector<2x8x32xbf16>
    %29 = vector.extract_strided_slice %26 {offsets = [0, 0, 0], sizes = [2, 8, 32], strides = [1, 1, 1]} : vector<2x8x128xbf16> to vector<2x8x32xbf16>
    %30 = vector.extract_strided_slice %27 {offsets = [0, 0, 0], sizes = [2, 8, 32], strides = [1, 1, 1]} : vector<2x8x128xbf16> to vector<2x8x32xbf16>
    %cst_11 = arith.constant dense<0.000000e+00> : vector<2x8x8xf32>
    %31 = tpu.matmul %28, %29, %cst_11 {dimension_numbers = #tpu.dot_dimension_numbers<[2], [2], [1], [1], [0, 0, 0, 1, 1, 1], [0], [0]>} : vector<2x8x32xbf16>, vector<2x8x32xbf16>, vector<2x8x8xf32> -> vector<2x8x8xf32>
    %cst_12 = arith.constant dense<0xFF800000> : vector<2x8xf32>
    %32 = vector.multi_reduction <maximumf>, %31, %cst_12 [2] : vector<2x8x8xf32> to vector<2x8xf32>
    %33 = vector.shape_cast %32 : vector<2x8xf32> to vector<2x8x1xf32>
    %34 = vector.broadcast %33 : vector<2x8x1xf32> to vector<2x8x8xf32>
    %35 = arith.subf %31, %34 : vector<2x8x8xf32>
    %36 = math.exp %35 : vector<2x8x8xf32>
    %cst_13 = arith.constant dense<0.000000e+00> : vector<2x8xf32>
    %37 = vector.multi_reduction <add>, %36, %cst_13 [2] : vector<2x8x8xf32> to vector<2x8xf32>
    %38 = vector.shape_cast %37 : vector<2x8xf32> to vector<2x8x1xf32>
    %39 = tpu.reciprocal %38 {approx = true} : vector<2x8x1xf32> -> vector<2x8x1xf32>
    %40 = vector.broadcast %39 : vector<2x8x1xf32> to vector<2x8x8xf32>
    %41 = arith.mulf %36, %40 : vector<2x8x8xf32>
    %42 = arith.truncf %41 : vector<2x8x8xf32> to vector<2x8x8xbf16>
    %cst_14 = arith.constant dense<0.000000e+00> : vector<2x8x32xf32>
    %43 = tpu.matmul %42, %30, %cst_14 {dimension_numbers = #tpu.dot_dimension_numbers<[2], [1], [1], [2], [0, 0, 0, 1, 1, 2], [0], [0]>} : vector<2x8x8xbf16>, vector<2x8x32xbf16>, vector<2x8x32xf32> -> vector<2x8x32xf32>
    %44 = vector.shape_cast %43 : vector<2x8x32xf32> to vector<16x32xf32>
    %45 = arith.truncf %44 : vector<16x32xf32> to vector<16x32xbf16>
    %46 = vector.extract_strided_slice %25 {offsets = [0, 0, 32], sizes = [2, 8, 32], strides = [1, 1, 1]} : vector<2x8x128xbf16> to vector<2x8x32xbf16>
    %47 = vector.extract_strided_slice %26 {offsets = [0, 0, 32], sizes = [2, 8, 32], strides = [1, 1, 1]} : vector<2x8x128xbf16> to vector<2x8x32xbf16>
    %48 = vector.extract_strided_slice %27 {offsets = [0, 0, 32], sizes = [2, 8, 32], strides = [1, 1, 1]} : vector<2x8x128xbf16> to vector<2x8x32xbf16>
    %cst_15 = arith.constant dense<0.000000e+00> : vector<2x8x8xf32>
    %49 = tpu.matmul %46, %47, %cst_15 {dimension_numbers = #tpu.dot_dimension_numbers<[2], [2], [1], [1], [0, 0, 0, 1, 1, 1], [0], [0]>} : vector<2x8x32xbf16>, vector<2x8x32xbf16>, vector<2x8x8xf32> -> vector<2x8x8xf32>
    %cst_16 = arith.constant dense<0xFF800000> : vector<2x8xf32>
    %50 = vector.multi_reduction <maximumf>, %49, %cst_16 [2] : vector<2x8x8xf32> to vector<2x8xf32>
    %51 = vector.shape_cast %50 : vector<2x8xf32> to vector<2x8x1xf32>
    %52 = vector.broadcast %51 : vector<2x8x1xf32> to vector<2x8x8xf32>
    %53 = arith.subf %49, %52 : vector<2x8x8xf32>
    %54 = math.exp %53 : vector<2x8x8xf32>
    %cst_17 = arith.constant dense<0.000000e+00> : vector<2x8xf32>
    %55 = vector.multi_reduction <add>, %54, %cst_17 [2] : vector<2x8x8xf32> to vector<2x8xf32>
    %56 = vector.shape_cast %55 : vector<2x8xf32> to vector<2x8x1xf32>
    %57 = tpu.reciprocal %56 {approx = true} : vector<2x8x1xf32> -> vector<2x8x1xf32>
    %58 = vector.broadcast %57 : vector<2x8x1xf32> to vector<2x8x8xf32>
    %59 = arith.mulf %54, %58 : vector<2x8x8xf32>
    %60 = arith.truncf %59 : vector<2x8x8xf32> to vector<2x8x8xbf16>
    %cst_18 = arith.constant dense<0.000000e+00> : vector<2x8x32xf32>
    %61 = tpu.matmul %60, %48, %cst_18 {dimension_numbers = #tpu.dot_dimension_numbers<[2], [1], [1], [2], [0, 0, 0, 1, 1, 2], [0], [0]>} : vector<2x8x8xbf16>, vector<2x8x32xbf16>, vector<2x8x32xf32> -> vector<2x8x32xf32>
    %62 = vector.shape_cast %61 : vector<2x8x32xf32> to vector<16x32xf32>
    %63 = arith.truncf %62 : vector<16x32xf32> to vector<16x32xbf16>
    %64 = vector.extract_strided_slice %25 {offsets = [0, 0, 64], sizes = [2, 8, 32], strides = [1, 1, 1]} : vector<2x8x128xbf16> to vector<2x8x32xbf16>
    %65 = vector.extract_strided_slice %26 {offsets = [0, 0, 64], sizes = [2, 8, 32], strides = [1, 1, 1]} : vector<2x8x128xbf16> to vector<2x8x32xbf16>
    %66 = vector.extract_strided_slice %27 {offsets = [0, 0, 64], sizes = [2, 8, 32], strides = [1, 1, 1]} : vector<2x8x128xbf16> to vector<2x8x32xbf16>
    %cst_19 = arith.constant dense<0.000000e+00> : vector<2x8x8xf32>
    %67 = tpu.matmul %64, %65, %cst_19 {dimension_numbers = #tpu.dot_dimension_numbers<[2], [2], [1], [1], [0, 0, 0, 1, 1, 1], [0], [0]>} : vector<2x8x32xbf16>, vector<2x8x32xbf16>, vector<2x8x8xf32> -> vector<2x8x8xf32>
    %cst_20 = arith.constant dense<0xFF800000> : vector<2x8xf32>
    %68 = vector.multi_reduction <maximumf>, %67, %cst_20 [2] : vector<2x8x8xf32> to vector<2x8xf32>
    %69 = vector.shape_cast %68 : vector<2x8xf32> to vector<2x8x1xf32>
    %70 = vector.broadcast %69 : vector<2x8x1xf32> to vector<2x8x8xf32>
    %71 = arith.subf %67, %70 : vector<2x8x8xf32>
    %72 = math.exp %71 : vector<2x8x8xf32>
    %cst_21 = arith.constant dense<0.000000e+00> : vector<2x8xf32>
    %73 = vector.multi_reduction <add>, %72, %cst_21 [2] : vector<2x8x8xf32> to vector<2x8xf32>
    %74 = vector.shape_cast %73 : vector<2x8xf32> to vector<2x8x1xf32>
    %75 = tpu.reciprocal %74 {approx = true} : vector<2x8x1xf32> -> vector<2x8x1xf32>
    %76 = vector.broadcast %75 : vector<2x8x1xf32> to vector<2x8x8xf32>
    %77 = arith.mulf %72, %76 : vector<2x8x8xf32>
    %78 = arith.truncf %77 : vector<2x8x8xf32> to vector<2x8x8xbf16>
    %cst_22 = arith.constant dense<0.000000e+00> : vector<2x8x32xf32>
    %79 = tpu.matmul %78, %66, %cst_22 {dimension_numbers = #tpu.dot_dimension_numbers<[2], [1], [1], [2], [0, 0, 0, 1, 1, 2], [0], [0]>} : vector<2x8x8xbf16>, vector<2x8x32xbf16>, vector<2x8x32xf32> -> vector<2x8x32xf32>
    %80 = vector.shape_cast %79 : vector<2x8x32xf32> to vector<16x32xf32>
    %81 = arith.truncf %80 : vector<16x32xf32> to vector<16x32xbf16>
    %82 = vector.extract_strided_slice %25 {offsets = [0, 0, 96], sizes = [2, 8, 32], strides = [1, 1, 1]} : vector<2x8x128xbf16> to vector<2x8x32xbf16>
    %83 = vector.extract_strided_slice %26 {offsets = [0, 0, 96], sizes = [2, 8, 32], strides = [1, 1, 1]} : vector<2x8x128xbf16> to vector<2x8x32xbf16>
    %84 = vector.extract_strided_slice %27 {offsets = [0, 0, 96], sizes = [2, 8, 32], strides = [1, 1, 1]} : vector<2x8x128xbf16> to vector<2x8x32xbf16>
    %cst_23 = arith.constant dense<0.000000e+00> : vector<2x8x8xf32>
    %85 = tpu.matmul %82, %83, %cst_23 {dimension_numbers = #tpu.dot_dimension_numbers<[2], [2], [1], [1], [0, 0, 0, 1, 1, 1], [0], [0]>} : vector<2x8x32xbf16>, vector<2x8x32xbf16>, vector<2x8x8xf32> -> vector<2x8x8xf32>
    %cst_24 = arith.constant dense<0xFF800000> : vector<2x8xf32>
    %86 = vector.multi_reduction <maximumf>, %85, %cst_24 [2] : vector<2x8x8xf32> to vector<2x8xf32>
    %87 = vector.shape_cast %86 : vector<2x8xf32> to vector<2x8x1xf32>
    %88 = vector.broadcast %87 : vector<2x8x1xf32> to vector<2x8x8xf32>
    %89 = arith.subf %85, %88 : vector<2x8x8xf32>
    %90 = math.exp %89 : vector<2x8x8xf32>
    %cst_25 = arith.constant dense<0.000000e+00> : vector<2x8xf32>
    %91 = vector.multi_reduction <add>, %90, %cst_25 [2] : vector<2x8x8xf32> to vector<2x8xf32>
    %92 = vector.shape_cast %91 : vector<2x8xf32> to vector<2x8x1xf32>
    %93 = tpu.reciprocal %92 {approx = true} : vector<2x8x1xf32> -> vector<2x8x1xf32>
    %94 = vector.broadcast %93 : vector<2x8x1xf32> to vector<2x8x8xf32>
    %95 = arith.mulf %90, %94 : vector<2x8x8xf32>
    %96 = arith.truncf %95 : vector<2x8x8xf32> to vector<2x8x8xbf16>
    %cst_26 = arith.constant dense<0.000000e+00> : vector<2x8x32xf32>
    %97 = tpu.matmul %96, %84, %cst_26 {dimension_numbers = #tpu.dot_dimension_numbers<[2], [1], [1], [2], [0, 0, 0, 1, 1, 2], [0], [0]>} : vector<2x8x8xbf16>, vector<2x8x32xbf16>, vector<2x8x32xf32> -> vector<2x8x32xf32>
    %98 = vector.shape_cast %97 : vector<2x8x32xf32> to vector<16x32xf32>
    %99 = arith.truncf %98 : vector<16x32xf32> to vector<16x32xbf16>
    %100 = tpu.concatenate %45, %63, %81, %99 in 1 : vector<16x32xbf16>, vector<16x32xbf16>, vector<16x32xbf16>, vector<16x32xbf16> -> vector<16x128xbf16>
    %c0_27 = arith.constant 0 : index
    %c0_28 = arith.constant 0 : index
    %c0_29 = arith.constant 0 : index
    %101 = vector.load %arg5[%c0_27, %c0_28, %c0_29] : memref<2x128x128xbf16, #tpu.memory_space<vmem>>, vector<1x128x128xbf16>
    %102 = vector.shape_cast %101 : vector<1x128x128xbf16> to vector<128x128xbf16>
    %cst_30 = arith.constant dense<0.000000e+00> : vector<16x128xf32>
    %103 = tpu.matmul %100, %102, %cst_30 {dimension_numbers = #tpu.dot_dimension_numbers<[1], [0], [0], [1], [0, 0, 1, 1], [], []>} : vector<16x128xbf16>, vector<128x128xbf16>, vector<16x128xf32> -> vector<16x128xf32>
    %c0_31 = arith.constant 0 : index
    %c0_32 = arith.constant 0 : index
    %c0_33 = arith.constant 0 : index
    %104 = vector.load %arg6[%c0_31, %c0_32, %c0_33] : memref<2x1x128xf32, #tpu.memory_space<vmem>>, vector<1x1x128xf32>
    %105 = vector.shape_cast %104 : vector<1x1x128xf32> to vector<1x128xf32>
    %106 = vector.broadcast %105 : vector<1x128xf32> to vector<16x128xf32>
    %107 = arith.addf %103, %106 : vector<16x128xf32>
    %108 = arith.addf %8, %107 : vector<16x128xf32>
    %c0_34 = arith.constant 0 : index
    %c0_35 = arith.constant 0 : index
    %c0_36 = arith.constant 0 : index
    %109 = vector.load %arg7[%c0_34, %c0_35, %c0_36] : memref<2x1x128xf32, #tpu.memory_space<vmem>>, vector<1x1x128xf32>
    %110 = vector.shape_cast %109 : vector<1x1x128xf32> to vector<1x128xf32>
    %c0_37 = arith.constant 0 : index
    %c0_38 = arith.constant 0 : index
    %c0_39 = arith.constant 0 : index
    %111 = vector.load %arg8[%c0_37, %c0_38, %c0_39] : memref<2x1x128xf32, #tpu.memory_space<vmem>>, vector<1x1x128xf32>
    %112 = vector.shape_cast %111 : vector<1x1x128xf32> to vector<1x128xf32>
    %cst_40 = arith.constant dense<0.000000e+00> : vector<16xf32>
    %113 = vector.multi_reduction <add>, %108, %cst_40 [1] : vector<16x128xf32> to vector<16xf32>
    %114 = vector.shape_cast %113 : vector<16xf32> to vector<16x1xf32>
    %cst_41 = arith.constant 1.280000e+02 : f32
    %115 = vector.broadcast %cst_41 : f32 to vector<16x1xf32>
    %116 = arith.divf %114, %115 : vector<16x1xf32>
    %117 = vector.broadcast %116 : vector<16x1xf32> to vector<16x128xf32>
    %118 = arith.subf %108, %117 : vector<16x128xf32>
    %119 = arith.mulf %118, %118 : vector<16x128xf32>
    %cst_42 = arith.constant dense<0.000000e+00> : vector<16xf32>
    %120 = vector.multi_reduction <add>, %119, %cst_42 [1] : vector<16x128xf32> to vector<16xf32>
    %121 = vector.shape_cast %120 : vector<16xf32> to vector<16x1xf32>
    %cst_43 = arith.constant 1.280000e+02 : f32
    %122 = vector.broadcast %cst_43 : f32 to vector<16x1xf32>
    %123 = arith.divf %121, %122 : vector<16x1xf32>
    %124 = vector.broadcast %116 : vector<16x1xf32> to vector<16x128xf32>
    %125 = arith.subf %108, %124 : vector<16x128xf32>
    %cst_44 = arith.constant 9.99999974E-6 : f32
    %126 = vector.broadcast %cst_44 : f32 to vector<16x1xf32>
    %127 = arith.addf %123, %126 : vector<16x1xf32>
    %128 = math.rsqrt %127 : vector<16x1xf32>
    %129 = vector.broadcast %128 : vector<16x1xf32> to vector<16x128xf32>
    %130 = arith.mulf %125, %129 : vector<16x128xf32>
    %131 = vector.broadcast %110 : vector<1x128xf32> to vector<16x128xf32>
    %132 = arith.mulf %130, %131 : vector<16x128xf32>
    %133 = vector.broadcast %112 : vector<1x128xf32> to vector<16x128xf32>
    %134 = arith.addf %132, %133 : vector<16x128xf32>
    %135 = arith.truncf %134 : vector<16x128xf32> to vector<16x128xbf16>
    %c0_45 = arith.constant 0 : index
    %c0_46 = arith.constant 0 : index
    %c0_47 = arith.constant 0 : index
    %136 = vector.load %arg9[%c0_45, %c0_46, %c0_47] : memref<2x128x256xbf16, #tpu.memory_space<vmem>>, vector<1x128x256xbf16>
    %137 = vector.shape_cast %136 : vector<1x128x256xbf16> to vector<128x256xbf16>
    %cst_48 = arith.constant dense<0.000000e+00> : vector<16x256xf32>
    %138 = tpu.matmul %135, %137, %cst_48 {dimension_numbers = #tpu.dot_dimension_numbers<[1], [0], [0], [1], [0, 0, 1, 1], [], []>} : vector<16x128xbf16>, vector<128x256xbf16>, vector<16x256xf32> -> vector<16x256xf32>
    %c0_49 = arith.constant 0 : index
    %c0_50 = arith.constant 0 : index
    %c0_51 = arith.constant 0 : index
    %139 = vector.load %arg10[%c0_49, %c0_50, %c0_51] : memref<2x1x256xf32, #tpu.memory_space<vmem>>, vector<1x1x256xf32>
    %140 = vector.shape_cast %139 : vector<1x1x256xf32> to vector<1x256xf32>
    %141 = vector.broadcast %140 : vector<1x256xf32> to vector<16x256xf32>
    %142 = arith.addf %138, %141 : vector<16x256xf32>
    %cst_52 = arith.constant 0.000000e+00 : f32
    %143 = vector.broadcast %cst_52 : f32 to vector<16x256xf32>
    %144 = arith.maximumf %142, %143 : vector<16x256xf32>
    %145 = arith.truncf %144 : vector<16x256xf32> to vector<16x256xbf16>
    %c0_53 = arith.constant 0 : index
    %c0_54 = arith.constant 0 : index
    %c0_55 = arith.constant 0 : index
    %146 = vector.load %arg11[%c0_53, %c0_54, %c0_55] : memref<2x256x128xbf16, #tpu.memory_space<vmem>>, vector<1x256x128xbf16>
    %147 = vector.shape_cast %146 : vector<1x256x128xbf16> to vector<256x128xbf16>
    %cst_56 = arith.constant dense<0.000000e+00> : vector<16x128xf32>
    %148 = tpu.matmul %145, %147, %cst_56 {dimension_numbers = #tpu.dot_dimension_numbers<[1], [0], [0], [1], [0, 0, 1, 1], [], []>} : vector<16x256xbf16>, vector<256x128xbf16>, vector<16x128xf32> -> vector<16x128xf32>
    %c0_57 = arith.constant 0 : index
    %c0_58 = arith.constant 0 : index
    %c0_59 = arith.constant 0 : index
    %149 = vector.load %arg12[%c0_57, %c0_58, %c0_59] : memref<2x1x128xf32, #tpu.memory_space<vmem>>, vector<1x1x128xf32>
    %150 = vector.shape_cast %149 : vector<1x1x128xf32> to vector<1x128xf32>
    %151 = vector.broadcast %150 : vector<1x128xf32> to vector<16x128xf32>
    %152 = arith.addf %148, %151 : vector<16x128xf32>
    %153 = arith.addf %134, %152 : vector<16x128xf32>
    %c0_60 = arith.constant 0 : index
    %c0_61 = arith.constant 0 : index
    %c0_62 = arith.constant 0 : index
    %154 = vector.load %arg13[%c0_60, %c0_61, %c0_62] : memref<2x1x128xf32, #tpu.memory_space<vmem>>, vector<1x1x128xf32>
    %155 = vector.shape_cast %154 : vector<1x1x128xf32> to vector<1x128xf32>
    %c0_63 = arith.constant 0 : index
    %c0_64 = arith.constant 0 : index
    %c0_65 = arith.constant 0 : index
    %156 = vector.load %arg14[%c0_63, %c0_64, %c0_65] : memref<2x1x128xf32, #tpu.memory_space<vmem>>, vector<1x1x128xf32>
    %157 = vector.shape_cast %156 : vector<1x1x128xf32> to vector<1x128xf32>
    %cst_66 = arith.constant dense<0.000000e+00> : vector<16xf32>
    %158 = vector.multi_reduction <add>, %153, %cst_66 [1] : vector<16x128xf32> to vector<16xf32>
    %159 = vector.shape_cast %158 : vector<16xf32> to vector<16x1xf32>
    %cst_67 = arith.constant 1.280000e+02 : f32
    %160 = vector.broadcast %cst_67 : f32 to vector<16x1xf32>
    %161 = arith.divf %159, %160 : vector<16x1xf32>
    %162 = vector.broadcast %161 : vector<16x1xf32> to vector<16x128xf32>
    %163 = arith.subf %153, %162 : vector<16x128xf32>
    %164 = arith.mulf %163, %163 : vector<16x128xf32>
    %cst_68 = arith.constant dense<0.000000e+00> : vector<16xf32>
    %165 = vector.multi_reduction <add>, %164, %cst_68 [1] : vector<16x128xf32> to vector<16xf32>
    %166 = vector.shape_cast %165 : vector<16xf32> to vector<16x1xf32>
    %cst_69 = arith.constant 1.280000e+02 : f32
    %167 = vector.broadcast %cst_69 : f32 to vector<16x1xf32>
    %168 = arith.divf %166, %167 : vector<16x1xf32>
    %169 = vector.broadcast %161 : vector<16x1xf32> to vector<16x128xf32>
    %170 = arith.subf %153, %169 : vector<16x128xf32>
    %cst_70 = arith.constant 9.99999974E-6 : f32
    %171 = vector.broadcast %cst_70 : f32 to vector<16x1xf32>
    %172 = arith.addf %168, %171 : vector<16x1xf32>
    %173 = math.rsqrt %172 : vector<16x1xf32>
    %174 = vector.broadcast %173 : vector<16x1xf32> to vector<16x128xf32>
    %175 = arith.mulf %170, %174 : vector<16x128xf32>
    %176 = vector.broadcast %155 : vector<1x128xf32> to vector<16x128xf32>
    %177 = arith.mulf %175, %176 : vector<16x128xf32>
    %178 = vector.broadcast %157 : vector<1x128xf32> to vector<16x128xf32>
    %179 = arith.addf %177, %178 : vector<16x128xf32>
    %180 = arith.truncf %179 : vector<16x128xf32> to vector<16x128xbf16>
    %c1 = arith.constant 1 : index
    %c0_71 = arith.constant 0 : index
    %c0_72 = arith.constant 0 : index
    %181 = vector.load %arg3[%c1, %c0_71, %c0_72] : memref<2x128x384xbf16, #tpu.memory_space<vmem>>, vector<1x128x384xbf16>
    %182 = vector.shape_cast %181 : vector<1x128x384xbf16> to vector<128x384xbf16>
    %cst_73 = arith.constant dense<0.000000e+00> : vector<16x384xf32>
    %183 = tpu.matmul %180, %182, %cst_73 {dimension_numbers = #tpu.dot_dimension_numbers<[1], [0], [0], [1], [0, 0, 1, 1], [], []>} : vector<16x128xbf16>, vector<128x384xbf16>, vector<16x384xf32> -> vector<16x384xf32>
    %c1_74 = arith.constant 1 : index
    %c0_75 = arith.constant 0 : index
    %c0_76 = arith.constant 0 : index
    %184 = vector.load %arg4[%c1_74, %c0_75, %c0_76] : memref<2x1x384xf32, #tpu.memory_space<vmem>>, vector<1x1x384xf32>
    %185 = vector.shape_cast %184 : vector<1x1x384xf32> to vector<1x384xf32>
    %186 = vector.broadcast %185 : vector<1x384xf32> to vector<16x384xf32>
    %187 = arith.addf %183, %186 : vector<16x384xf32>
    %188 = vector.extract_strided_slice %187 {offsets = [0, 0], sizes = [16, 128], strides = [1, 1]} : vector<16x384xf32> to vector<16x128xf32>
    %cst_77 = arith.constant 0.176776692 : f32
    %189 = vector.broadcast %cst_77 : f32 to vector<16x128xf32>
    %190 = arith.mulf %188, %189 : vector<16x128xf32>
    %191 = arith.truncf %190 : vector<16x128xf32> to vector<16x128xbf16>
    %192 = vector.extract_strided_slice %187 {offsets = [0, 128], sizes = [16, 128], strides = [1, 1]} : vector<16x384xf32> to vector<16x128xf32>
    %193 = arith.truncf %192 : vector<16x128xf32> to vector<16x128xbf16>
    %194 = vector.extract_strided_slice %187 {offsets = [0, 256], sizes = [16, 128], strides = [1, 1]} : vector<16x384xf32> to vector<16x128xf32>
    %195 = arith.truncf %194 : vector<16x128xf32> to vector<16x128xbf16>
    %196 = vector.shape_cast %191 : vector<16x128xbf16> to vector<2x8x128xbf16>
    %197 = vector.shape_cast %193 : vector<16x128xbf16> to vector<2x8x128xbf16>
    %198 = vector.shape_cast %195 : vector<16x128xbf16> to vector<2x8x128xbf16>
    %199 = vector.extract_strided_slice %196 {offsets = [0, 0, 0], sizes = [2, 8, 32], strides = [1, 1, 1]} : vector<2x8x128xbf16> to vector<2x8x32xbf16>
    %200 = vector.extract_strided_slice %197 {offsets = [0, 0, 0], sizes = [2, 8, 32], strides = [1, 1, 1]} : vector<2x8x128xbf16> to vector<2x8x32xbf16>
    %201 = vector.extract_strided_slice %198 {offsets = [0, 0, 0], sizes = [2, 8, 32], strides = [1, 1, 1]} : vector<2x8x128xbf16> to vector<2x8x32xbf16>
    %cst_78 = arith.constant dense<0.000000e+00> : vector<2x8x8xf32>
    %202 = tpu.matmul %199, %200, %cst_78 {dimension_numbers = #tpu.dot_dimension_numbers<[2], [2], [1], [1], [0, 0, 0, 1, 1, 1], [0], [0]>} : vector<2x8x32xbf16>, vector<2x8x32xbf16>, vector<2x8x8xf32> -> vector<2x8x8xf32>
    %cst_79 = arith.constant dense<0xFF800000> : vector<2x8xf32>
    %203 = vector.multi_reduction <maximumf>, %202, %cst_79 [2] : vector<2x8x8xf32> to vector<2x8xf32>
    %204 = vector.shape_cast %203 : vector<2x8xf32> to vector<2x8x1xf32>
    %205 = vector.broadcast %204 : vector<2x8x1xf32> to vector<2x8x8xf32>
    %206 = arith.subf %202, %205 : vector<2x8x8xf32>
    %207 = math.exp %206 : vector<2x8x8xf32>
    %cst_80 = arith.constant dense<0.000000e+00> : vector<2x8xf32>
    %208 = vector.multi_reduction <add>, %207, %cst_80 [2] : vector<2x8x8xf32> to vector<2x8xf32>
    %209 = vector.shape_cast %208 : vector<2x8xf32> to vector<2x8x1xf32>
    %210 = tpu.reciprocal %209 {approx = true} : vector<2x8x1xf32> -> vector<2x8x1xf32>
    %211 = vector.broadcast %210 : vector<2x8x1xf32> to vector<2x8x8xf32>
    %212 = arith.mulf %207, %211 : vector<2x8x8xf32>
    %213 = arith.truncf %212 : vector<2x8x8xf32> to vector<2x8x8xbf16>
    %cst_81 = arith.constant dense<0.000000e+00> : vector<2x8x32xf32>
    %214 = tpu.matmul %213, %201, %cst_81 {dimension_numbers = #tpu.dot_dimension_numbers<[2], [1], [1], [2], [0, 0, 0, 1, 1, 2], [0], [0]>} : vector<2x8x8xbf16>, vector<2x8x32xbf16>, vector<2x8x32xf32> -> vector<2x8x32xf32>
    %215 = vector.shape_cast %214 : vector<2x8x32xf32> to vector<16x32xf32>
    %216 = arith.truncf %215 : vector<16x32xf32> to vector<16x32xbf16>
    %217 = vector.extract_strided_slice %196 {offsets = [0, 0, 32], sizes = [2, 8, 32], strides = [1, 1, 1]} : vector<2x8x128xbf16> to vector<2x8x32xbf16>
    %218 = vector.extract_strided_slice %197 {offsets = [0, 0, 32], sizes = [2, 8, 32], strides = [1, 1, 1]} : vector<2x8x128xbf16> to vector<2x8x32xbf16>
    %219 = vector.extract_strided_slice %198 {offsets = [0, 0, 32], sizes = [2, 8, 32], strides = [1, 1, 1]} : vector<2x8x128xbf16> to vector<2x8x32xbf16>
    %cst_82 = arith.constant dense<0.000000e+00> : vector<2x8x8xf32>
    %220 = tpu.matmul %217, %218, %cst_82 {dimension_numbers = #tpu.dot_dimension_numbers<[2], [2], [1], [1], [0, 0, 0, 1, 1, 1], [0], [0]>} : vector<2x8x32xbf16>, vector<2x8x32xbf16>, vector<2x8x8xf32> -> vector<2x8x8xf32>
    %cst_83 = arith.constant dense<0xFF800000> : vector<2x8xf32>
    %221 = vector.multi_reduction <maximumf>, %220, %cst_83 [2] : vector<2x8x8xf32> to vector<2x8xf32>
    %222 = vector.shape_cast %221 : vector<2x8xf32> to vector<2x8x1xf32>
    %223 = vector.broadcast %222 : vector<2x8x1xf32> to vector<2x8x8xf32>
    %224 = arith.subf %220, %223 : vector<2x8x8xf32>
    %225 = math.exp %224 : vector<2x8x8xf32>
    %cst_84 = arith.constant dense<0.000000e+00> : vector<2x8xf32>
    %226 = vector.multi_reduction <add>, %225, %cst_84 [2] : vector<2x8x8xf32> to vector<2x8xf32>
    %227 = vector.shape_cast %226 : vector<2x8xf32> to vector<2x8x1xf32>
    %228 = tpu.reciprocal %227 {approx = true} : vector<2x8x1xf32> -> vector<2x8x1xf32>
    %229 = vector.broadcast %228 : vector<2x8x1xf32> to vector<2x8x8xf32>
    %230 = arith.mulf %225, %229 : vector<2x8x8xf32>
    %231 = arith.truncf %230 : vector<2x8x8xf32> to vector<2x8x8xbf16>
    %cst_85 = arith.constant dense<0.000000e+00> : vector<2x8x32xf32>
    %232 = tpu.matmul %231, %219, %cst_85 {dimension_numbers = #tpu.dot_dimension_numbers<[2], [1], [1], [2], [0, 0, 0, 1, 1, 2], [0], [0]>} : vector<2x8x8xbf16>, vector<2x8x32xbf16>, vector<2x8x32xf32> -> vector<2x8x32xf32>
    %233 = vector.shape_cast %232 : vector<2x8x32xf32> to vector<16x32xf32>
    %234 = arith.truncf %233 : vector<16x32xf32> to vector<16x32xbf16>
    %235 = vector.extract_strided_slice %196 {offsets = [0, 0, 64], sizes = [2, 8, 32], strides = [1, 1, 1]} : vector<2x8x128xbf16> to vector<2x8x32xbf16>
    %236 = vector.extract_strided_slice %197 {offsets = [0, 0, 64], sizes = [2, 8, 32], strides = [1, 1, 1]} : vector<2x8x128xbf16> to vector<2x8x32xbf16>
    %237 = vector.extract_strided_slice %198 {offsets = [0, 0, 64], sizes = [2, 8, 32], strides = [1, 1, 1]} : vector<2x8x128xbf16> to vector<2x8x32xbf16>
    %cst_86 = arith.constant dense<0.000000e+00> : vector<2x8x8xf32>
    %238 = tpu.matmul %235, %236, %cst_86 {dimension_numbers = #tpu.dot_dimension_numbers<[2], [2], [1], [1], [0, 0, 0, 1, 1, 1], [0], [0]>} : vector<2x8x32xbf16>, vector<2x8x32xbf16>, vector<2x8x8xf32> -> vector<2x8x8xf32>
    %cst_87 = arith.constant dense<0xFF800000> : vector<2x8xf32>
    %239 = vector.multi_reduction <maximumf>, %238, %cst_87 [2] : vector<2x8x8xf32> to vector<2x8xf32>
    %240 = vector.shape_cast %239 : vector<2x8xf32> to vector<2x8x1xf32>
    %241 = vector.broadcast %240 : vector<2x8x1xf32> to vector<2x8x8xf32>
    %242 = arith.subf %238, %241 : vector<2x8x8xf32>
    %243 = math.exp %242 : vector<2x8x8xf32>
    %cst_88 = arith.constant dense<0.000000e+00> : vector<2x8xf32>
    %244 = vector.multi_reduction <add>, %243, %cst_88 [2] : vector<2x8x8xf32> to vector<2x8xf32>
    %245 = vector.shape_cast %244 : vector<2x8xf32> to vector<2x8x1xf32>
    %246 = tpu.reciprocal %245 {approx = true} : vector<2x8x1xf32> -> vector<2x8x1xf32>
    %247 = vector.broadcast %246 : vector<2x8x1xf32> to vector<2x8x8xf32>
    %248 = arith.mulf %243, %247 : vector<2x8x8xf32>
    %249 = arith.truncf %248 : vector<2x8x8xf32> to vector<2x8x8xbf16>
    %cst_89 = arith.constant dense<0.000000e+00> : vector<2x8x32xf32>
    %250 = tpu.matmul %249, %237, %cst_89 {dimension_numbers = #tpu.dot_dimension_numbers<[2], [1], [1], [2], [0, 0, 0, 1, 1, 2], [0], [0]>} : vector<2x8x8xbf16>, vector<2x8x32xbf16>, vector<2x8x32xf32> -> vector<2x8x32xf32>
    %251 = vector.shape_cast %250 : vector<2x8x32xf32> to vector<16x32xf32>
    %252 = arith.truncf %251 : vector<16x32xf32> to vector<16x32xbf16>
    %253 = vector.extract_strided_slice %196 {offsets = [0, 0, 96], sizes = [2, 8, 32], strides = [1, 1, 1]} : vector<2x8x128xbf16> to vector<2x8x32xbf16>
    %254 = vector.extract_strided_slice %197 {offsets = [0, 0, 96], sizes = [2, 8, 32], strides = [1, 1, 1]} : vector<2x8x128xbf16> to vector<2x8x32xbf16>
    %255 = vector.extract_strided_slice %198 {offsets = [0, 0, 96], sizes = [2, 8, 32], strides = [1, 1, 1]} : vector<2x8x128xbf16> to vector<2x8x32xbf16>
    %cst_90 = arith.constant dense<0.000000e+00> : vector<2x8x8xf32>
    %256 = tpu.matmul %253, %254, %cst_90 {dimension_numbers = #tpu.dot_dimension_numbers<[2], [2], [1], [1], [0, 0, 0, 1, 1, 1], [0], [0]>} : vector<2x8x32xbf16>, vector<2x8x32xbf16>, vector<2x8x8xf32> -> vector<2x8x8xf32>
    %cst_91 = arith.constant dense<0xFF800000> : vector<2x8xf32>
    %257 = vector.multi_reduction <maximumf>, %256, %cst_91 [2] : vector<2x8x8xf32> to vector<2x8xf32>
    %258 = vector.shape_cast %257 : vector<2x8xf32> to vector<2x8x1xf32>
    %259 = vector.broadcast %258 : vector<2x8x1xf32> to vector<2x8x8xf32>
    %260 = arith.subf %256, %259 : vector<2x8x8xf32>
    %261 = math.exp %260 : vector<2x8x8xf32>
    %cst_92 = arith.constant dense<0.000000e+00> : vector<2x8xf32>
    %262 = vector.multi_reduction <add>, %261, %cst_92 [2] : vector<2x8x8xf32> to vector<2x8xf32>
    %263 = vector.shape_cast %262 : vector<2x8xf32> to vector<2x8x1xf32>
    %264 = tpu.reciprocal %263 {approx = true} : vector<2x8x1xf32> -> vector<2x8x1xf32>
    %265 = vector.broadcast %264 : vector<2x8x1xf32> to vector<2x8x8xf32>
    %266 = arith.mulf %261, %265 : vector<2x8x8xf32>
    %267 = arith.truncf %266 : vector<2x8x8xf32> to vector<2x8x8xbf16>
    %cst_93 = arith.constant dense<0.000000e+00> : vector<2x8x32xf32>
    %268 = tpu.matmul %267, %255, %cst_93 {dimension_numbers = #tpu.dot_dimension_numbers<[2], [1], [1], [2], [0, 0, 0, 1, 1, 2], [0], [0]>} : vector<2x8x8xbf16>, vector<2x8x32xbf16>, vector<2x8x32xf32> -> vector<2x8x32xf32>
    %269 = vector.shape_cast %268 : vector<2x8x32xf32> to vector<16x32xf32>
    %270 = arith.truncf %269 : vector<16x32xf32> to vector<16x32xbf16>
    %271 = tpu.concatenate %216, %234, %252, %270 in 1 : vector<16x32xbf16>, vector<16x32xbf16>, vector<16x32xbf16>, vector<16x32xbf16> -> vector<16x128xbf16>
    %c1_94 = arith.constant 1 : index
    %c0_95 = arith.constant 0 : index
    %c0_96 = arith.constant 0 : index
    %272 = vector.load %arg5[%c1_94, %c0_95, %c0_96] : memref<2x128x128xbf16, #tpu.memory_space<vmem>>, vector<1x128x128xbf16>
    %273 = vector.shape_cast %272 : vector<1x128x128xbf16> to vector<128x128xbf16>
    %cst_97 = arith.constant dense<0.000000e+00> : vector<16x128xf32>
    %274 = tpu.matmul %271, %273, %cst_97 {dimension_numbers = #tpu.dot_dimension_numbers<[1], [0], [0], [1], [0, 0, 1, 1], [], []>} : vector<16x128xbf16>, vector<128x128xbf16>, vector<16x128xf32> -> vector<16x128xf32>
    %c1_98 = arith.constant 1 : index
    %c0_99 = arith.constant 0 : index
    %c0_100 = arith.constant 0 : index
    %275 = vector.load %arg6[%c1_98, %c0_99, %c0_100] : memref<2x1x128xf32, #tpu.memory_space<vmem>>, vector<1x1x128xf32>
    %276 = vector.shape_cast %275 : vector<1x1x128xf32> to vector<1x128xf32>
    %277 = vector.broadcast %276 : vector<1x128xf32> to vector<16x128xf32>
    %278 = arith.addf %274, %277 : vector<16x128xf32>
    %279 = arith.addf %179, %278 : vector<16x128xf32>
    %c1_101 = arith.constant 1 : index
    %c0_102 = arith.constant 0 : index
    %c0_103 = arith.constant 0 : index
    %280 = vector.load %arg7[%c1_101, %c0_102, %c0_103] : memref<2x1x128xf32, #tpu.memory_space<vmem>>, vector<1x1x128xf32>
    %281 = vector.shape_cast %280 : vector<1x1x128xf32> to vector<1x128xf32>
    %c1_104 = arith.constant 1 : index
    %c0_105 = arith.constant 0 : index
    %c0_106 = arith.constant 0 : index
    %282 = vector.load %arg8[%c1_104, %c0_105, %c0_106] : memref<2x1x128xf32, #tpu.memory_space<vmem>>, vector<1x1x128xf32>
    %283 = vector.shape_cast %282 : vector<1x1x128xf32> to vector<1x128xf32>
    %cst_107 = arith.constant dense<0.000000e+00> : vector<16xf32>
    %284 = vector.multi_reduction <add>, %279, %cst_107 [1] : vector<16x128xf32> to vector<16xf32>
    %285 = vector.shape_cast %284 : vector<16xf32> to vector<16x1xf32>
    %cst_108 = arith.constant 1.280000e+02 : f32
    %286 = vector.broadcast %cst_108 : f32 to vector<16x1xf32>
    %287 = arith.divf %285, %286 : vector<16x1xf32>
    %288 = vector.broadcast %287 : vector<16x1xf32> to vector<16x128xf32>
    %289 = arith.subf %279, %288 : vector<16x128xf32>
    %290 = arith.mulf %289, %289 : vector<16x128xf32>
    %cst_109 = arith.constant dense<0.000000e+00> : vector<16xf32>
    %291 = vector.multi_reduction <add>, %290, %cst_109 [1] : vector<16x128xf32> to vector<16xf32>
    %292 = vector.shape_cast %291 : vector<16xf32> to vector<16x1xf32>
    %cst_110 = arith.constant 1.280000e+02 : f32
    %293 = vector.broadcast %cst_110 : f32 to vector<16x1xf32>
    %294 = arith.divf %292, %293 : vector<16x1xf32>
    %295 = vector.broadcast %287 : vector<16x1xf32> to vector<16x128xf32>
    %296 = arith.subf %279, %295 : vector<16x128xf32>
    %cst_111 = arith.constant 9.99999974E-6 : f32
    %297 = vector.broadcast %cst_111 : f32 to vector<16x1xf32>
    %298 = arith.addf %294, %297 : vector<16x1xf32>
    %299 = math.rsqrt %298 : vector<16x1xf32>
    %300 = vector.broadcast %299 : vector<16x1xf32> to vector<16x128xf32>
    %301 = arith.mulf %296, %300 : vector<16x128xf32>
    %302 = vector.broadcast %281 : vector<1x128xf32> to vector<16x128xf32>
    %303 = arith.mulf %301, %302 : vector<16x128xf32>
    %304 = vector.broadcast %283 : vector<1x128xf32> to vector<16x128xf32>
    %305 = arith.addf %303, %304 : vector<16x128xf32>
    %306 = arith.truncf %305 : vector<16x128xf32> to vector<16x128xbf16>
    %c1_112 = arith.constant 1 : index
    %c0_113 = arith.constant 0 : index
    %c0_114 = arith.constant 0 : index
    %307 = vector.load %arg9[%c1_112, %c0_113, %c0_114] : memref<2x128x256xbf16, #tpu.memory_space<vmem>>, vector<1x128x256xbf16>
    %308 = vector.shape_cast %307 : vector<1x128x256xbf16> to vector<128x256xbf16>
    %cst_115 = arith.constant dense<0.000000e+00> : vector<16x256xf32>
    %309 = tpu.matmul %306, %308, %cst_115 {dimension_numbers = #tpu.dot_dimension_numbers<[1], [0], [0], [1], [0, 0, 1, 1], [], []>} : vector<16x128xbf16>, vector<128x256xbf16>, vector<16x256xf32> -> vector<16x256xf32>
    %c1_116 = arith.constant 1 : index
    %c0_117 = arith.constant 0 : index
    %c0_118 = arith.constant 0 : index
    %310 = vector.load %arg10[%c1_116, %c0_117, %c0_118] : memref<2x1x256xf32, #tpu.memory_space<vmem>>, vector<1x1x256xf32>
    %311 = vector.shape_cast %310 : vector<1x1x256xf32> to vector<1x256xf32>
    %312 = vector.broadcast %311 : vector<1x256xf32> to vector<16x256xf32>
    %313 = arith.addf %309, %312 : vector<16x256xf32>
    %cst_119 = arith.constant 0.000000e+00 : f32
    %314 = vector.broadcast %cst_119 : f32 to vector<16x256xf32>
    %315 = arith.maximumf %313, %314 : vector<16x256xf32>
    %316 = arith.truncf %315 : vector<16x256xf32> to vector<16x256xbf16>
    %c1_120 = arith.constant 1 : index
    %c0_121 = arith.constant 0 : index
    %c0_122 = arith.constant 0 : index
    %317 = vector.load %arg11[%c1_120, %c0_121, %c0_122] : memref<2x256x128xbf16, #tpu.memory_space<vmem>>, vector<1x256x128xbf16>
    %318 = vector.shape_cast %317 : vector<1x256x128xbf16> to vector<256x128xbf16>
    %cst_123 = arith.constant dense<0.000000e+00> : vector<16x128xf32>
    %319 = tpu.matmul %316, %318, %cst_123 {dimension_numbers = #tpu.dot_dimension_numbers<[1], [0], [0], [1], [0, 0, 1, 1], [], []>} : vector<16x256xbf16>, vector<256x128xbf16>, vector<16x128xf32> -> vector<16x128xf32>
    %c1_124 = arith.constant 1 : index
    %c0_125 = arith.constant 0 : index
    %c0_126 = arith.constant 0 : index
    %320 = vector.load %arg12[%c1_124, %c0_125, %c0_126] : memref<2x1x128xf32, #tpu.memory_space<vmem>>, vector<1x1x128xf32>
    %321 = vector.shape_cast %320 : vector<1x1x128xf32> to vector<1x128xf32>
    %322 = vector.broadcast %321 : vector<1x128xf32> to vector<16x128xf32>
    %323 = arith.addf %319, %322 : vector<16x128xf32>
    %324 = arith.addf %305, %323 : vector<16x128xf32>
    %c1_127 = arith.constant 1 : index
    %c0_128 = arith.constant 0 : index
    %c0_129 = arith.constant 0 : index
    %325 = vector.load %arg13[%c1_127, %c0_128, %c0_129] : memref<2x1x128xf32, #tpu.memory_space<vmem>>, vector<1x1x128xf32>
    %326 = vector.shape_cast %325 : vector<1x1x128xf32> to vector<1x128xf32>
    %c1_130 = arith.constant 1 : index
    %c0_131 = arith.constant 0 : index
    %c0_132 = arith.constant 0 : index
    %327 = vector.load %arg14[%c1_130, %c0_131, %c0_132] : memref<2x1x128xf32, #tpu.memory_space<vmem>>, vector<1x1x128xf32>
    %328 = vector.shape_cast %327 : vector<1x1x128xf32> to vector<1x128xf32>
    %cst_133 = arith.constant dense<0.000000e+00> : vector<16xf32>
    %329 = vector.multi_reduction <add>, %324, %cst_133 [1] : vector<16x128xf32> to vector<16xf32>
    %330 = vector.shape_cast %329 : vector<16xf32> to vector<16x1xf32>
    %cst_134 = arith.constant 1.280000e+02 : f32
    %331 = vector.broadcast %cst_134 : f32 to vector<16x1xf32>
    %332 = arith.divf %330, %331 : vector<16x1xf32>
    %333 = vector.broadcast %332 : vector<16x1xf32> to vector<16x128xf32>
    %334 = arith.subf %324, %333 : vector<16x128xf32>
    %335 = arith.mulf %334, %334 : vector<16x128xf32>
    %cst_135 = arith.constant dense<0.000000e+00> : vector<16xf32>
    %336 = vector.multi_reduction <add>, %335, %cst_135 [1] : vector<16x128xf32> to vector<16xf32>
    %337 = vector.shape_cast %336 : vector<16xf32> to vector<16x1xf32>
    %cst_136 = arith.constant 1.280000e+02 : f32
    %338 = vector.broadcast %cst_136 : f32 to vector<16x1xf32>
    %339 = arith.divf %337, %338 : vector<16x1xf32>
    %340 = vector.broadcast %332 : vector<16x1xf32> to vector<16x128xf32>
    %341 = arith.subf %324, %340 : vector<16x128xf32>
    %cst_137 = arith.constant 9.99999974E-6 : f32
    %342 = vector.broadcast %cst_137 : f32 to vector<16x1xf32>
    %343 = arith.addf %339, %342 : vector<16x1xf32>
    %344 = math.rsqrt %343 : vector<16x1xf32>
    %345 = vector.broadcast %344 : vector<16x1xf32> to vector<16x128xf32>
    %346 = arith.mulf %341, %345 : vector<16x128xf32>
    %347 = vector.broadcast %326 : vector<1x128xf32> to vector<16x128xf32>
    %348 = arith.mulf %346, %347 : vector<16x128xf32>
    %349 = vector.broadcast %328 : vector<1x128xf32> to vector<16x128xf32>
    %350 = arith.addf %348, %349 : vector<16x128xf32>
    %351 = arith.truncf %350 : vector<16x128xf32> to vector<16x128xbf16>
    %c0_138 = arith.constant 0 : index
    %c0_139 = arith.constant 0 : index
    %352 = vector.load %arg15[%c0_138, %c0_139] : memref<128x256xbf16, #tpu.memory_space<vmem>>, vector<128x256xbf16>
    %cst_140 = arith.constant dense<0.000000e+00> : vector<16x256xf32>
    %353 = tpu.matmul %351, %352, %cst_140 {dimension_numbers = #tpu.dot_dimension_numbers<[1], [0], [0], [1], [0, 0, 1, 1], [], []>} : vector<16x128xbf16>, vector<128x256xbf16>, vector<16x256xf32> -> vector<16x256xf32>
    %c0_141 = arith.constant 0 : index
    %c0_142 = arith.constant 0 : index
    %354 = vector.load %arg16[%c0_141, %c0_142] : memref<1x256xf32, #tpu.memory_space<vmem>>, vector<1x256xf32>
    %355 = vector.broadcast %354 : vector<1x256xf32> to vector<16x256xf32>
    %356 = arith.addf %353, %355 : vector<16x256xf32>
    %c0_143 = arith.constant 0 : index
    %c0_144 = arith.constant 0 : index
    %357 = vector.load %arg17[%c0_143, %c0_144] : memref<16x256xf32, #tpu.memory_space<vmem>>, vector<16x256xf32>
    tpu.vector_store %arg17[%c0_143, %c0_144], %356 {strides = array<i32>} : memref<16x256xf32, #tpu.memory_space<vmem>>, vector<16x256xf32>,
    return
  }
  func.func @transform_0(%arg0: i32) -> (i32, i32) {
    %c0_i32 = arith.constant 0 : i32
    %c0_i32_0 = arith.constant 0 : i32
    return %arg0, %c0_i32 : i32, i32
  }
  func.func @transform_1(%arg0: i32) -> (i32, i32) {
    %c0_i32 = arith.constant 0 : i32
    %c0_i32_0 = arith.constant 0 : i32
    %c0_i32_1 = arith.constant 0 : i32
    return %c0_i32, %c0_i32_0 : i32, i32
  }
  func.func @transform_2(%arg0: i32) -> (i32, i32, i32) {
    %c0_i32 = arith.constant 0 : i32
    %c0_i32_0 = arith.constant 0 : i32
    %c0_i32_1 = arith.constant 0 : i32
    %c0_i32_2 = arith.constant 0 : i32
    return %c0_i32, %c0_i32_0, %c0_i32_1 : i32, i32, i32
  }
  func.func @transform_3(%arg0: i32) -> (i32, i32, i32) {
    %c0_i32 = arith.constant 0 : i32
    %c0_i32_0 = arith.constant 0 : i32
    %c0_i32_1 = arith.constant 0 : i32
    %c0_i32_2 = arith.constant 0 : i32
    return %c0_i32, %c0_i32_0, %c0_i32_1 : i32, i32, i32
  }
  func.func @transform_4(%arg0: i32) -> (i32, i32, i32) {
    %c0_i32 = arith.constant 0 : i32
    %c0_i32_0 = arith.constant 0 : i32
    %c0_i32_1 = arith.constant 0 : i32
    %c0_i32_2 = arith.constant 0 : i32
    return %c0_i32, %c0_i32_0, %c0_i32_1 : i32, i32, i32
  }
  func.func @transform_5(%arg0: i32) -> (i32, i32, i32) {
    %c0_i32 = arith.constant 0 : i32
    %c0_i32_0 = arith.constant 0 : i32
    %c0_i32_1 = arith.constant 0 : i32
    %c0_i32_2 = arith.constant 0 : i32
    return %c0_i32, %c0_i32_0, %c0_i32_1 : i32, i32, i32
  }
  func.func @transform_6(%arg0: i32) -> (i32, i32, i32) {
    %c0_i32 = arith.constant 0 : i32
    %c0_i32_0 = arith.constant 0 : i32
    %c0_i32_1 = arith.constant 0 : i32
    %c0_i32_2 = arith.constant 0 : i32
    return %c0_i32, %c0_i32_0, %c0_i32_1 : i32, i32, i32
  }
  func.func @transform_7(%arg0: i32) -> (i32, i32, i32) {
    %c0_i32 = arith.constant 0 : i32
    %c0_i32_0 = arith.constant 0 : i32
    %c0_i32_1 = arith.constant 0 : i32
    %c0_i32_2 = arith.constant 0 : i32
    return %c0_i32, %c0_i32_0, %c0_i32_1 : i32, i32, i32
  }
  func.func @transform_8(%arg0: i32) -> (i32, i32, i32) {
    %c0_i32 = arith.constant 0 : i32
    %c0_i32_0 = arith.constant 0 : i32
    %c0_i32_1 = arith.constant 0 : i32
    %c0_i32_2 = arith.constant 0 : i32
    return %c0_i32, %c0_i32_0, %c0_i32_1 : i32, i32, i32
  }
  func.func @transform_9(%arg0: i32) -> (i32, i32, i32) {
    %c0_i32 = arith.constant 0 : i32
    %c0_i32_0 = arith.constant 0 : i32
    %c0_i32_1 = arith.constant 0 : i32
    %c0_i32_2 = arith.constant 0 : i32
    return %c0_i32, %c0_i32_0, %c0_i32_1 : i32, i32, i32
  }
  func.func @transform_10(%arg0: i32) -> (i32, i32, i32) {
    %c0_i32 = arith.constant 0 : i32
    %c0_i32_0 = arith.constant 0 : i32
    %c0_i32_1 = arith.constant 0 : i32
    %c0_i32_2 = arith.constant 0 : i32
    return %c0_i32, %c0_i32_0, %c0_i32_1 : i32, i32, i32
  }
  func.func @transform_11(%arg0: i32) -> (i32, i32, i32) {
    %c0_i32 = arith.constant 0 : i32
    %c0_i32_0 = arith.constant 0 : i32
    %c0_i32_1 = arith.constant 0 : i32
    %c0_i32_2 = arith.constant 0 : i32
    return %c0_i32, %c0_i32_0, %c0_i32_1 : i32, i32, i32
  }
  func.func @transform_12(%arg0: i32) -> (i32, i32, i32) {
    %c0_i32 = arith.constant 0 : i32
    %c0_i32_0 = arith.constant 0 : i32
    %c0_i32_1 = arith.constant 0 : i32
    %c0_i32_2 = arith.constant 0 : i32
    return %c0_i32, %c0_i32_0, %c0_i32_1 : i32, i32, i32
  }
  func.func @transform_13(%arg0: i32) -> (i32, i32, i32) {
    %c0_i32 = arith.constant 0 : i32
    %c0_i32_0 = arith.constant 0 : i32
    %c0_i32_1 = arith.constant 0 : i32
    %c0_i32_2 = arith.constant 0 : i32
    return %c0_i32, %c0_i32_0, %c0_i32_1 : i32, i32, i32
  }
  func.func @transform_14(%arg0: i32) -> (i32, i32) {
    %c0_i32 = arith.constant 0 : i32
    %c0_i32_0 = arith.constant 0 : i32
    %c0_i32_1 = arith.constant 0 : i32
    return %c0_i32, %c0_i32_0 : i32, i32
  }
  func.func @transform_15(%arg0: i32) -> (i32, i32) {
    %c0_i32 = arith.constant 0 : i32
    %c0_i32_0 = arith.constant 0 : i32
    %c0_i32_1 = arith.constant 0 : i32
    return %c0_i32, %c0_i32_0 : i32, i32
  }
  func.func @transform_16(%arg0: i32) -> (i32, i32) {
    %c0_i32 = arith.constant 0 : i32
    %c0_i32_0 = arith.constant 0 : i32
    return %arg0, %c0_i32 : i32, i32
  }
}

</mosaic_0001>

<llo_original>
// kernel: simple_transformer_forward.1
$region0: #{simple_transformer_forward.1}
  #allocation0 [shape = 'u32[]', space=smem, size = 0x4, offset = 0x4, fixed_abs, tag = 'smem constant byte address 0x4 - core index']
  #allocation1 [shape = 'u32[72,128]{1,0:T(1,128)}', space=vmem, size = 0x9000, scoped, tag = 'internal scratch']
  %s0 = inlined_call_operand.vmem [shape: s32[16,1], index: 0, kind: input, shape index: {}]
  %s1 = inlined_call_operand.hbm [shape: bf16[256,128], index: 1, kind: input, shape index: {}]
  %s2 = inlined_call_operand.hbm [shape: bf16[2,128,384], index: 2, kind: input, shape index: {}]
  %s3 = inlined_call_operand.vmem [shape: f32[2,1,384], index: 3, kind: input, shape index: {}]
  %s4 = inlined_call_operand.hbm [shape: bf16[2,128,128], index: 4, kind: input, shape index: {}]
  %s5 = inlined_call_operand.vmem [shape: f32[2,1,128], index: 5, kind: input, shape index: {}]
  %s6 = inlined_call_operand.vmem [shape: f32[2,1,128], index: 6, kind: input, shape index: {}]
  %s7 = inlined_call_operand.vmem [shape: f32[2,1,128], index: 7, kind: input, shape index: {}]
  %s8 = inlined_call_operand.hbm [shape: bf16[2,128,256], index: 8, kind: input, shape index: {}]
  %s9 = inlined_call_operand.vmem [shape: f32[2,1,256], index: 9, kind: input, shape index: {}]
  %s10 = inlined_call_operand.hbm [shape: bf16[2,256,128], index: 10, kind: input, shape index: {}]
  %s11 = inlined_call_operand.vmem [shape: f32[2,1,128], index: 11, kind: input, shape index: {}]
  %s12 = inlined_call_operand.vmem [shape: f32[2,1,128], index: 12, kind: input, shape index: {}]
  %s13 = inlined_call_operand.vmem [shape: f32[2,1,128], index: 13, kind: input, shape index: {}]
  %s14 = inlined_call_operand.hbm [shape: bf16[128,256], index: 14, kind: input, shape index: {}]
  %s15 = inlined_call_operand.vmem [shape: f32[1,256], index: 15, kind: input, shape index: {}]
  %s16 = inlined_call_operand.vmem [shape: f32[16,256], index: 16, kind: output, shape index: {}]
  %s17 = sld [smem:[#allocation0]]
  $region98: #{simple_transformer_forward.1} parent=0
    _
  %s19 = ssub.s32 1, %s17
  %s20 = scalar_select 0, %s19, %s17
  $region1: #{simple_transformer_forward.1} parent=0
    #allocation2 [shape = 'u8[65536]{0}', space=vmem, size = 0x10000, scoped, tag = 'input window, operand 1, single buffered']
    #allocation3 [shape = 's32[1]{0}', space=sflag, size = 0x4, scoped, tag = 'scoped memory for simple_transformer_forward.1']
    #allocation4 [shape = 'u8[196608]{0}', space=vmem, size = 0x30000, scoped, tag = 'input window, operand 2, single buffered']
    #allocation5 [shape = 's32[1]{0}', space=sflag, size = 0x4, scoped, tag = 'scoped memory for simple_transformer_forward.1']
    #allocation6 [shape = 'u8[65536]{0}', space=vmem, size = 0x10000, scoped, tag = 'input window, operand 4, single buffered']
    #allocation7 [shape = 'u8[131072]{0}', space=vmem, size = 0x20000, scoped, tag = 'input window, operand 8, single buffered']
    #allocation8 [shape = 's32[1]{0}', space=sflag, size = 0x4, scoped, tag = 'scoped memory for simple_transformer_forward.1']
    #allocation9 [shape = 'u8[131072]{0}', space=vmem, size = 0x20000, scoped, tag = 'input window, operand 10, single buffered']
    #allocation10 [shape = 'u8[65536]{0}', space=vmem, size = 0x10000, scoped, tag = 'input window, operand 14, single buffered']
    #allocation11 [shape = 's32[1]{0}', space=sflag, size = 0x4, scoped, tag = 'scoped memory for simple_transformer_forward.1']
    %21 = vsyncpa [#allocation3], 0
    %22 = vsyncpa [#allocation5], 0
    %23 = vsyncpa [#allocation8], 0
    %24 = vsyncpa [#allocation11], 0
    // Predicated region
    $region2: #{simple_transformer_forward.1} parent=1 // pred_check
      _
    $region3: #{simple_transformer_forward.1} parent=1 // pred_check_branch
      %26 = sbr.rel (0) target = $region5
    $region4: #{simple_transformer_forward.1} parent=1 // pred_region
      _
    $region5: #{simple_transformer_forward.1} parent=1 // pred_fallthru
      _
    // Predicated region
    $region6: #{simple_transformer_forward.1} parent=1 // pred_check
      _
    $region7: #{simple_transformer_forward.1} parent=1 // pred_check_branch
      %28 = sbr.rel (0) target = $region9
    $region8: #{simple_transformer_forward.1} parent=1 // pred_region
      %30 = vsyncadd [#allocation3], 0
      %s31 = sshll.u32 %s1, 4
      %s32 = int_to_ptr.hbm [resolvable:$true] %s31
      %s33 = sshll.u32 [#allocation2], 4
      %s34 = int_to_ptr.vmem [resolvable:$true] %s33
      %39 = dma.hbm_to_vmem [thread:$0]  %s32, 2048, %s34, [#allocation3], 64, 64, 4
    $region9: #{simple_transformer_forward.1} parent=1 // pred_fallthru
      _
    // Predicated region
    $region10: #{simple_transformer_forward.1} parent=1 // pred_check
      _
    $region11: #{simple_transformer_forward.1} parent=1 // pred_check_branch
      %41 = sbr.rel (0) target = $region13
    $region12: #{simple_transformer_forward.1} parent=1 // pred_region
      %43 = vsyncadd [#allocation5], 0
      %s44 = sshll.u32 %s2, 4
      %s45 = int_to_ptr.hbm [resolvable:$true] %s44
      %s46 = sshll.u32 [#allocation4], 4
      %s47 = int_to_ptr.vmem [resolvable:$true] %s46
      %52 = dma.hbm_to_vmem [thread:$0]  %s45, 6144, %s47, [#allocation5], 192, 192, 12
    $region13: #{simple_transformer_forward.1} parent=1 // pred_fallthru
      _
    // Predicated region
    $region14: #{simple_transformer_forward.1} parent=1 // pred_check
      _
    $region15: #{simple_transformer_forward.1} parent=1 // pred_check_branch
      %54 = sbr.rel (0) target = $region17
    $region16: #{simple_transformer_forward.1} parent=1 // pred_region
      _
    $region17: #{simple_transformer_forward.1} parent=1 // pred_fallthru
      _
    // Predicated region
    $region18: #{simple_transformer_forward.1} parent=1 // pred_check
      _
    $region19: #{simple_transformer_forward.1} parent=1 // pred_check_branch
      %56 = sbr.rel (0) target = $region21
    $region20: #{simple_transformer_forward.1} parent=1 // pred_region
      %58 = vsyncadd [#allocation5], 0
      %s59 = sshll.u32 %s4, 4
      %s60 = int_to_ptr.hbm [resolvable:$true] %s59
      %s61 = sshll.u32 [#allocation6], 4
      %s62 = int_to_ptr.vmem [resolvable:$true] %s61
      %67 = dma.hbm_to_vmem [thread:$0]  %s60, 2048, %s62, [#allocation5], 64, 64, 4
    $region21: #{simple_transformer_forward.1} parent=1 // pred_fallthru
      _
    // Predicated region
    $region22: #{simple_transformer_forward.1} parent=1 // pred_check
      _
    $region23: #{simple_transformer_forward.1} parent=1 // pred_check_branch
      %69 = sbr.rel (0) target = $region25
    $region24: #{simple_transformer_forward.1} parent=1 // pred_region
      _
    $region25: #{simple_transformer_forward.1} parent=1 // pred_fallthru
      _
    // Predicated region
    $region26: #{simple_transformer_forward.1} parent=1 // pred_check
      _
    $region27: #{simple_transformer_forward.1} parent=1 // pred_check_branch
      %71 = sbr.rel (0) target = $region29
    $region28: #{simple_transformer_forward.1} parent=1 // pred_region
      _
    $region29: #{simple_transformer_forward.1} parent=1 // pred_fallthru
      _
    // Predicated region
    $region30: #{simple_transformer_forward.1} parent=1 // pred_check
      _
    $region31: #{simple_transformer_forward.1} parent=1 // pred_check_branch
      %73 = sbr.rel (0) target = $region33
    $region32: #{simple_transformer_forward.1} parent=1 // pred_region
      _
    $region33: #{simple_transformer_forward.1} parent=1 // pred_fallthru
      _
    // Predicated region
    $region34: #{simple_transformer_forward.1} parent=1 // pred_check
      _
    $region35: #{simple_transformer_forward.1} parent=1 // pred_check_branch
      %75 = sbr.rel (0) target = $region37
    $region36: #{simple_transformer_forward.1} parent=1 // pred_region
      %77 = vsyncadd [#allocation8], 0
      %s78 = sshll.u32 %s8, 4
      %s79 = int_to_ptr.hbm [resolvable:$true] %s78
      %s80 = sshll.u32 [#allocation7], 4
      %s81 = int_to_ptr.vmem [resolvable:$true] %s80
      %86 = dma.hbm_to_vmem [thread:$0]  %s79, 4096, %s81, [#allocation8], 128, 128, 8
    $region37: #{simple_transformer_forward.1} parent=1 // pred_fallthru
      _
    // Predicated region
    $region38: #{simple_transformer_forward.1} parent=1 // pred_check
      _
    $region39: #{simple_transformer_forward.1} parent=1 // pred_check_branch
      %88 = sbr.rel (0) target = $region41
    $region40: #{simple_transformer_forward.1} parent=1 // pred_region
      _
    $region41: #{simple_transformer_forward.1} parent=1 // pred_fallthru
      _
    // Predicated region
    $region42: #{simple_transformer_forward.1} parent=1 // pred_check
      _
    $region43: #{simple_transformer_forward.1} parent=1 // pred_check_branch
      %90 = sbr.rel (0) target = $region45
    $region44: #{simple_transformer_forward.1} parent=1 // pred_region
      %92 = vsyncadd [#allocation8], 0
      %s93 = sshll.u32 %s10, 4
      %s94 = int_to_ptr.hbm [resolvable:$true] %s93
      %s95 = sshll.u32 [#allocation9], 4
      %s96 = int_to_ptr.vmem [resolvable:$true] %s95
      %101 = dma.hbm_to_vmem [thread:$0]  %s94, 4096, %s96, [#allocation8], 64, 64, 4
    $region45: #{simple_transformer_forward.1} parent=1 // pred_fallthru
      _
    // Predicated region
    $region46: #{simple_transformer_forward.1} parent=1 // pred_check
      _
    $region47: #{simple_transformer_forward.1} parent=1 // pred_check_branch
      %103 = sbr.rel (0) target = $region49
    $region48: #{simple_transformer_forward.1} parent=1 // pred_region
      _
    $region49: #{simple_transformer_forward.1} parent=1 // pred_fallthru
      _
    // Predicated region
    $region50: #{simple_transformer_forward.1} parent=1 // pred_check
      _
    $region51: #{simple_transformer_forward.1} parent=1 // pred_check_branch
      %105 = sbr.rel (0) target = $region53
    $region52: #{simple_transformer_forward.1} parent=1 // pred_region
      _
    $region53: #{simple_transformer_forward.1} parent=1 // pred_fallthru
      _
    // Predicated region
    $region54: #{simple_transformer_forward.1} parent=1 // pred_check
      _
    $region55: #{simple_transformer_forward.1} parent=1 // pred_check_branch
      %107 = sbr.rel (0) target = $region57
    $region56: #{simple_transformer_forward.1} parent=1 // pred_region
      _
    $region57: #{simple_transformer_forward.1} parent=1 // pred_fallthru
      _
    // Predicated region
    $region58: #{simple_transformer_forward.1} parent=1 // pred_check
      _
    $region59: #{simple_transformer_forward.1} parent=1 // pred_check_branch
      %109 = sbr.rel (0) target = $region61
    $region60: #{simple_transformer_forward.1} parent=1 // pred_region
      %111 = vsyncadd [#allocation11], 0
      %s112 = sshll.u32 %s14, 4
      %s113 = int_to_ptr.hbm [resolvable:$true] %s112
      %s114 = sshll.u32 [#allocation10], 4
      %s115 = int_to_ptr.vmem [resolvable:$true] %s114
      %120 = dma.hbm_to_vmem [thread:$0]  %s113, 2048, %s115, [#allocation11], 128, 128, 8
    $region61: #{simple_transformer_forward.1} parent=1 // pred_fallthru
      _
    // Predicated region
    $region62: #{simple_transformer_forward.1} parent=1 // pred_check
      _
    $region63: #{simple_transformer_forward.1} parent=1 // pred_check_branch
      %122 = sbr.rel (0) target = $region65
    $region64: #{simple_transformer_forward.1} parent=1 // pred_region
      _
    $region65: #{simple_transformer_forward.1} parent=1 // pred_fallthru
      _
    // Predicated region
    $region66: #{simple_transformer_forward.1} parent=1 // pred_check
      _
    $region67: #{simple_transformer_forward.1} parent=1 // pred_check_branch
      %124 = sbr.rel (0) target = $region69
    $region68: #{simple_transformer_forward.1} parent=1 // pred_region
      %126 = dma.done [#allocation3], 2048
    $region69: #{simple_transformer_forward.1} parent=1 // pred_fallthru
      _
    // Predicated region
    $region70: #{simple_transformer_forward.1} parent=1 // pred_check
      _
    $region71: #{simple_transformer_forward.1} parent=1 // pred_check_branch
      %128 = sbr.rel (0) target = $region73
    $region72: #{simple_transformer_forward.1} parent=1 // pred_region
      %130 = dma.done [#allocation5], 6144
    $region73: #{simple_transformer_forward.1} parent=1 // pred_fallthru
      _
    // Predicated region
    $region74: #{simple_transformer_forward.1} parent=1 // pred_check
      _
    $region75: #{simple_transformer_forward.1} parent=1 // pred_check_branch
      %132 = sbr.rel (0) target = $region77
    $region76: #{simple_transformer_forward.1} parent=1 // pred_region
      %134 = dma.done [#allocation5], 2048
    $region77: #{simple_transformer_forward.1} parent=1 // pred_fallthru
      _
    // Predicated region
    $region78: #{simple_transformer_forward.1} parent=1 // pred_check
      _
    $region79: #{simple_transformer_forward.1} parent=1 // pred_check_branch
      %136 = sbr.rel (0) target = $region81
    $region80: #{simple_transformer_forward.1} parent=1 // pred_region
      %138 = dma.done [#allocation8], 4096
    $region81: #{simple_transformer_forward.1} parent=1 // pred_fallthru
      _
    // Predicated region
    $region82: #{simple_transformer_forward.1} parent=1 // pred_check
      _
    $region83: #{simple_transformer_forward.1} parent=1 // pred_check_branch
      %140 = sbr.rel (0) target = $region85
    $region84: #{simple_transformer_forward.1} parent=1 // pred_region
      %142 = dma.done [#allocation8], 4096
    $region85: #{simple_transformer_forward.1} parent=1 // pred_fallthru
      _
    // Predicated region
    $region86: #{simple_transformer_forward.1} parent=1 // pred_check
      _
    $region87: #{simple_transformer_forward.1} parent=1 // pred_check_branch
      %144 = sbr.rel (0) target = $region89
    $region88: #{simple_transformer_forward.1} parent=1 // pred_region
      %146 = dma.done [#allocation11], 2048
    $region89: #{simple_transformer_forward.1} parent=1 // pred_fallthru
      _
    %v148 = vld [vmem:[%s0] sm:$0xff]
    %v149 = vld [vmem:[%s0 + $0x8] sm:$0xff]
    %v150 = vlaneseq
    %v151 = vand.u32 %v150, 127
    %v152 = vadd.s32 %v151, 128
    %153 = vset.pattern.permute.xlu0 0
    %154 = vperm.xlu0 %153, %v148
    %v155 = vpop.permute.xlu0 %154
    %156 = vset.pattern.permute.xlu0 0
    %157 = vperm.xlu0 %156, %v149
    %v158 = vpop.permute.xlu0 %157
    %vm159 = vcmp.eq.s32.totalorder %v151, %v155
    %vm160 = vcmp.eq.s32.totalorder %v152, %v155
    %vm161 = vcmp.eq.s32.totalorder %v151, %v158
    %vm162 = vcmp.eq.s32.totalorder %v152, %v158
    %v163 = vsel %vm159, 1, 0
    %v164 = vsel %vm160, 1, 0
    %v165 = vsel %vm161, 1, 0
    %v166 = vsel %vm162, 1, 0
    %v167 = vcvt.s32.f32 %v163
    %v168 = vcvt.s32.f32 %v164
    %v169 = vcvt.s32.f32 %v165
    %v170 = vcvt.s32.f32 %v166
    %v171 = vpack.c.bf16 %v169, %v167
    %v172 = vpack.c.bf16 %v170, %v168
    %v173 = vld [vmem:[#allocation2] sm:$0xf]
    %v174 = vld [vmem:[#allocation2 + $0x4] sm:$0xf]
    %v175 = vld [vmem:[#allocation2 + $0x8] sm:$0xf]
    %v176 = vld [vmem:[#allocation2 + $0xc] sm:$0xf]
    %v177 = vld [vmem:[#allocation2 + $0x10] sm:$0xf]
    %v178 = vld [vmem:[#allocation2 + $0x14] sm:$0xf]
    %v179 = vld [vmem:[#allocation2 + $0x18] sm:$0xf]
    %v180 = vld [vmem:[#allocation2 + $0x1c] sm:$0xf]
    %v181 = vld [vmem:[#allocation2 + $0x20] sm:$0xf]
    %v182 = vld [vmem:[#allocation2 + $0x24] sm:$0xf]
    %v183 = vld [vmem:[#allocation2 + $0x28] sm:$0xf]
    %v184 = vld [vmem:[#allocation2 + $0x2c] sm:$0xf]
    %v185 = vld [vmem:[#allocation2 + $0x30] sm:$0xf]
    %v186 = vld [vmem:[#allocation2 + $0x34] sm:$0xf]
    %v187 = vld [vmem:[#allocation2 + $0x38] sm:$0xf]
    %v188 = vld [vmem:[#allocation2 + $0x3c] sm:$0xf]
    %v189 = vld [vmem:[#allocation2 + $0x40] sm:$0xf]
    %v190 = vld [vmem:[#allocation2 + $0x44] sm:$0xf]
    %v191 = vld [vmem:[#allocation2 + $0x48] sm:$0xf]
    %v192 = vld [vmem:[#allocation2 + $0x4c] sm:$0xf]
    %v193 = vld [vmem:[#allocation2 + $0x50] sm:$0xf]
    %v194 = vld [vmem:[#allocation2 + $0x54] sm:$0xf]
    %v195 = vld [vmem:[#allocation2 + $0x58] sm:$0xf]
    %v196 = vld [vmem:[#allocation2 + $0x5c] sm:$0xf]
    %v197 = vld [vmem:[#allocation2 + $0x60] sm:$0xf]
    %v198 = vld [vmem:[#allocation2 + $0x64] sm:$0xf]
    %v199 = vld [vmem:[#allocation2 + $0x68] sm:$0xf]
    %v200 = vld [vmem:[#allocation2 + $0x6c] sm:$0xf]
    %v201 = vld [vmem:[#allocation2 + $0x70] sm:$0xf]
    %v202 = vld [vmem:[#allocation2 + $0x74] sm:$0xf]
    %v203 = vld [vmem:[#allocation2 + $0x78] sm:$0xf]
    %v204 = vld [vmem:[#allocation2 + $0x7c] sm:$0xf]
    %v237 = vunpack.c.l.b16 %v173
    %v238 = vunpack.c.l.b16 %v174
    %v239 = vunpack.c.l.b16 %v175
    %v240 = vunpack.c.l.b16 %v176
    %v241 = vunpack.c.l.b16 %v177
    %v242 = vunpack.c.l.b16 %v178
    %v243 = vunpack.c.l.b16 %v179
    %v244 = vunpack.c.l.b16 %v180
    %v245 = vunpack.c.l.b16 %v181
    %v246 = vunpack.c.l.b16 %v182
    %v247 = vunpack.c.l.b16 %v183
    %v248 = vunpack.c.l.b16 %v184
    %v249 = vunpack.c.l.b16 %v185
    %v250 = vunpack.c.l.b16 %v186
    %v251 = vunpack.c.l.b16 %v187
    %v252 = vunpack.c.l.b16 %v188
    %v253 = vunpack.c.l.b16 %v189
    %v254 = vunpack.c.l.b16 %v190
    %v255 = vunpack.c.l.b16 %v191
    %v256 = vunpack.c.l.b16 %v192
    %v257 = vunpack.c.l.b16 %v193
    %v258 = vunpack.c.l.b16 %v194
    %v259 = vunpack.c.l.b16 %v195
    %v260 = vunpack.c.l.b16 %v196
    %v261 = vunpack.c.l.b16 %v197
    %v262 = vunpack.c.l.b16 %v198
    %v263 = vunpack.c.l.b16 %v199
    %v264 = vunpack.c.l.b16 %v200
    %v265 = vunpack.c.l.b16 %v201
    %v266 = vunpack.c.l.b16 %v202
    %v267 = vunpack.c.l.b16 %v203
    %v268 = vunpack.c.l.b16 %v204
    %v269 = vpack.c.b16 %v238, %v237
    %v270 = vpack.c.b16 %v240, %v239
    %v271 = vpack.c.b16 %v242, %v241
    %v272 = vpack.c.b16 %v244, %v243
    %v273 = vpack.c.b16 %v246, %v245
    %v274 = vpack.c.b16 %v248, %v247
    %v275 = vpack.c.b16 %v250, %v249
    %v276 = vpack.c.b16 %v252, %v251
    %v277 = vpack.c.b16 %v254, %v253
    %v278 = vpack.c.b16 %v256, %v255
    %v279 = vpack.c.b16 %v258, %v257
    %v280 = vpack.c.b16 %v260, %v259
    %v281 = vpack.c.b16 %v262, %v261
    %v282 = vpack.c.b16 %v264, %v263
    %v283 = vpack.c.b16 %v266, %v265
    %v284 = vpack.c.b16 %v268, %v267
    %301 = vmatpush.bf16.msra.mxu0 %v276
    %302 = vmatpush.bf16.msra.mxu0 %v275
    %303 = vmatpush.bf16.msra.mxu0 %v274
    %304 = vmatpush.bf16.msra.mxu0 %v273
    %305 = vmatpush.bf16.msra.mxu0 %v272
    %306 = vmatpush.bf16.msra.mxu0 %v271
    %307 = vmatpush.bf16.msra.mxu0 %v270
    %308 = vmatpush.bf16.msra.mxu0 %v269
    %309 = vmatmul.bf16.gmra.mxu0 %v171
    %v310 = vpop.f32.mrf.mxu0
    %v311 = vadd.f32 0.0, %v310
    %v312 = vpop.f32.mrf.mxu0
    %v313 = vadd.f32 0.0, %v312
    %314 = vdwg.mxu0
    %315 = vmatpush.bf16.msra.mxu0 %v284
    %316 = vmatpush.bf16.msra.mxu0 %v283
    %317 = vmatpush.bf16.msra.mxu0 %v282
    %318 = vmatpush.bf16.msra.mxu0 %v281
    %319 = vmatpush.bf16.msra.mxu0 %v280
    %320 = vmatpush.bf16.msra.mxu0 %v279
    %321 = vmatpush.bf16.msra.mxu0 %v278
    %322 = vmatpush.bf16.msra.mxu0 %v277
    %323 = vmatmul.bf16.gmra.mxu0 %v172
    %v324 = vpop.f32.mrf.mxu0
    %v325 = vadd.f32 %v311, %v324
    %v326 = vpop.f32.mrf.mxu0
    %v327 = vadd.f32 %v313, %v326
    %328 = vdwg.mxu0
    %v329 = vpack.c.bf16 %v327, %v325
    %v330 = vld [vmem:[#allocation4] sm:$0xff]
    %v331 = vld [vmem:[#allocation4 + $0x8] sm:$0xf]
    %v332 = vld [vmem:[#allocation4 + $0xc] sm:$0xff]
    %v333 = vld [vmem:[#allocation4 + $0x14] sm:$0xf]
    %v334 = vld [vmem:[#allocation4 + $0x18] sm:$0xff]
    %v335 = vld [vmem:[#allocation4 + $0x20] sm:$0xf]
    %v336 = vld [vmem:[#allocation4 + $0x24] sm:$0xff]
    %v337 = vld [vmem:[#allocation4 + $0x2c] sm:$0xf]
    %v338 = vld [vmem:[#allocation4 + $0x30] sm:$0xff]
    %v339 = vld [vmem:[#allocation4 + $0x38] sm:$0xf]
    %v340 = vld [vmem:[#allocation4 + $0x3c] sm:$0xff]
    %v341 = vld [vmem:[#allocation4 + $0x44] sm:$0xf]
    %v342 = vld [vmem:[#allocation4 + $0x48] sm:$0xff]
    %v343 = vld [vmem:[#allocation4 + $0x50] sm:$0xf]
    %v344 = vld [vmem:[#allocation4 + $0x54] sm:$0xff]
    %v345 = vld [vmem:[#allocation4 + $0x5c] sm:$0xf]
    %v346 = vld [vmem:[#allocation4 + $0x60] sm:$0xff]
    %v347 = vld [vmem:[#allocation4 + $0x68] sm:$0xf]
    %v348 = vld [vmem:[#allocation4 + $0x6c] sm:$0xff]
    %v349 = vld [vmem:[#allocation4 + $0x74] sm:$0xf]
    %v350 = vld [vmem:[#allocation4 + $0x78] sm:$0xff]
    %v351 = vld [vmem:[#allocation4 + $0x80] sm:$0xf]
    %v352 = vld [vmem:[#allocation4 + $0x84] sm:$0xff]
    %v353 = vld [vmem:[#allocation4 + $0x8c] sm:$0xf]
    %v354 = vld [vmem:[#allocation4 + $0x90] sm:$0xff]
    %v355 = vld [vmem:[#allocation4 + $0x98] sm:$0xf]
    %v356 = vld [vmem:[#allocation4 + $0x9c] sm:$0xff]
    %v357 = vld [vmem:[#allocation4 + $0xa4] sm:$0xf]
    %v358 = vld [vmem:[#allocation4 + $0xa8] sm:$0xff]
    %v359 = vld [vmem:[#allocation4 + $0xb0] sm:$0xf]
    %v360 = vld [vmem:[#allocation4 + $0xb4] sm:$0xff]
    %v361 = vld [vmem:[#allocation4 + $0xbc] sm:$0xf]
    %v362 = vld [vmem:[%s3] sm:$0x7]
    %v364 = vperm.slane %v362, 0
    %v365 = vperm.slane %v362, 1
    %v366 = vperm.slane %v362, 2
    %v402 = vunpack.c.l.b16 %v330
    %v403 = vunpack.c.h.b16 %v330
    %v404 = vunpack.c.l.b16 %v331
    %v405 = vunpack.c.l.b16 %v332
    %v406 = vunpack.c.h.b16 %v332
    %v407 = vunpack.c.l.b16 %v333
    %v408 = vunpack.c.l.b16 %v334
    %v409 = vunpack.c.h.b16 %v334
    %v410 = vunpack.c.l.b16 %v335
    %v411 = vunpack.c.l.b16 %v336
    %v412 = vunpack.c.h.b16 %v336
    %v413 = vunpack.c.l.b16 %v337
    %v414 = vunpack.c.l.b16 %v338
    %v415 = vunpack.c.h.b16 %v338
    %v416 = vunpack.c.l.b16 %v339
    %v417 = vunpack.c.l.b16 %v340
    %v418 = vunpack.c.h.b16 %v340
    %v419 = vunpack.c.l.b16 %v341
    %v420 = vunpack.c.l.b16 %v342
    %v421 = vunpack.c.h.b16 %v342
    %v422 = vunpack.c.l.b16 %v343
    %v423 = vunpack.c.l.b16 %v344
    %v424 = vunpack.c.h.b16 %v344
    %v425 = vunpack.c.l.b16 %v345
    %v426 = vunpack.c.l.b16 %v346
    %v427 = vunpack.c.h.b16 %v346
    %v428 = vunpack.c.l.b16 %v347
    %v429 = vunpack.c.l.b16 %v348
    %v430 = vunpack.c.h.b16 %v348
    %v431 = vunpack.c.l.b16 %v349
    %v432 = vunpack.c.l.b16 %v350
    %v433 = vunpack.c.h.b16 %v350
    %v434 = vunpack.c.l.b16 %v351
    %v435 = vunpack.c.l.b16 %v352
    %v436 = vunpack.c.h.b16 %v352
    %v437 = vunpack.c.l.b16 %v353
    %v438 = vunpack.c.l.b16 %v354
    %v439 = vunpack.c.h.b16 %v354
    %v440 = vunpack.c.l.b16 %v355
    %v441 = vunpack.c.l.b16 %v356
    %v442 = vunpack.c.h.b16 %v356
    %v443 = vunpack.c.l.b16 %v357
    %v444 = vunpack.c.l.b16 %v358
    %v445 = vunpack.c.h.b16 %v358
    %v446 = vunpack.c.l.b16 %v359
    %v447 = vunpack.c.l.b16 %v360
    %v448 = vunpack.c.h.b16 %v360
    %v449 = vunpack.c.l.b16 %v361
    %v450 = vpack.c.b16 %v405, %v402
    %v451 = vpack.c.b16 %v406, %v403
    %v452 = vpack.c.b16 %v407, %v404
    %v453 = vpack.c.b16 %v411, %v408
    %v454 = vpack.c.b16 %v412, %v409
    %v455 = vpack.c.b16 %v413, %v410
    %v456 = vpack.c.b16 %v417, %v414
    %v457 = vpack.c.b16 %v418, %v415
    %v458 = vpack.c.b16 %v419, %v416
    %v459 = vpack.c.b16 %v423, %v420
    %v460 = vpack.c.b16 %v424, %v421
    %v461 = vpack.c.b16 %v425, %v422
    %v462 = vpack.c.b16 %v429, %v426
    %v463 = vpack.c.b16 %v430, %v427
    %v464 = vpack.c.b16 %v431, %v428
    %v465 = vpack.c.b16 %v435, %v432
    %v466 = vpack.c.b16 %v436, %v433
    %v467 = vpack.c.b16 %v437, %v434
    %v468 = vpack.c.b16 %v441, %v438
    %v469 = vpack.c.b16 %v442, %v439
    %v470 = vpack.c.b16 %v443, %v440
    %v471 = vpack.c.b16 %v447, %v444
    %v472 = vpack.c.b16 %v448, %v445
    %v473 = vpack.c.b16 %v449, %v446
    %498 = vmatpush.bf16.msra.mxu0 %v471
    %499 = vmatpush.bf16.msra.mxu0 %v468
    %500 = vmatpush.bf16.msra.mxu0 %v465
    %501 = vmatpush.bf16.msra.mxu0 %v462
    %502 = vmatpush.bf16.msra.mxu0 %v459
    %503 = vmatpush.bf16.msra.mxu0 %v456
    %504 = vmatpush.bf16.msra.mxu0 %v453
    %505 = vmatpush.bf16.msra.mxu0 %v450
    %506 = vmatmul.bf16.gmra.mxu0 %v329
    %v507 = vpop.f32.mrf.mxu0
    %v508 = vadd.f32 %v364, %v507
    %v509 = vpop.f32.mrf.mxu0
    %v510 = vadd.f32 %v364, %v509
    %511 = vdwg.mxu0
    %512 = vmatpush.bf16.msra.mxu0 %v472
    %513 = vmatpush.bf16.msra.mxu0 %v469
    %514 = vmatpush.bf16.msra.mxu0 %v466
    %515 = vmatpush.bf16.msra.mxu0 %v463
    %516 = vmatpush.bf16.msra.mxu0 %v460
    %517 = vmatpush.bf16.msra.mxu0 %v457
    %518 = vmatpush.bf16.msra.mxu0 %v454
    %519 = vmatpush.bf16.msra.mxu0 %v451
    %520 = vmatmul.bf16.gmra.mxu0 %v329
    %v521 = vpop.f32.mrf.mxu0
    %v522 = vadd.f32 %v365, %v521
    %v523 = vpop.f32.mrf.mxu0
    %v524 = vadd.f32 %v365, %v523
    %525 = vdwg.mxu0
    %526 = vmatpush.bf16.msra.mxu0 %v473
    %527 = vmatpush.bf16.msra.mxu0 %v470
    %528 = vmatpush.bf16.msra.mxu0 %v467
    %529 = vmatpush.bf16.msra.mxu0 %v464
    %530 = vmatpush.bf16.msra.mxu0 %v461
    %531 = vmatpush.bf16.msra.mxu0 %v458
    %532 = vmatpush.bf16.msra.mxu0 %v455
    %533 = vmatpush.bf16.msra.mxu0 %v452
    %534 = vmatmul.bf16.gmra.mxu0 %v329
    %v535 = vpop.f32.mrf.mxu0
    %v536 = vadd.f32 %v366, %v535
    %v537 = vpop.f32.mrf.mxu0
    %v538 = vadd.f32 %v366, %v537
    %539 = vdwg.mxu0
    %v540 = vmul.f32 %v508, 0.17677669
    %v541 = vmul.f32 %v510, 0.17677669
    %v542 = vpack.c.bf16 %v540, %v540
    %v543 = vpack.c.bf16 %v541, %v541
    %v544 = vpack.c.bf16 %v522, %v522
    %v545 = vpack.c.bf16 %v524, %v524
    %v546 = vpack.c.bf16 %v536, %v536
    %v547 = vpack.c.bf16 %v538, %v538
    %vm548 = vcmask 261120
    %v550 = vsel %vm548, %v542, 0
    %v553 = vsel %vm548, %v544, 0
    %555 = vmatpush.bf16.xpose.msra.mxu0 0
    %556 = vmatpush.bf16.xpose.msra.mxu0 0
    %557 = vmatpush.bf16.xpose.msra.mxu0 0
    %558 = vmatpush.bf16.xpose.msra.mxu0 0
    %559 = vmatpush.bf16.xpose.msra.mxu0 0
    %560 = vmatpush.bf16.xpose.msra.mxu0 0
    %561 = vmatpush.bf16.xpose.msra.mxu0 0
    %562 = vmatpush.bf16.xpose.msra.mxu0 %v553
    %563 = vmatmul.bf16.gmra.mxu0 %v550
    %v564 = vpop.f32.mrf.mxu0
    %v565 = vadd.f32 0.0, %v564
    %v566 = vpop.f32.mrf.mxu0
    %567 = vdwg.mxu0
    %v569 = vsel %vm548, %v543, 0
    %v572 = vsel %vm548, %v545, 0
    %574 = vmatpush.bf16.xpose.msra.mxu0 0
    %575 = vmatpush.bf16.xpose.msra.mxu0 0
    %576 = vmatpush.bf16.xpose.msra.mxu0 0
    %577 = vmatpush.bf16.xpose.msra.mxu0 0
    %578 = vmatpush.bf16.xpose.msra.mxu0 0
    %579 = vmatpush.bf16.xpose.msra.mxu0 0
    %580 = vmatpush.bf16.xpose.msra.mxu0 0
    %581 = vmatpush.bf16.xpose.msra.mxu0 %v572
    %582 = vmatmul.bf16.gmra.mxu0 %v569
    %v583 = vpop.f32.mrf.mxu0
    %v584 = vadd.f32 0.0, %v583
    %v585 = vpop.f32.mrf.mxu0
    %586 = vdwg.mxu0
    %vm587 = vcmask 64512
    %v588 = vsel %vm587, %v565, -inf
    %589 = vmax.xlane.f32.xlu0 %v588
    %v590 = vpop.xlane.xlu0 %589
    %v591 = vsel %vm587, %v584, -inf
    %592 = vmax.xlane.f32.xlu0 %v591
    %v593 = vpop.xlane.xlu0 %592
    %v594 = vsub.f32 %v565, %v590
    %v595 = vsub.f32 %v584, %v593
    %v596 = vmul.f32 %v594, 1.442695
    %v597 = vpow.pop %v596
    %v598 = vmul.f32 %v595, 1.442695
    %v599 = vpow.pop %v598
    %v600 = vsel %vm587, %v597, 0.0
    %601 = vadd.xlane.f32.xlu0 %v600
    %v602 = vpop.xlane.xlu0 %601
    %v603 = vsel %vm587, %v599, 0.0
    %604 = vadd.xlane.f32.xlu0 %v603
    %v605 = vpop.xlane.xlu0 %604
    %v606 = vrcp.pop %v602
    %v607 = vrcp.pop %v605
    %v608 = vmul.f32 %v597, %v606
    %v609 = vmul.f32 %v599, %v607
    %v610 = vpack.c.bf16 %v608, %v608
    %v611 = vpack.c.bf16 %v609, %v609
    %v613 = vsel %vm587, %v610, 0
    %vm615 = vcmask 1043456
    %v617 = vsel %vm615, %v546, 0
    %619 = vmatpush.bf16.msra.mxu0 0
    %620 = vmatpush.bf16.msra.mxu0 0
    %621 = vmatpush.bf16.msra.mxu0 0
    %622 = vmatpush.bf16.msra.mxu0 0
    %623 = vmatpush.bf16.msra.mxu0 0
    %624 = vmatpush.bf16.msra.mxu0 0
    %625 = vmatpush.bf16.msra.mxu0 0
    %626 = vmatpush.bf16.msra.mxu0 %v617
    %627 = vmatmul.bf16.gmra.mxu0 %v613
    %v628 = vpop.f32.mrf.mxu0
    %v629 = vadd.f32 0.0, %v628
    %v630 = vpop.f32.mrf.mxu0
    %631 = vdwg.mxu0
    %v633 = vsel %vm587, %v611, 0
    %v636 = vsel %vm615, %v547, 0
    %638 = vmatpush.bf16.msra.mxu0 0
    %639 = vmatpush.bf16.msra.mxu0 0
    %640 = vmatpush.bf16.msra.mxu0 0
    %641 = vmatpush.bf16.msra.mxu0 0
    %642 = vmatpush.bf16.msra.mxu0 0
    %643 = vmatpush.bf16.msra.mxu0 0
    %644 = vmatpush.bf16.msra.mxu0 0
    %645 = vmatpush.bf16.msra.mxu0 %v636
    %646 = vmatmul.bf16.gmra.mxu0 %v633
    %v647 = vpop.f32.mrf.mxu0
    %v648 = vadd.f32 0.0, %v647
    %v649 = vpop.f32.mrf.mxu0
    %650 = vdwg.mxu0
    %v651 = vpack.c.bf16 %v629, %v629
    %v652 = vpack.c.bf16 %v648, %v648
    %v654 = vunpack.c.l.b16 %v542
    %v655 = vpack.c.b16 %v654, %v654
    %656 = vrot.lane.b32.xlu0 %v655, 96
    %v657 = vpop.permute.xlu0 %656
    %v659 = vunpack.c.l.b16 %v544
    %v660 = vpack.c.b16 %v659, %v659
    %661 = vrot.lane.b32.xlu0 %v660, 96
    %v662 = vpop.permute.xlu0 %661
    %v664 = vsel %vm548, %v657, 0
    %v667 = vsel %vm548, %v662, 0
    %669 = vmatpush.bf16.xpose.msra.mxu0 0
    %670 = vmatpush.bf16.xpose.msra.mxu0 0
    %671 = vmatpush.bf16.xpose.msra.mxu0 0
    %672 = vmatpush.bf16.xpose.msra.mxu0 0
    %673 = vmatpush.bf16.xpose.msra.mxu0 0
    %674 = vmatpush.bf16.xpose.msra.mxu0 0
    %675 = vmatpush.bf16.xpose.msra.mxu0 0
    %676 = vmatpush.bf16.xpose.msra.mxu0 %v667
    %677 = vmatmul.bf16.gmra.mxu0 %v664
    %v678 = vpop.f32.mrf.mxu0
    %v679 = vadd.f32 0.0, %v678
    %v680 = vpop.f32.mrf.mxu0
    %681 = vdwg.mxu0
    %v683 = vunpack.c.l.b16 %v543
    %v684 = vpack.c.b16 %v683, %v683
    %685 = vrot.lane.b32.xlu0 %v684, 96
    %v686 = vpop.permute.xlu0 %685
    %v688 = vunpack.c.l.b16 %v545
    %v689 = vpack.c.b16 %v688, %v688
    %690 = vrot.lane.b32.xlu0 %v689, 96
    %v691 = vpop.permute.xlu0 %690
    %v693 = vsel %vm548, %v686, 0
    %v696 = vsel %vm548, %v691, 0
    %698 = vmatpush.bf16.xpose.msra.mxu0 0
    %699 = vmatpush.bf16.xpose.msra.mxu0 0
    %700 = vmatpush.bf16.xpose.msra.mxu0 0
    %701 = vmatpush.bf16.xpose.msra.mxu0 0
    %702 = vmatpush.bf16.xpose.msra.mxu0 0
    %703 = vmatpush.bf16.xpose.msra.mxu0 0
    %704 = vmatpush.bf16.xpose.msra.mxu0 0
    %705 = vmatpush.bf16.xpose.msra.mxu0 %v696
    %706 = vmatmul.bf16.gmra.mxu0 %v693
    %v707 = vpop.f32.mrf.mxu0
    %v708 = vadd.f32 0.0, %v707
    %v709 = vpop.f32.mrf.mxu0
    %710 = vdwg.mxu0
    %v711 = vsel %vm587, %v679, -inf
    %712 = vmax.xlane.f32.xlu0 %v711
    %v713 = vpop.xlane.xlu0 %712
    %v714 = vsel %vm587, %v708, -inf
    %715 = vmax.xlane.f32.xlu0 %v714
    %v716 = vpop.xlane.xlu0 %715
    %v717 = vsub.f32 %v679, %v713
    %v718 = vsub.f32 %v708, %v716
    %v719 = vmul.f32 %v717, 1.442695
    %v720 = vpow.pop %v719
    %v721 = vmul.f32 %v718, 1.442695
    %v722 = vpow.pop %v721
    %v723 = vsel %vm587, %v720, 0.0
    %724 = vadd.xlane.f32.xlu0 %v723
    %v725 = vpop.xlane.xlu0 %724
    %v726 = vsel %vm587, %v722, 0.0
    %727 = vadd.xlane.f32.xlu0 %v726
    %v728 = vpop.xlane.xlu0 %727
    %v729 = vrcp.pop %v725
    %v730 = vrcp.pop %v728
    %v731 = vmul.f32 %v720, %v729
    %v732 = vmul.f32 %v722, %v730
    %v733 = vpack.c.bf16 %v731, %v731
    %v734 = vpack.c.bf16 %v732, %v732
    %v736 = vunpack.c.l.b16 %v546
    %v737 = vpack.c.b16 %v736, %v736
    %738 = vrot.lane.b32.xlu0 %v737, 96
    %v739 = vpop.permute.xlu0 %738
    %v741 = vsel %vm587, %v733, 0
    %v744 = vsel %vm615, %v739, 0
    %746 = vmatpush.bf16.msra.mxu0 0
    %747 = vmatpush.bf16.msra.mxu0 0
    %748 = vmatpush.bf16.msra.mxu0 0
    %749 = vmatpush.bf16.msra.mxu0 0
    %750 = vmatpush.bf16.msra.mxu0 0
    %751 = vmatpush.bf16.msra.mxu0 0
    %752 = vmatpush.bf16.msra.mxu0 0
    %753 = vmatpush.bf16.msra.mxu0 %v744
    %754 = vmatmul.bf16.gmra.mxu0 %v741
    %v755 = vpop.f32.mrf.mxu0
    %v756 = vadd.f32 0.0, %v755
    %v757 = vpop.f32.mrf.mxu0
    %758 = vdwg.mxu0
    %v760 = vunpack.c.l.b16 %v547
    %v761 = vpack.c.b16 %v760, %v760
    %762 = vrot.lane.b32.xlu0 %v761, 96
    %v763 = vpop.permute.xlu0 %762
    %v765 = vsel %vm587, %v734, 0
    %v768 = vsel %vm615, %v763, 0
    %770 = vmatpush.bf16.msra.mxu0 0
    %771 = vmatpush.bf16.msra.mxu0 0
    %772 = vmatpush.bf16.msra.mxu0 0
    %773 = vmatpush.bf16.msra.mxu0 0
    %774 = vmatpush.bf16.msra.mxu0 0
    %775 = vmatpush.bf16.msra.mxu0 0
    %776 = vmatpush.bf16.msra.mxu0 0
    %777 = vmatpush.bf16.msra.mxu0 %v768
    %778 = vmatmul.bf16.gmra.mxu0 %v765
    %v779 = vpop.f32.mrf.mxu0
    %v780 = vadd.f32 0.0, %v779
    %v781 = vpop.f32.mrf.mxu0
    %782 = vdwg.mxu0
    %v783 = vpack.c.bf16 %v756, %v756
    %v784 = vpack.c.bf16 %v780, %v780
    %785 = vrot.lane.b32.xlu0 %v655, 64
    %v786 = vpop.permute.xlu0 %785
    %787 = vrot.lane.b32.xlu0 %v660, 64
    %v788 = vpop.permute.xlu0 %787
    %v790 = vsel %vm548, %v786, 0
    %v793 = vsel %vm548, %v788, 0
    %795 = vmatpush.bf16.xpose.msra.mxu0 0
    %796 = vmatpush.bf16.xpose.msra.mxu0 0
    %797 = vmatpush.bf16.xpose.msra.mxu0 0
    %798 = vmatpush.bf16.xpose.msra.mxu0 0
    %799 = vmatpush.bf16.xpose.msra.mxu0 0
    %800 = vmatpush.bf16.xpose.msra.mxu0 0
    %801 = vmatpush.bf16.xpose.msra.mxu0 0
    %802 = vmatpush.bf16.xpose.msra.mxu0 %v793
    %803 = vmatmul.bf16.gmra.mxu0 %v790
    %v804 = vpop.f32.mrf.mxu0
    %v805 = vadd.f32 0.0, %v804
    %v806 = vpop.f32.mrf.mxu0
    %807 = vdwg.mxu0
    %808 = vrot.lane.b32.xlu0 %v684, 64
    %v809 = vpop.permute.xlu0 %808
    %810 = vrot.lane.b32.xlu0 %v689, 64
    %v811 = vpop.permute.xlu0 %810
    %v813 = vsel %vm548, %v809, 0
    %v816 = vsel %vm548, %v811, 0
    %818 = vmatpush.bf16.xpose.msra.mxu0 0
    %819 = vmatpush.bf16.xpose.msra.mxu0 0
    %820 = vmatpush.bf16.xpose.msra.mxu0 0
    %821 = vmatpush.bf16.xpose.msra.mxu0 0
    %822 = vmatpush.bf16.xpose.msra.mxu0 0
    %823 = vmatpush.bf16.xpose.msra.mxu0 0
    %824 = vmatpush.bf16.xpose.msra.mxu0 0
    %825 = vmatpush.bf16.xpose.msra.mxu0 %v816
    %826 = vmatmul.bf16.gmra.mxu0 %v813
    %v827 = vpop.f32.mrf.mxu0
    %v828 = vadd.f32 0.0, %v827
    %v829 = vpop.f32.mrf.mxu0
    %830 = vdwg.mxu0
    %v831 = vsel %vm587, %v805, -inf
    %832 = vmax.xlane.f32.xlu0 %v831
    %v833 = vpop.xlane.xlu0 %832
    %v834 = vsel %vm587, %v828, -inf
    %835 = vmax.xlane.f32.xlu0 %v834
    %v836 = vpop.xlane.xlu0 %835
    %v837 = vsub.f32 %v805, %v833
    %v838 = vsub.f32 %v828, %v836
    %v839 = vmul.f32 %v837, 1.442695
    %v840 = vpow.pop %v839
    %v841 = vmul.f32 %v838, 1.442695
    %v842 = vpow.pop %v841
    %v843 = vsel %vm587, %v840, 0.0
    %844 = vadd.xlane.f32.xlu0 %v843
    %v845 = vpop.xlane.xlu0 %844
    %v846 = vsel %vm587, %v842, 0.0
    %847 = vadd.xlane.f32.xlu0 %v846
    %v848 = vpop.xlane.xlu0 %847
    %v849 = vrcp.pop %v845
    %v850 = vrcp.pop %v848
    %v851 = vmul.f32 %v840, %v849
    %v852 = vmul.f32 %v842, %v850
    %v853 = vpack.c.bf16 %v851, %v851
    %v854 = vpack.c.bf16 %v852, %v852
    %855 = vrot.lane.b32.xlu0 %v737, 64
    %v856 = vpop.permute.xlu0 %855
    %v858 = vsel %vm587, %v853, 0
    %v861 = vsel %vm615, %v856, 0
    %863 = vmatpush.bf16.msra.mxu0 0
    %864 = vmatpush.bf16.msra.mxu0 0
    %865 = vmatpush.bf16.msra.mxu0 0
    %866 = vmatpush.bf16.msra.mxu0 0
    %867 = vmatpush.bf16.msra.mxu0 0
    %868 = vmatpush.bf16.msra.mxu0 0
    %869 = vmatpush.bf16.msra.mxu0 0
    %870 = vmatpush.bf16.msra.mxu0 %v861
    %871 = vmatmul.bf16.gmra.mxu0 %v858
    %v872 = vpop.f32.mrf.mxu0
    %v873 = vadd.f32 0.0, %v872
    %v874 = vpop.f32.mrf.mxu0
    %875 = vdwg.mxu0
    %876 = vrot.lane.b32.xlu0 %v761, 64
    %v877 = vpop.permute.xlu0 %876
    %v879 = vsel %vm587, %v854, 0
    %v882 = vsel %vm615, %v877, 0
    %884 = vmatpush.bf16.msra.mxu0 0
    %885 = vmatpush.bf16.msra.mxu0 0
    %886 = vmatpush.bf16.msra.mxu0 0
    %887 = vmatpush.bf16.msra.mxu0 0
    %888 = vmatpush.bf16.msra.mxu0 0
    %889 = vmatpush.bf16.msra.mxu0 0
    %890 = vmatpush.bf16.msra.mxu0 0
    %891 = vmatpush.bf16.msra.mxu0 %v882
    %892 = vmatmul.bf16.gmra.mxu0 %v879
    %v893 = vpop.f32.mrf.mxu0
    %v894 = vadd.f32 0.0, %v893
    %v895 = vpop.f32.mrf.mxu0
    %896 = vdwg.mxu0
    %v897 = vpack.c.bf16 %v873, %v873
    %v898 = vpack.c.bf16 %v894, %v894
    %899 = vrot.lane.b32.xlu0 %v655, 32
    %v900 = vpop.permute.xlu0 %899
    %901 = vrot.lane.b32.xlu0 %v660, 32
    %v902 = vpop.permute.xlu0 %901
    %v904 = vsel %vm548, %v900, 0
    %v907 = vsel %vm548, %v902, 0
    %909 = vmatpush.bf16.xpose.msra.mxu0 0
    %910 = vmatpush.bf16.xpose.msra.mxu0 0
    %911 = vmatpush.bf16.xpose.msra.mxu0 0
    %912 = vmatpush.bf16.xpose.msra.mxu0 0
    %913 = vmatpush.bf16.xpose.msra.mxu0 0
    %914 = vmatpush.bf16.xpose.msra.mxu0 0
    %915 = vmatpush.bf16.xpose.msra.mxu0 0
    %916 = vmatpush.bf16.xpose.msra.mxu0 %v907
    %917 = vmatmul.bf16.gmra.mxu0 %v904
    %v918 = vpop.f32.mrf.mxu0
    %v919 = vadd.f32 0.0, %v918
    %v920 = vpop.f32.mrf.mxu0
    %921 = vdwg.mxu0
    %922 = vrot.lane.b32.xlu0 %v684, 32
    %v923 = vpop.permute.xlu0 %922
    %924 = vrot.lane.b32.xlu0 %v689, 32
    %v925 = vpop.permute.xlu0 %924
    %v927 = vsel %vm548, %v923, 0
    %v930 = vsel %vm548, %v925, 0
    %932 = vmatpush.bf16.xpose.msra.mxu0 0
    %933 = vmatpush.bf16.xpose.msra.mxu0 0
    %934 = vmatpush.bf16.xpose.msra.mxu0 0
    %935 = vmatpush.bf16.xpose.msra.mxu0 0
    %936 = vmatpush.bf16.xpose.msra.mxu0 0
    %937 = vmatpush.bf16.xpose.msra.mxu0 0
    %938 = vmatpush.bf16.xpose.msra.mxu0 0
    %939 = vmatpush.bf16.xpose.msra.mxu0 %v930
    %940 = vmatmul.bf16.gmra.mxu0 %v927
    %v941 = vpop.f32.mrf.mxu0
    %v942 = vadd.f32 0.0, %v941
    %v943 = vpop.f32.mrf.mxu0
    %944 = vdwg.mxu0
    %v945 = vsel %vm587, %v919, -inf
    %946 = vmax.xlane.f32.xlu0 %v945
    %v947 = vpop.xlane.xlu0 %946
    %v948 = vsel %vm587, %v942, -inf
    %949 = vmax.xlane.f32.xlu0 %v948
    %v950 = vpop.xlane.xlu0 %949
    %v951 = vsub.f32 %v919, %v947
    %v952 = vsub.f32 %v942, %v950
    %v953 = vmul.f32 %v951, 1.442695
    %v954 = vpow.pop %v953
    %v955 = vmul.f32 %v952, 1.442695
    %v956 = vpow.pop %v955
    %v957 = vsel %vm587, %v954, 0.0
    %958 = vadd.xlane.f32.xlu0 %v957
    %v959 = vpop.xlane.xlu0 %958
    %v960 = vsel %vm587, %v956, 0.0
    %961 = vadd.xlane.f32.xlu0 %v960
    %v962 = vpop.xlane.xlu0 %961
    %v963 = vrcp.pop %v959
    %v964 = vrcp.pop %v962
    %v965 = vmul.f32 %v954, %v963
    %v966 = vmul.f32 %v956, %v964
    %v967 = vpack.c.bf16 %v965, %v965
    %v968 = vpack.c.bf16 %v966, %v966
    %969 = vrot.lane.b32.xlu0 %v737, 32
    %v970 = vpop.permute.xlu0 %969
    %v972 = vsel %vm587, %v967, 0
    %v975 = vsel %vm615, %v970, 0
    %977 = vmatpush.bf16.msra.mxu0 0
    %978 = vmatpush.bf16.msra.mxu0 0
    %979 = vmatpush.bf16.msra.mxu0 0
    %980 = vmatpush.bf16.msra.mxu0 0
    %981 = vmatpush.bf16.msra.mxu0 0
    %982 = vmatpush.bf16.msra.mxu0 0
    %983 = vmatpush.bf16.msra.mxu0 0
    %984 = vmatpush.bf16.msra.mxu0 %v975
    %985 = vmatmul.bf16.gmra.mxu0 %v972
    %v986 = vpop.f32.mrf.mxu0
    %v987 = vadd.f32 0.0, %v986
    %v988 = vpop.f32.mrf.mxu0
    %989 = vdwg.mxu0
    %990 = vrot.lane.b32.xlu0 %v761, 32
    %v991 = vpop.permute.xlu0 %990
    %v993 = vsel %vm587, %v968, 0
    %v996 = vsel %vm615, %v991, 0
    %998 = vmatpush.bf16.msra.mxu0 0
    %999 = vmatpush.bf16.msra.mxu0 0
    %1000 = vmatpush.bf16.msra.mxu0 0
    %1001 = vmatpush.bf16.msra.mxu0 0
    %1002 = vmatpush.bf16.msra.mxu0 0
    %1003 = vmatpush.bf16.msra.mxu0 0
    %1004 = vmatpush.bf16.msra.mxu0 0
    %1005 = vmatpush.bf16.msra.mxu0 %v996
    %1006 = vmatmul.bf16.gmra.mxu0 %v993
    %v1007 = vpop.f32.mrf.mxu0
    %v1008 = vadd.f32 0.0, %v1007
    %v1009 = vpop.f32.mrf.mxu0
    %1010 = vdwg.mxu0
    %v1011 = vpack.c.bf16 %v987, %v987
    %v1012 = vpack.c.bf16 %v1008, %v1008
    %v1015 = vunpack.c.l.b16 %v651
    %v1016 = vunpack.c.l.b16 %v652
    %v1017 = vpack.c.b16 %v1016, %v1015
    %v1020 = vunpack.c.l.b16 %v783
    %v1021 = vunpack.c.l.b16 %v784
    %v1022 = vpack.c.b16 %v1021, %v1020
    %1023 = vrot.lane.b32.xlu0 %v1022, 32
    %v1024 = vpop.permute.xlu0 %1023
    %v1027 = vunpack.c.l.b16 %v897
    %v1028 = vunpack.c.l.b16 %v898
    %v1029 = vpack.c.b16 %v1028, %v1027
    %1030 = vrot.lane.b32.xlu0 %v1029, 64
    %v1031 = vpop.permute.xlu0 %1030
    %v1034 = vunpack.c.l.b16 %v1011
    %v1035 = vunpack.c.l.b16 %v1012
    %v1036 = vpack.c.b16 %v1035, %v1034
    %1037 = vrot.lane.b32.xlu0 %v1036, 96
    %v1038 = vpop.permute.xlu0 %1037
    %v1041 = vsel %vm548, %v1017, %v1024
    %vm1042 = vcmask 523264
    %v1044 = vsel %vm1042, %v1041, %v1031
    %vm1045 = vcmask 785408
    %v1047 = vsel %vm1045, %v1044, %v1038
    %v1049 = vld [vmem:[#allocation6] sm:$0xf]
    %v1050 = vld [vmem:[#allocation6 + $0x4] sm:$0xf]
    %v1051 = vld [vmem:[#allocation6 + $0x8] sm:$0xf]
    %v1052 = vld [vmem:[#allocation6 + $0xc] sm:$0xf]
    %v1053 = vld [vmem:[#allocation6 + $0x10] sm:$0xf]
    %v1054 = vld [vmem:[#allocation6 + $0x14] sm:$0xf]
    %v1055 = vld [vmem:[#allocation6 + $0x18] sm:$0xf]
    %v1056 = vld [vmem:[#allocation6 + $0x1c] sm:$0xf]
    %v1057 = vld [vmem:[#allocation6 + $0x20] sm:$0xf]
    %v1058 = vld [vmem:[#allocation6 + $0x24] sm:$0xf]
    %v1059 = vld [vmem:[#allocation6 + $0x28] sm:$0xf]
    %v1060 = vld [vmem:[#allocation6 + $0x2c] sm:$0xf]
    %v1061 = vld [vmem:[#allocation6 + $0x30] sm:$0xf]
    %v1062 = vld [vmem:[#allocation6 + $0x34] sm:$0xf]
    %v1063 = vld [vmem:[#allocation6 + $0x38] sm:$0xf]
    %v1064 = vld [vmem:[#allocation6 + $0x3c] sm:$0xf]
    %v1065 = vld [vmem:[%s5] sm:$0x1]
    %v1067 = vperm.slane %v1065, 0
    %v1085 = vunpack.c.l.b16 %v1049
    %v1086 = vunpack.c.l.b16 %v1050
    %v1087 = vunpack.c.l.b16 %v1051
    %v1088 = vunpack.c.l.b16 %v1052
    %v1089 = vunpack.c.l.b16 %v1053
    %v1090 = vunpack.c.l.b16 %v1054
    %v1091 = vunpack.c.l.b16 %v1055
    %v1092 = vunpack.c.l.b16 %v1056
    %v1093 = vunpack.c.l.b16 %v1057
    %v1094 = vunpack.c.l.b16 %v1058
    %v1095 = vunpack.c.l.b16 %v1059
    %v1096 = vunpack.c.l.b16 %v1060
    %v1097 = vunpack.c.l.b16 %v1061
    %v1098 = vunpack.c.l.b16 %v1062
    %v1099 = vunpack.c.l.b16 %v1063
    %v1100 = vunpack.c.l.b16 %v1064
    %v1101 = vpack.c.b16 %v1086, %v1085
    %v1102 = vpack.c.b16 %v1088, %v1087
    %v1103 = vpack.c.b16 %v1090, %v1089
    %v1104 = vpack.c.b16 %v1092, %v1091
    %v1105 = vpack.c.b16 %v1094, %v1093
    %v1106 = vpack.c.b16 %v1096, %v1095
    %v1107 = vpack.c.b16 %v1098, %v1097
    %v1108 = vpack.c.b16 %v1100, %v1099
    %1117 = vmatpush.bf16.msra.mxu0 %v1108
    %1118 = vmatpush.bf16.msra.mxu0 %v1107
    %1119 = vmatpush.bf16.msra.mxu0 %v1106
    %1120 = vmatpush.bf16.msra.mxu0 %v1105
    %1121 = vmatpush.bf16.msra.mxu0 %v1104
    %1122 = vmatpush.bf16.msra.mxu0 %v1103
    %1123 = vmatpush.bf16.msra.mxu0 %v1102
    %1124 = vmatpush.bf16.msra.mxu0 %v1101
    %1125 = vmatmul.bf16.gmra.mxu0 %v1047
    %v1126 = vpop.f32.mrf.mxu0
    %v1127 = vadd.f32 %v1067, %v1126
    %v1128 = vpop.f32.mrf.mxu0
    %v1129 = vadd.f32 %v1067, %v1128
    %1130 = vdwg.mxu0
    %v1131 = vadd.f32 %v325, %v1127
    %v1132 = vadd.f32 %v327, %v1129
    %v1133 = vld [vmem:[%s6] sm:$0x1]
    %v1134 = vld [vmem:[%s7] sm:$0x1]
    %1135 = vadd.xlane.f32.xlu0 %v1131
    %v1136 = vpop.xlane.xlu0 %1135
    %1137 = vadd.xlane.f32.xlu0 %v1132
    %v1138 = vpop.xlane.xlu0 %1137
    %v1139 = vrcp.pop 128.0
    %v1140 = vmul.f32 128.0, %v1139
    %v1141 = vsub.f32 1.0, %v1140
    %v1142 = vmul.f32 %v1139, %v1141
    %v1143 = vadd.f32 %v1139, %v1142
    %vm1144 = vweird.f32 %v1139
    %v1145 = vsel %vm1144, %v1139, %v1143
    %v1146 = vmul.f32 %v1136, %v1145
    %v1147 = vmul.f32 %v1138, %v1145
    %v1148 = vsub.f32 %v1131, %v1146
    %v1149 = vsub.f32 %v1132, %v1147
    %v1150 = vmul.f32 %v1148, %v1148
    %v1151 = vmul.f32 %v1149, %v1149
    %1152 = vadd.xlane.f32.xlu0 %v1150
    %v1153 = vpop.xlane.xlu0 %1152
    %1154 = vadd.xlane.f32.xlu0 %v1151
    %v1155 = vpop.xlane.xlu0 %1154
    %v1156 = vmul.f32 %v1153, %v1145
    %v1157 = vmul.f32 %v1155, %v1145
    %v1158 = vadd.f32 %v1156, 1e-05
    %v1159 = vadd.f32 %v1157, 1e-05
    %v1160 = vrsqrt.pop %v1158
    %v1161 = vmul.f32 %v1160, %v1158
    %v1162 = vmul.f32 %v1161, %v1160
    %v1163 = vmul.f32 0.5, %v1162
    %v1164 = vsub.f32 1.5, %v1163
    %v1165 = vmul.f32 %v1160, %v1164
    %vm1166 = vweird.f32 %v1158
    %vm1167 = vweird.f32 %v1160
    %vm1168 = vmor %vm1166, %vm1167
    %v1169 = vsel %vm1168, %v1160, %v1165
    %v1170 = vrsqrt.pop %v1159
    %v1171 = vmul.f32 %v1170, %v1159
    %v1172 = vmul.f32 %v1171, %v1170
    %v1173 = vmul.f32 0.5, %v1172
    %v1174 = vsub.f32 1.5, %v1173
    %v1175 = vmul.f32 %v1170, %v1174
    %vm1176 = vweird.f32 %v1159
    %vm1177 = vweird.f32 %v1170
    %vm1178 = vmor %vm1176, %vm1177
    %v1179 = vsel %vm1178, %v1170, %v1175
    %v1180 = vmul.f32 %v1148, %v1169
    %v1181 = vmul.f32 %v1149, %v1179
    %v1183 = vperm.slane %v1133, 0
    %v1185 = vmul.f32 %v1180, %v1183
    %v1186 = vmul.f32 %v1181, %v1183
    %v1188 = vperm.slane %v1134, 0
    %v1190 = vadd.f32 %v1185, %v1188
    %v1191 = vadd.f32 %v1186, %v1188
    %v1192 = vpack.c.bf16 %v1191, %v1190
    %v1193 = vld [vmem:[#allocation7] sm:$0xff]
    %v1194 = vld [vmem:[#allocation7 + $0x8] sm:$0xff]
    %v1195 = vld [vmem:[#allocation7 + $0x10] sm:$0xff]
    %v1196 = vld [vmem:[#allocation7 + $0x18] sm:$0xff]
    %v1197 = vld [vmem:[#allocation7 + $0x20] sm:$0xff]
    %v1198 = vld [vmem:[#allocation7 + $0x28] sm:$0xff]
    %v1199 = vld [vmem:[#allocation7 + $0x30] sm:$0xff]
    %v1200 = vld [vmem:[#allocation7 + $0x38] sm:$0xff]
    %v1201 = vld [vmem:[#allocation7 + $0x40] sm:$0xff]
    %v1202 = vld [vmem:[#allocation7 + $0x48] sm:$0xff]
    %v1203 = vld [vmem:[#allocation7 + $0x50] sm:$0xff]
    %v1204 = vld [vmem:[#allocation7 + $0x58] sm:$0xff]
    %v1205 = vld [vmem:[#allocation7 + $0x60] sm:$0xff]
    %v1206 = vld [vmem:[#allocation7 + $0x68] sm:$0xff]
    %v1207 = vld [vmem:[#allocation7 + $0x70] sm:$0xff]
    %v1208 = vld [vmem:[#allocation7 + $0x78] sm:$0xff]
    %v1209 = vld [vmem:[%s9] sm:$0x3]
    %v1211 = vperm.slane %v1209, 0
    %v1212 = vperm.slane %v1209, 1
    %v1231 = vunpack.c.l.b16 %v1193
    %v1232 = vunpack.c.h.b16 %v1193
    %v1233 = vunpack.c.l.b16 %v1194
    %v1234 = vunpack.c.h.b16 %v1194
    %v1235 = vunpack.c.l.b16 %v1195
    %v1236 = vunpack.c.h.b16 %v1195
    %v1237 = vunpack.c.l.b16 %v1196
    %v1238 = vunpack.c.h.b16 %v1196
    %v1239 = vunpack.c.l.b16 %v1197
    %v1240 = vunpack.c.h.b16 %v1197
    %v1241 = vunpack.c.l.b16 %v1198
    %v1242 = vunpack.c.h.b16 %v1198
    %v1243 = vunpack.c.l.b16 %v1199
    %v1244 = vunpack.c.h.b16 %v1199
    %v1245 = vunpack.c.l.b16 %v1200
    %v1246 = vunpack.c.h.b16 %v1200
    %v1247 = vunpack.c.l.b16 %v1201
    %v1248 = vunpack.c.h.b16 %v1201
    %v1249 = vunpack.c.l.b16 %v1202
    %v1250 = vunpack.c.h.b16 %v1202
    %v1251 = vunpack.c.l.b16 %v1203
    %v1252 = vunpack.c.h.b16 %v1203
    %v1253 = vunpack.c.l.b16 %v1204
    %v1254 = vunpack.c.h.b16 %v1204
    %v1255 = vunpack.c.l.b16 %v1205
    %v1256 = vunpack.c.h.b16 %v1205
    %v1257 = vunpack.c.l.b16 %v1206
    %v1258 = vunpack.c.h.b16 %v1206
    %v1259 = vunpack.c.l.b16 %v1207
    %v1260 = vunpack.c.h.b16 %v1207
    %v1261 = vunpack.c.l.b16 %v1208
    %v1262 = vunpack.c.h.b16 %v1208
    %v1263 = vpack.c.b16 %v1233, %v1231
    %v1264 = vpack.c.b16 %v1234, %v1232
    %v1265 = vpack.c.b16 %v1237, %v1235
    %v1266 = vpack.c.b16 %v1238, %v1236
    %v1267 = vpack.c.b16 %v1241, %v1239
    %v1268 = vpack.c.b16 %v1242, %v1240
    %v1269 = vpack.c.b16 %v1245, %v1243
    %v1270 = vpack.c.b16 %v1246, %v1244
    %v1271 = vpack.c.b16 %v1249, %v1247
    %v1272 = vpack.c.b16 %v1250, %v1248
    %v1273 = vpack.c.b16 %v1253, %v1251
    %v1274 = vpack.c.b16 %v1254, %v1252
    %v1275 = vpack.c.b16 %v1257, %v1255
    %v1276 = vpack.c.b16 %v1258, %v1256
    %v1277 = vpack.c.b16 %v1261, %v1259
    %v1278 = vpack.c.b16 %v1262, %v1260
    %1295 = vmatpush.bf16.msra.mxu0 %v1277
    %1296 = vmatpush.bf16.msra.mxu0 %v1275
    %1297 = vmatpush.bf16.msra.mxu0 %v1273
    %1298 = vmatpush.bf16.msra.mxu0 %v1271
    %1299 = vmatpush.bf16.msra.mxu0 %v1269
    %1300 = vmatpush.bf16.msra.mxu0 %v1267
    %1301 = vmatpush.bf16.msra.mxu0 %v1265
    %1302 = vmatpush.bf16.msra.mxu0 %v1263
    %1303 = vmatmul.bf16.gmra.mxu0 %v1192
    %v1304 = vpop.f32.mrf.mxu0
    %v1305 = vadd.f32 %v1211, %v1304
    %v1306 = vpop.f32.mrf.mxu0
    %v1307 = vadd.f32 %v1211, %v1306
    %1308 = vdwg.mxu0
    %1309 = vmatpush.bf16.msra.mxu0 %v1278
    %1310 = vmatpush.bf16.msra.mxu0 %v1276
    %1311 = vmatpush.bf16.msra.mxu0 %v1274
    %1312 = vmatpush.bf16.msra.mxu0 %v1272
    %1313 = vmatpush.bf16.msra.mxu0 %v1270
    %1314 = vmatpush.bf16.msra.mxu0 %v1268
    %1315 = vmatpush.bf16.msra.mxu0 %v1266
    %1316 = vmatpush.bf16.msra.mxu0 %v1264
    %1317 = vmatmul.bf16.gmra.mxu0 %v1192
    %v1318 = vpop.f32.mrf.mxu0
    %v1319 = vadd.f32 %v1212, %v1318
    %v1320 = vpop.f32.mrf.mxu0
    %v1321 = vadd.f32 %v1212, %v1320
    %1322 = vdwg.mxu0
    %v1323 = vmax.f32 %v1305, 0.0
    %v1324 = vmax.f32 %v1319, 0.0
    %v1325 = vmax.f32 %v1307, 0.0
    %v1326 = vmax.f32 %v1321, 0.0
    %v1327 = vpack.c.bf16 %v1325, %v1323
    %v1328 = vpack.c.bf16 %v1326, %v1324
    %v1329 = vld [vmem:[#allocation9] sm:$0xf]
    %v1330 = vld [vmem:[#allocation9 + $0x4] sm:$0xf]
    %v1331 = vld [vmem:[#allocation9 + $0x8] sm:$0xf]
    %v1332 = vld [vmem:[#allocation9 + $0xc] sm:$0xf]
    %v1333 = vld [vmem:[#allocation9 + $0x10] sm:$0xf]
    %v1334 = vld [vmem:[#allocation9 + $0x14] sm:$0xf]
    %v1335 = vld [vmem:[#allocation9 + $0x18] sm:$0xf]
    %v1336 = vld [vmem:[#allocation9 + $0x1c] sm:$0xf]
    %v1337 = vld [vmem:[#allocation9 + $0x20] sm:$0xf]
    %v1338 = vld [vmem:[#allocation9 + $0x24] sm:$0xf]
    %v1339 = vld [vmem:[#allocation9 + $0x28] sm:$0xf]
    %v1340 = vld [vmem:[#allocation9 + $0x2c] sm:$0xf]
    %v1341 = vld [vmem:[#allocation9 + $0x30] sm:$0xf]
    %v1342 = vld [vmem:[#allocation9 + $0x34] sm:$0xf]
    %v1343 = vld [vmem:[#allocation9 + $0x38] sm:$0xf]
    %v1344 = vld [vmem:[#allocation9 + $0x3c] sm:$0xf]
    %v1345 = vld [vmem:[#allocation9 + $0x40] sm:$0xf]
    %v1346 = vld [vmem:[#allocation9 + $0x44] sm:$0xf]
    %v1347 = vld [vmem:[#allocation9 + $0x48] sm:$0xf]
    %v1348 = vld [vmem:[#allocation9 + $0x4c] sm:$0xf]
    %v1349 = vld [vmem:[#allocation9 + $0x50] sm:$0xf]
    %v1350 = vld [vmem:[#allocation9 + $0x54] sm:$0xf]
    %v1351 = vld [vmem:[#allocation9 + $0x58] sm:$0xf]
    %v1352 = vld [vmem:[#allocation9 + $0x5c] sm:$0xf]
    %v1353 = vld [vmem:[#allocation9 + $0x60] sm:$0xf]
    %v1354 = vld [vmem:[#allocation9 + $0x64] sm:$0xf]
    %v1355 = vld [vmem:[#allocation9 + $0x68] sm:$0xf]
    %v1356 = vld [vmem:[#allocation9 + $0x6c] sm:$0xf]
    %v1357 = vld [vmem:[#allocation9 + $0x70] sm:$0xf]
    %v1358 = vld [vmem:[#allocation9 + $0x74] sm:$0xf]
    %v1359 = vld [vmem:[#allocation9 + $0x78] sm:$0xf]
    %v1360 = vld [vmem:[#allocation9 + $0x7c] sm:$0xf]
    %v1361 = vld [vmem:[%s11] sm:$0x1]
    %v1363 = vperm.slane %v1361, 0
    %v1397 = vunpack.c.l.b16 %v1329
    %v1398 = vunpack.c.l.b16 %v1330
    %v1399 = vunpack.c.l.b16 %v1331
    %v1400 = vunpack.c.l.b16 %v1332
    %v1401 = vunpack.c.l.b16 %v1333
    %v1402 = vunpack.c.l.b16 %v1334
    %v1403 = vunpack.c.l.b16 %v1335
    %v1404 = vunpack.c.l.b16 %v1336
    %v1405 = vunpack.c.l.b16 %v1337
    %v1406 = vunpack.c.l.b16 %v1338
    %v1407 = vunpack.c.l.b16 %v1339
    %v1408 = vunpack.c.l.b16 %v1340
    %v1409 = vunpack.c.l.b16 %v1341
    %v1410 = vunpack.c.l.b16 %v1342
    %v1411 = vunpack.c.l.b16 %v1343
    %v1412 = vunpack.c.l.b16 %v1344
    %v1413 = vunpack.c.l.b16 %v1345
    %v1414 = vunpack.c.l.b16 %v1346
    %v1415 = vunpack.c.l.b16 %v1347
    %v1416 = vunpack.c.l.b16 %v1348
    %v1417 = vunpack.c.l.b16 %v1349
    %v1418 = vunpack.c.l.b16 %v1350
    %v1419 = vunpack.c.l.b16 %v1351
    %v1420 = vunpack.c.l.b16 %v1352
    %v1421 = vunpack.c.l.b16 %v1353
    %v1422 = vunpack.c.l.b16 %v1354
    %v1423 = vunpack.c.l.b16 %v1355
    %v1424 = vunpack.c.l.b16 %v1356
    %v1425 = vunpack.c.l.b16 %v1357
    %v1426 = vunpack.c.l.b16 %v1358
    %v1427 = vunpack.c.l.b16 %v1359
    %v1428 = vunpack.c.l.b16 %v1360
    %v1429 = vpack.c.b16 %v1398, %v1397
    %v1430 = vpack.c.b16 %v1400, %v1399
    %v1431 = vpack.c.b16 %v1402, %v1401
    %v1432 = vpack.c.b16 %v1404, %v1403
    %v1433 = vpack.c.b16 %v1406, %v1405
    %v1434 = vpack.c.b16 %v1408, %v1407
    %v1435 = vpack.c.b16 %v1410, %v1409
    %v1436 = vpack.c.b16 %v1412, %v1411
    %v1437 = vpack.c.b16 %v1414, %v1413
    %v1438 = vpack.c.b16 %v1416, %v1415
    %v1439 = vpack.c.b16 %v1418, %v1417
    %v1440 = vpack.c.b16 %v1420, %v1419
    %v1441 = vpack.c.b16 %v1422, %v1421
    %v1442 = vpack.c.b16 %v1424, %v1423
    %v1443 = vpack.c.b16 %v1426, %v1425
    %v1444 = vpack.c.b16 %v1428, %v1427
    %1461 = vmatpush.bf16.msra.mxu0 %v1436
    %1462 = vmatpush.bf16.msra.mxu0 %v1435
    %1463 = vmatpush.bf16.msra.mxu0 %v1434
    %1464 = vmatpush.bf16.msra.mxu0 %v1433
    %1465 = vmatpush.bf16.msra.mxu0 %v1432
    %1466 = vmatpush.bf16.msra.mxu0 %v1431
    %1467 = vmatpush.bf16.msra.mxu0 %v1430
    %1468 = vmatpush.bf16.msra.mxu0 %v1429
    %1469 = vmatmul.bf16.gmra.mxu0 %v1327
    %v1470 = vpop.f32.mrf.mxu0
    %v1471 = vadd.f32 %v1363, %v1470
    %v1472 = vpop.f32.mrf.mxu0
    %v1473 = vadd.f32 %v1363, %v1472
    %1474 = vdwg.mxu0
    %1475 = vmatpush.bf16.msra.mxu0 %v1444
    %1476 = vmatpush.bf16.msra.mxu0 %v1443
    %1477 = vmatpush.bf16.msra.mxu0 %v1442
    %1478 = vmatpush.bf16.msra.mxu0 %v1441
    %1479 = vmatpush.bf16.msra.mxu0 %v1440
    %1480 = vmatpush.bf16.msra.mxu0 %v1439
    %1481 = vmatpush.bf16.msra.mxu0 %v1438
    %1482 = vmatpush.bf16.msra.mxu0 %v1437
    %1483 = vmatmul.bf16.gmra.mxu0 %v1328
    %v1484 = vpop.f32.mrf.mxu0
    %v1485 = vadd.f32 %v1471, %v1484
    %v1486 = vpop.f32.mrf.mxu0
    %v1487 = vadd.f32 %v1473, %v1486
    %1488 = vdwg.mxu0
    %v1489 = vadd.f32 %v1190, %v1485
    %v1490 = vadd.f32 %v1191, %v1487
    %v1491 = vld [vmem:[%s12] sm:$0x1]
    %v1492 = vld [vmem:[%s13] sm:$0x1]
    %1493 = vadd.xlane.f32.xlu0 %v1489
    %v1494 = vpop.xlane.xlu0 %1493
    %1495 = vadd.xlane.f32.xlu0 %v1490
    %v1496 = vpop.xlane.xlu0 %1495
    %v1497 = vmul.f32 %v1494, %v1145
    %v1498 = vmul.f32 %v1496, %v1145
    %v1499 = vsub.f32 %v1489, %v1497
    %v1500 = vsub.f32 %v1490, %v1498
    %v1501 = vmul.f32 %v1499, %v1499
    %v1502 = vmul.f32 %v1500, %v1500
    %1503 = vadd.xlane.f32.xlu0 %v1501
    %v1504 = vpop.xlane.xlu0 %1503
    %1505 = vadd.xlane.f32.xlu0 %v1502
    %v1506 = vpop.xlane.xlu0 %1505
    %v1507 = vmul.f32 %v1504, %v1145
    %v1508 = vmul.f32 %v1506, %v1145
    %v1509 = vadd.f32 %v1507, 1e-05
    %v1510 = vadd.f32 %v1508, 1e-05
    %v1511 = vrsqrt.pop %v1509
    %v1512 = vmul.f32 %v1511, %v1509
    %v1513 = vmul.f32 %v1512, %v1511
    %v1514 = vmul.f32 0.5, %v1513
    %v1515 = vsub.f32 1.5, %v1514
    %v1516 = vmul.f32 %v1511, %v1515
    %vm1517 = vweird.f32 %v1509
    %vm1518 = vweird.f32 %v1511
    %vm1519 = vmor %vm1517, %vm1518
    %v1520 = vsel %vm1519, %v1511, %v1516
    %v1521 = vrsqrt.pop %v1510
    %v1522 = vmul.f32 %v1521, %v1510
    %v1523 = vmul.f32 %v1522, %v1521
    %v1524 = vmul.f32 0.5, %v1523
    %v1525 = vsub.f32 1.5, %v1524
    %v1526 = vmul.f32 %v1521, %v1525
    %vm1527 = vweird.f32 %v1510
    %vm1528 = vweird.f32 %v1521
    %vm1529 = vmor %vm1527, %vm1528
    %v1530 = vsel %vm1529, %v1521, %v1526
    %v1531 = vmul.f32 %v1499, %v1520
    %v1532 = vmul.f32 %v1500, %v1530
    %v1534 = vperm.slane %v1491, 0
    %v1536 = vmul.f32 %v1531, %v1534
    %v1537 = vmul.f32 %v1532, %v1534
    %v1539 = vperm.slane %v1492, 0
    %v1541 = vadd.f32 %v1536, %v1539
    %v1542 = vadd.f32 %v1537, %v1539
    %v1543 = vpack.c.bf16 %v1542, %v1541
    %s1544 = scalar_lea.vmem [#allocation4], 192
    %v1545 = vld [vmem:[%s1544] sm:$0xff]
    %v1546 = vld [vmem:[%s1544 + $0x8] sm:$0xf]
    %v1547 = vld [vmem:[%s1544 + $0xc] sm:$0xff]
    %v1548 = vld [vmem:[%s1544 + $0x14] sm:$0xf]
    %v1549 = vld [vmem:[%s1544 + $0x18] sm:$0xff]
    %v1550 = vld [vmem:[%s1544 + $0x20] sm:$0xf]
    %v1551 = vld [vmem:[%s1544 + $0x24] sm:$0xff]
    %v1552 = vld [vmem:[%s1544 + $0x2c] sm:$0xf]
    %v1553 = vld [vmem:[%s1544 + $0x30] sm:$0xff]
    %v1554 = vld [vmem:[%s1544 + $0x38] sm:$0xf]
    %v1555 = vld [vmem:[%s1544 + $0x3c] sm:$0xff]
    %v1556 = vld [vmem:[%s1544 + $0x44] sm:$0xf]
    %v1557 = vld [vmem:[%s1544 + $0x48] sm:$0xff]
    %v1558 = vld [vmem:[%s1544 + $0x50] sm:$0xf]
    %v1559 = vld [vmem:[%s1544 + $0x54] sm:$0xff]
    %v1560 = vld [vmem:[%s1544 + $0x5c] sm:$0xf]
    %v1561 = vld [vmem:[%s1544 + $0x60] sm:$0xff]
    %v1562 = vld [vmem:[%s1544 + $0x68] sm:$0xf]
    %v1563 = vld [vmem:[%s1544 + $0x6c] sm:$0xff]
    %v1564 = vld [vmem:[%s1544 + $0x74] sm:$0xf]
    %v1565 = vld [vmem:[%s1544 + $0x78] sm:$0xff]
    %v1566 = vld [vmem:[%s1544 + $0x80] sm:$0xf]
    %v1567 = vld [vmem:[%s1544 + $0x84] sm:$0xff]
    %v1568 = vld [vmem:[%s1544 + $0x8c] sm:$0xf]
    %v1569 = vld [vmem:[%s1544 + $0x90] sm:$0xff]
    %v1570 = vld [vmem:[%s1544 + $0x98] sm:$0xf]
    %v1571 = vld [vmem:[%s1544 + $0x9c] sm:$0xff]
    %v1572 = vld [vmem:[%s1544 + $0xa4] sm:$0xf]
    %v1573 = vld [vmem:[%s1544 + $0xa8] sm:$0xff]
    %v1574 = vld [vmem:[%s1544 + $0xb0] sm:$0xf]
    %v1575 = vld [vmem:[%s1544 + $0xb4] sm:$0xff]
    %v1576 = vld [vmem:[%s1544 + $0xbc] sm:$0xf]
    %s1577 = scalar_lea.vmem %s3, 3
    %v1578 = vld [vmem:[%s1577] sm:$0x7]
    %v1580 = vperm.slane %v1578, 0
    %v1581 = vperm.slane %v1578, 1
    %v1582 = vperm.slane %v1578, 2
    %v1618 = vunpack.c.l.b16 %v1545
    %v1619 = vunpack.c.h.b16 %v1545
    %v1620 = vunpack.c.l.b16 %v1546
    %v1621 = vunpack.c.l.b16 %v1547
    %v1622 = vunpack.c.h.b16 %v1547
    %v1623 = vunpack.c.l.b16 %v1548
    %v1624 = vunpack.c.l.b16 %v1549
    %v1625 = vunpack.c.h.b16 %v1549
    %v1626 = vunpack.c.l.b16 %v1550
    %v1627 = vunpack.c.l.b16 %v1551
    %v1628 = vunpack.c.h.b16 %v1551
    %v1629 = vunpack.c.l.b16 %v1552
    %v1630 = vunpack.c.l.b16 %v1553
    %v1631 = vunpack.c.h.b16 %v1553
    %v1632 = vunpack.c.l.b16 %v1554
    %v1633 = vunpack.c.l.b16 %v1555
    %v1634 = vunpack.c.h.b16 %v1555
    %v1635 = vunpack.c.l.b16 %v1556
    %v1636 = vunpack.c.l.b16 %v1557
    %v1637 = vunpack.c.h.b16 %v1557
    %v1638 = vunpack.c.l.b16 %v1558
    %v1639 = vunpack.c.l.b16 %v1559
    %v1640 = vunpack.c.h.b16 %v1559
    %v1641 = vunpack.c.l.b16 %v1560
    %v1642 = vunpack.c.l.b16 %v1561
    %v1643 = vunpack.c.h.b16 %v1561
    %v1644 = vunpack.c.l.b16 %v1562
    %v1645 = vunpack.c.l.b16 %v1563
    %v1646 = vunpack.c.h.b16 %v1563
    %v1647 = vunpack.c.l.b16 %v1564
    %v1648 = vunpack.c.l.b16 %v1565
    %v1649 = vunpack.c.h.b16 %v1565
    %v1650 = vunpack.c.l.b16 %v1566
    %v1651 = vunpack.c.l.b16 %v1567
    %v1652 = vunpack.c.h.b16 %v1567
    %v1653 = vunpack.c.l.b16 %v1568
    %v1654 = vunpack.c.l.b16 %v1569
    %v1655 = vunpack.c.h.b16 %v1569
    %v1656 = vunpack.c.l.b16 %v1570
    %v1657 = vunpack.c.l.b16 %v1571
    %v1658 = vunpack.c.h.b16 %v1571
    %v1659 = vunpack.c.l.b16 %v1572
    %v1660 = vunpack.c.l.b16 %v1573
    %v1661 = vunpack.c.h.b16 %v1573
    %v1662 = vunpack.c.l.b16 %v1574
    %v1663 = vunpack.c.l.b16 %v1575
    %v1664 = vunpack.c.h.b16 %v1575
    %v1665 = vunpack.c.l.b16 %v1576
    %v1666 = vpack.c.b16 %v1621, %v1618
    %v1667 = vpack.c.b16 %v1622, %v1619
    %v1668 = vpack.c.b16 %v1623, %v1620
    %v1669 = vpack.c.b16 %v1627, %v1624
    %v1670 = vpack.c.b16 %v1628, %v1625
    %v1671 = vpack.c.b16 %v1629, %v1626
    %v1672 = vpack.c.b16 %v1633, %v1630
    %v1673 = vpack.c.b16 %v1634, %v1631
    %v1674 = vpack.c.b16 %v1635, %v1632
    %v1675 = vpack.c.b16 %v1639, %v1636
    %v1676 = vpack.c.b16 %v1640, %v1637
    %v1677 = vpack.c.b16 %v1641, %v1638
    %v1678 = vpack.c.b16 %v1645, %v1642
    %v1679 = vpack.c.b16 %v1646, %v1643
    %v1680 = vpack.c.b16 %v1647, %v1644
    %v1681 = vpack.c.b16 %v1651, %v1648
    %v1682 = vpack.c.b16 %v1652, %v1649
    %v1683 = vpack.c.b16 %v1653, %v1650
    %v1684 = vpack.c.b16 %v1657, %v1654
    %v1685 = vpack.c.b16 %v1658, %v1655
    %v1686 = vpack.c.b16 %v1659, %v1656
    %v1687 = vpack.c.b16 %v1663, %v1660
    %v1688 = vpack.c.b16 %v1664, %v1661
    %v1689 = vpack.c.b16 %v1665, %v1662
    %1714 = vmatpush.bf16.msra.mxu0 %v1687
    %1715 = vmatpush.bf16.msra.mxu0 %v1684
    %1716 = vmatpush.bf16.msra.mxu0 %v1681
    %1717 = vmatpush.bf16.msra.mxu0 %v1678
    %1718 = vmatpush.bf16.msra.mxu0 %v1675
    %1719 = vmatpush.bf16.msra.mxu0 %v1672
    %1720 = vmatpush.bf16.msra.mxu0 %v1669
    %1721 = vmatpush.bf16.msra.mxu0 %v1666
    %1722 = vmatmul.bf16.gmra.mxu0 %v1543
    %v1723 = vpop.f32.mrf.mxu0
    %v1724 = vadd.f32 %v1580, %v1723
    %v1725 = vpop.f32.mrf.mxu0
    %v1726 = vadd.f32 %v1580, %v1725
    %1727 = vdwg.mxu0
    %1728 = vmatpush.bf16.msra.mxu0 %v1688
    %1729 = vmatpush.bf16.msra.mxu0 %v1685
    %1730 = vmatpush.bf16.msra.mxu0 %v1682
    %1731 = vmatpush.bf16.msra.mxu0 %v1679
    %1732 = vmatpush.bf16.msra.mxu0 %v1676
    %1733 = vmatpush.bf16.msra.mxu0 %v1673
    %1734 = vmatpush.bf16.msra.mxu0 %v1670
    %1735 = vmatpush.bf16.msra.mxu0 %v1667
    %1736 = vmatmul.bf16.gmra.mxu0 %v1543
    %v1737 = vpop.f32.mrf.mxu0
    %v1738 = vadd.f32 %v1581, %v1737
    %v1739 = vpop.f32.mrf.mxu0
    %v1740 = vadd.f32 %v1581, %v1739
    %1741 = vdwg.mxu0
    %1742 = vmatpush.bf16.msra.mxu0 %v1689
    %1743 = vmatpush.bf16.msra.mxu0 %v1686
    %1744 = vmatpush.bf16.msra.mxu0 %v1683
    %1745 = vmatpush.bf16.msra.mxu0 %v1680
    %1746 = vmatpush.bf16.msra.mxu0 %v1677
    %1747 = vmatpush.bf16.msra.mxu0 %v1674
    %1748 = vmatpush.bf16.msra.mxu0 %v1671
    %1749 = vmatpush.bf16.msra.mxu0 %v1668
    %1750 = vmatmul.bf16.gmra.mxu0 %v1543
    %v1751 = vpop.f32.mrf.mxu0
    %v1752 = vadd.f32 %v1582, %v1751
    %v1753 = vpop.f32.mrf.mxu0
    %v1754 = vadd.f32 %v1582, %v1753
    %1755 = vdwg.mxu0
    %v1756 = vmul.f32 %v1724, 0.17677669
    %v1757 = vmul.f32 %v1726, 0.17677669
    %v1758 = vpack.c.bf16 %v1756, %v1756
    %v1759 = vpack.c.bf16 %v1757, %v1757
    %v1760 = vpack.c.bf16 %v1738, %v1738
    %v1761 = vpack.c.bf16 %v1740, %v1740
    %v1762 = vpack.c.bf16 %v1752, %v1752
    %v1763 = vpack.c.bf16 %v1754, %v1754
    %v1765 = vsel %vm548, %v1758, 0
    %v1768 = vsel %vm548, %v1760, 0
    %1770 = vmatpush.bf16.xpose.msra.mxu0 0
    %1771 = vmatpush.bf16.xpose.msra.mxu0 0
    %1772 = vmatpush.bf16.xpose.msra.mxu0 0
    %1773 = vmatpush.bf16.xpose.msra.mxu0 0
    %1774 = vmatpush.bf16.xpose.msra.mxu0 0
    %1775 = vmatpush.bf16.xpose.msra.mxu0 0
    %1776 = vmatpush.bf16.xpose.msra.mxu0 0
    %1777 = vmatpush.bf16.xpose.msra.mxu0 %v1768
    %1778 = vmatmul.bf16.gmra.mxu0 %v1765
    %v1779 = vpop.f32.mrf.mxu0
    %v1780 = vadd.f32 0.0, %v1779
    %v1781 = vpop.f32.mrf.mxu0
    %1782 = vdwg.mxu0
    %v1784 = vsel %vm548, %v1759, 0
    %v1787 = vsel %vm548, %v1761, 0
    %1789 = vmatpush.bf16.xpose.msra.mxu0 0
    %1790 = vmatpush.bf16.xpose.msra.mxu0 0
    %1791 = vmatpush.bf16.xpose.msra.mxu0 0
    %1792 = vmatpush.bf16.xpose.msra.mxu0 0
    %1793 = vmatpush.bf16.xpose.msra.mxu0 0
    %1794 = vmatpush.bf16.xpose.msra.mxu0 0
    %1795 = vmatpush.bf16.xpose.msra.mxu0 0
    %1796 = vmatpush.bf16.xpose.msra.mxu0 %v1787
    %1797 = vmatmul.bf16.gmra.mxu0 %v1784
    %v1798 = vpop.f32.mrf.mxu0
    %v1799 = vadd.f32 0.0, %v1798
    %v1800 = vpop.f32.mrf.mxu0
    %1801 = vdwg.mxu0
    %v1802 = vsel %vm587, %v1780, -inf
    %1803 = vmax.xlane.f32.xlu0 %v1802
    %v1804 = vpop.xlane.xlu0 %1803
    %v1805 = vsel %vm587, %v1799, -inf
    %1806 = vmax.xlane.f32.xlu0 %v1805
    %v1807 = vpop.xlane.xlu0 %1806
    %v1808 = vsub.f32 %v1780, %v1804
    %v1809 = vsub.f32 %v1799, %v1807
    %v1810 = vmul.f32 %v1808, 1.442695
    %v1811 = vpow.pop %v1810
    %v1812 = vmul.f32 %v1809, 1.442695
    %v1813 = vpow.pop %v1812
    %v1814 = vsel %vm587, %v1811, 0.0
    %1815 = vadd.xlane.f32.xlu0 %v1814
    %v1816 = vpop.xlane.xlu0 %1815
    %v1817 = vsel %vm587, %v1813, 0.0
    %1818 = vadd.xlane.f32.xlu0 %v1817
    %v1819 = vpop.xlane.xlu0 %1818
    %v1820 = vrcp.pop %v1816
    %v1821 = vrcp.pop %v1819
    %v1822 = vmul.f32 %v1811, %v1820
    %v1823 = vmul.f32 %v1813, %v1821
    %v1824 = vpack.c.bf16 %v1822, %v1822
    %v1825 = vpack.c.bf16 %v1823, %v1823
    %v1827 = vsel %vm587, %v1824, 0
    %v1830 = vsel %vm615, %v1762, 0
    %1832 = vmatpush.bf16.msra.mxu0 0
    %1833 = vmatpush.bf16.msra.mxu0 0
    %1834 = vmatpush.bf16.msra.mxu0 0
    %1835 = vmatpush.bf16.msra.mxu0 0
    %1836 = vmatpush.bf16.msra.mxu0 0
    %1837 = vmatpush.bf16.msra.mxu0 0
    %1838 = vmatpush.bf16.msra.mxu0 0
    %1839 = vmatpush.bf16.msra.mxu0 %v1830
    %1840 = vmatmul.bf16.gmra.mxu0 %v1827
    %v1841 = vpop.f32.mrf.mxu0
    %v1842 = vadd.f32 0.0, %v1841
    %v1843 = vpop.f32.mrf.mxu0
    %1844 = vdwg.mxu0
    %v1846 = vsel %vm587, %v1825, 0
    %v1849 = vsel %vm615, %v1763, 0
    %1851 = vmatpush.bf16.msra.mxu0 0
    %1852 = vmatpush.bf16.msra.mxu0 0
    %1853 = vmatpush.bf16.msra.mxu0 0
    %1854 = vmatpush.bf16.msra.mxu0 0
    %1855 = vmatpush.bf16.msra.mxu0 0
    %1856 = vmatpush.bf16.msra.mxu0 0
    %1857 = vmatpush.bf16.msra.mxu0 0
    %1858 = vmatpush.bf16.msra.mxu0 %v1849
    %1859 = vmatmul.bf16.gmra.mxu0 %v1846
    %v1860 = vpop.f32.mrf.mxu0
    %v1861 = vadd.f32 0.0, %v1860
    %v1862 = vpop.f32.mrf.mxu0
    %1863 = vdwg.mxu0
    %v1864 = vpack.c.bf16 %v1842, %v1842
    %v1865 = vpack.c.bf16 %v1861, %v1861
    %v1867 = vunpack.c.l.b16 %v1758
    %v1868 = vpack.c.b16 %v1867, %v1867
    %1869 = vrot.lane.b32.xlu0 %v1868, 96
    %v1870 = vpop.permute.xlu0 %1869
    %v1872 = vunpack.c.l.b16 %v1760
    %v1873 = vpack.c.b16 %v1872, %v1872
    %1874 = vrot.lane.b32.xlu0 %v1873, 96
    %v1875 = vpop.permute.xlu0 %1874
    %v1877 = vsel %vm548, %v1870, 0
    %v1880 = vsel %vm548, %v1875, 0
    %1882 = vmatpush.bf16.xpose.msra.mxu0 0
    %1883 = vmatpush.bf16.xpose.msra.mxu0 0
    %1884 = vmatpush.bf16.xpose.msra.mxu0 0
    %1885 = vmatpush.bf16.xpose.msra.mxu0 0
    %1886 = vmatpush.bf16.xpose.msra.mxu0 0
    %1887 = vmatpush.bf16.xpose.msra.mxu0 0
    %1888 = vmatpush.bf16.xpose.msra.mxu0 0
    %1889 = vmatpush.bf16.xpose.msra.mxu0 %v1880
    %1890 = vmatmul.bf16.gmra.mxu0 %v1877
    %v1891 = vpop.f32.mrf.mxu0
    %v1892 = vadd.f32 0.0, %v1891
    %v1893 = vpop.f32.mrf.mxu0
    %1894 = vdwg.mxu0
    %v1896 = vunpack.c.l.b16 %v1759
    %v1897 = vpack.c.b16 %v1896, %v1896
    %1898 = vrot.lane.b32.xlu0 %v1897, 96
    %v1899 = vpop.permute.xlu0 %1898
    %v1901 = vunpack.c.l.b16 %v1761
    %v1902 = vpack.c.b16 %v1901, %v1901
    %1903 = vrot.lane.b32.xlu0 %v1902, 96
    %v1904 = vpop.permute.xlu0 %1903
    %v1906 = vsel %vm548, %v1899, 0
    %v1909 = vsel %vm548, %v1904, 0
    %1911 = vmatpush.bf16.xpose.msra.mxu0 0
    %1912 = vmatpush.bf16.xpose.msra.mxu0 0
    %1913 = vmatpush.bf16.xpose.msra.mxu0 0
    %1914 = vmatpush.bf16.xpose.msra.mxu0 0
    %1915 = vmatpush.bf16.xpose.msra.mxu0 0
    %1916 = vmatpush.bf16.xpose.msra.mxu0 0
    %1917 = vmatpush.bf16.xpose.msra.mxu0 0
    %1918 = vmatpush.bf16.xpose.msra.mxu0 %v1909
    %1919 = vmatmul.bf16.gmra.mxu0 %v1906
    %v1920 = vpop.f32.mrf.mxu0
    %v1921 = vadd.f32 0.0, %v1920
    %v1922 = vpop.f32.mrf.mxu0
    %1923 = vdwg.mxu0
    %v1924 = vsel %vm587, %v1892, -inf
    %1925 = vmax.xlane.f32.xlu0 %v1924
    %v1926 = vpop.xlane.xlu0 %1925
    %v1927 = vsel %vm587, %v1921, -inf
    %1928 = vmax.xlane.f32.xlu0 %v1927
    %v1929 = vpop.xlane.xlu0 %1928
    %v1930 = vsub.f32 %v1892, %v1926
    %v1931 = vsub.f32 %v1921, %v1929
    %v1932 = vmul.f32 %v1930, 1.442695
    %v1933 = vpow.pop %v1932
    %v1934 = vmul.f32 %v1931, 1.442695
    %v1935 = vpow.pop %v1934
    %v1936 = vsel %vm587, %v1933, 0.0
    %1937 = vadd.xlane.f32.xlu0 %v1936
    %v1938 = vpop.xlane.xlu0 %1937
    %v1939 = vsel %vm587, %v1935, 0.0
    %1940 = vadd.xlane.f32.xlu0 %v1939
    %v1941 = vpop.xlane.xlu0 %1940
    %v1942 = vrcp.pop %v1938
    %v1943 = vrcp.pop %v1941
    %v1944 = vmul.f32 %v1933, %v1942
    %v1945 = vmul.f32 %v1935, %v1943
    %v1946 = vpack.c.bf16 %v1944, %v1944
    %v1947 = vpack.c.bf16 %v1945, %v1945
    %v1949 = vunpack.c.l.b16 %v1762
    %v1950 = vpack.c.b16 %v1949, %v1949
    %1951 = vrot.lane.b32.xlu0 %v1950, 96
    %v1952 = vpop.permute.xlu0 %1951
    %v1954 = vsel %vm587, %v1946, 0
    %v1957 = vsel %vm615, %v1952, 0
    %1959 = vmatpush.bf16.msra.mxu0 0
    %1960 = vmatpush.bf16.msra.mxu0 0
    %1961 = vmatpush.bf16.msra.mxu0 0
    %1962 = vmatpush.bf16.msra.mxu0 0
    %1963 = vmatpush.bf16.msra.mxu0 0
    %1964 = vmatpush.bf16.msra.mxu0 0
    %1965 = vmatpush.bf16.msra.mxu0 0
    %1966 = vmatpush.bf16.msra.mxu0 %v1957
    %1967 = vmatmul.bf16.gmra.mxu0 %v1954
    %v1968 = vpop.f32.mrf.mxu0
    %v1969 = vadd.f32 0.0, %v1968
    %v1970 = vpop.f32.mrf.mxu0
    %1971 = vdwg.mxu0
    %v1973 = vunpack.c.l.b16 %v1763
    %v1974 = vpack.c.b16 %v1973, %v1973
    %1975 = vrot.lane.b32.xlu0 %v1974, 96
    %v1976 = vpop.permute.xlu0 %1975
    %v1978 = vsel %vm587, %v1947, 0
    %v1981 = vsel %vm615, %v1976, 0
    %1983 = vmatpush.bf16.msra.mxu0 0
    %1984 = vmatpush.bf16.msra.mxu0 0
    %1985 = vmatpush.bf16.msra.mxu0 0
    %1986 = vmatpush.bf16.msra.mxu0 0
    %1987 = vmatpush.bf16.msra.mxu0 0
    %1988 = vmatpush.bf16.msra.mxu0 0
    %1989 = vmatpush.bf16.msra.mxu0 0
    %1990 = vmatpush.bf16.msra.mxu0 %v1981
    %1991 = vmatmul.bf16.gmra.mxu0 %v1978
    %v1992 = vpop.f32.mrf.mxu0
    %v1993 = vadd.f32 0.0, %v1992
    %v1994 = vpop.f32.mrf.mxu0
    %1995 = vdwg.mxu0
    %v1996 = vpack.c.bf16 %v1969, %v1969
    %v1997 = vpack.c.bf16 %v1993, %v1993
    %1998 = vrot.lane.b32.xlu0 %v1868, 64
    %v1999 = vpop.permute.xlu0 %1998
    %2000 = vrot.lane.b32.xlu0 %v1873, 64
    %v2001 = vpop.permute.xlu0 %2000
    %v2003 = vsel %vm548, %v1999, 0
    %v2006 = vsel %vm548, %v2001, 0
    %2008 = vmatpush.bf16.xpose.msra.mxu0 0
    %2009 = vmatpush.bf16.xpose.msra.mxu0 0
    %2010 = vmatpush.bf16.xpose.msra.mxu0 0
    %2011 = vmatpush.bf16.xpose.msra.mxu0 0
    %2012 = vmatpush.bf16.xpose.msra.mxu0 0
    %2013 = vmatpush.bf16.xpose.msra.mxu0 0
    %2014 = vmatpush.bf16.xpose.msra.mxu0 0
    %2015 = vmatpush.bf16.xpose.msra.mxu0 %v2006
    %2016 = vmatmul.bf16.gmra.mxu0 %v2003
    %v2017 = vpop.f32.mrf.mxu0
    %v2018 = vadd.f32 0.0, %v2017
    %v2019 = vpop.f32.mrf.mxu0
    %2020 = vdwg.mxu0
    %2021 = vrot.lane.b32.xlu0 %v1897, 64
    %v2022 = vpop.permute.xlu0 %2021
    %2023 = vrot.lane.b32.xlu0 %v1902, 64
    %v2024 = vpop.permute.xlu0 %2023
    %v2026 = vsel %vm548, %v2022, 0
    %v2029 = vsel %vm548, %v2024, 0
    %2031 = vmatpush.bf16.xpose.msra.mxu0 0
    %2032 = vmatpush.bf16.xpose.msra.mxu0 0
    %2033 = vmatpush.bf16.xpose.msra.mxu0 0
    %2034 = vmatpush.bf16.xpose.msra.mxu0 0
    %2035 = vmatpush.bf16.xpose.msra.mxu0 0
    %2036 = vmatpush.bf16.xpose.msra.mxu0 0
    %2037 = vmatpush.bf16.xpose.msra.mxu0 0
    %2038 = vmatpush.bf16.xpose.msra.mxu0 %v2029
    %2039 = vmatmul.bf16.gmra.mxu0 %v2026
    %v2040 = vpop.f32.mrf.mxu0
    %v2041 = vadd.f32 0.0, %v2040
    %v2042 = vpop.f32.mrf.mxu0
    %2043 = vdwg.mxu0
    %v2044 = vsel %vm587, %v2018, -inf
    %2045 = vmax.xlane.f32.xlu0 %v2044
    %v2046 = vpop.xlane.xlu0 %2045
    %v2047 = vsel %vm587, %v2041, -inf
    %2048 = vmax.xlane.f32.xlu0 %v2047
    %v2049 = vpop.xlane.xlu0 %2048
    %v2050 = vsub.f32 %v2018, %v2046
    %v2051 = vsub.f32 %v2041, %v2049
    %v2052 = vmul.f32 %v2050, 1.442695
    %v2053 = vpow.pop %v2052
    %v2054 = vmul.f32 %v2051, 1.442695
    %v2055 = vpow.pop %v2054
    %v2056 = vsel %vm587, %v2053, 0.0
    %2057 = vadd.xlane.f32.xlu0 %v2056
    %v2058 = vpop.xlane.xlu0 %2057
    %v2059 = vsel %vm587, %v2055, 0.0
    %2060 = vadd.xlane.f32.xlu0 %v2059
    %v2061 = vpop.xlane.xlu0 %2060
    %v2062 = vrcp.pop %v2058
    %v2063 = vrcp.pop %v2061
    %v2064 = vmul.f32 %v2053, %v2062
    %v2065 = vmul.f32 %v2055, %v2063
    %v2066 = vpack.c.bf16 %v2064, %v2064
    %v2067 = vpack.c.bf16 %v2065, %v2065
    %2068 = vrot.lane.b32.xlu0 %v1950, 64
    %v2069 = vpop.permute.xlu0 %2068
    %v2071 = vsel %vm587, %v2066, 0
    %v2074 = vsel %vm615, %v2069, 0
    %2076 = vmatpush.bf16.msra.mxu0 0
    %2077 = vmatpush.bf16.msra.mxu0 0
    %2078 = vmatpush.bf16.msra.mxu0 0
    %2079 = vmatpush.bf16.msra.mxu0 0
    %2080 = vmatpush.bf16.msra.mxu0 0
    %2081 = vmatpush.bf16.msra.mxu0 0
    %2082 = vmatpush.bf16.msra.mxu0 0
    %2083 = vmatpush.bf16.msra.mxu0 %v2074
    %2084 = vmatmul.bf16.gmra.mxu0 %v2071
    %v2085 = vpop.f32.mrf.mxu0
    %v2086 = vadd.f32 0.0, %v2085
    %v2087 = vpop.f32.mrf.mxu0
    %2088 = vdwg.mxu0
    %2089 = vrot.lane.b32.xlu0 %v1974, 64
    %v2090 = vpop.permute.xlu0 %2089
    %v2092 = vsel %vm587, %v2067, 0
    %v2095 = vsel %vm615, %v2090, 0
    %2097 = vmatpush.bf16.msra.mxu0 0
    %2098 = vmatpush.bf16.msra.mxu0 0
    %2099 = vmatpush.bf16.msra.mxu0 0
    %2100 = vmatpush.bf16.msra.mxu0 0
    %2101 = vmatpush.bf16.msra.mxu0 0
    %2102 = vmatpush.bf16.msra.mxu0 0
    %2103 = vmatpush.bf16.msra.mxu0 0
    %2104 = vmatpush.bf16.msra.mxu0 %v2095
    %2105 = vmatmul.bf16.gmra.mxu0 %v2092
    %v2106 = vpop.f32.mrf.mxu0
    %v2107 = vadd.f32 0.0, %v2106
    %v2108 = vpop.f32.mrf.mxu0
    %2109 = vdwg.mxu0
    %v2110 = vpack.c.bf16 %v2086, %v2086
    %v2111 = vpack.c.bf16 %v2107, %v2107
    %2112 = vrot.lane.b32.xlu0 %v1868, 32
    %v2113 = vpop.permute.xlu0 %2112
    %2114 = vrot.lane.b32.xlu0 %v1873, 32
    %v2115 = vpop.permute.xlu0 %2114
    %v2117 = vsel %vm548, %v2113, 0
    %v2120 = vsel %vm548, %v2115, 0
    %2122 = vmatpush.bf16.xpose.msra.mxu0 0
    %2123 = vmatpush.bf16.xpose.msra.mxu0 0
    %2124 = vmatpush.bf16.xpose.msra.mxu0 0
    %2125 = vmatpush.bf16.xpose.msra.mxu0 0
    %2126 = vmatpush.bf16.xpose.msra.mxu0 0
    %2127 = vmatpush.bf16.xpose.msra.mxu0 0
    %2128 = vmatpush.bf16.xpose.msra.mxu0 0
    %2129 = vmatpush.bf16.xpose.msra.mxu0 %v2120
    %2130 = vmatmul.bf16.gmra.mxu0 %v2117
    %v2131 = vpop.f32.mrf.mxu0
    %v2132 = vadd.f32 0.0, %v2131
    %v2133 = vpop.f32.mrf.mxu0
    %2134 = vdwg.mxu0
    %2135 = vrot.lane.b32.xlu0 %v1897, 32
    %v2136 = vpop.permute.xlu0 %2135
    %2137 = vrot.lane.b32.xlu0 %v1902, 32
    %v2138 = vpop.permute.xlu0 %2137
    %v2140 = vsel %vm548, %v2136, 0
    %v2143 = vsel %vm548, %v2138, 0
    %2145 = vmatpush.bf16.xpose.msra.mxu0 0
    %2146 = vmatpush.bf16.xpose.msra.mxu0 0
    %2147 = vmatpush.bf16.xpose.msra.mxu0 0
    %2148 = vmatpush.bf16.xpose.msra.mxu0 0
    %2149 = vmatpush.bf16.xpose.msra.mxu0 0
    %2150 = vmatpush.bf16.xpose.msra.mxu0 0
    %2151 = vmatpush.bf16.xpose.msra.mxu0 0
    %2152 = vmatpush.bf16.xpose.msra.mxu0 %v2143
    %2153 = vmatmul.bf16.gmra.mxu0 %v2140
    %v2154 = vpop.f32.mrf.mxu0
    %v2155 = vadd.f32 0.0, %v2154
    %v2156 = vpop.f32.mrf.mxu0
    %2157 = vdwg.mxu0
    %v2158 = vsel %vm587, %v2132, -inf
    %2159 = vmax.xlane.f32.xlu0 %v2158
    %v2160 = vpop.xlane.xlu0 %2159
    %v2161 = vsel %vm587, %v2155, -inf
    %2162 = vmax.xlane.f32.xlu0 %v2161
    %v2163 = vpop.xlane.xlu0 %2162
    %v2164 = vsub.f32 %v2132, %v2160
    %v2165 = vsub.f32 %v2155, %v2163
    %v2166 = vmul.f32 %v2164, 1.442695
    %v2167 = vpow.pop %v2166
    %v2168 = vmul.f32 %v2165, 1.442695
    %v2169 = vpow.pop %v2168
    %v2170 = vsel %vm587, %v2167, 0.0
    %2171 = vadd.xlane.f32.xlu0 %v2170
    %v2172 = vpop.xlane.xlu0 %2171
    %v2173 = vsel %vm587, %v2169, 0.0
    %2174 = vadd.xlane.f32.xlu0 %v2173
    %v2175 = vpop.xlane.xlu0 %2174
    %v2176 = vrcp.pop %v2172
    %v2177 = vrcp.pop %v2175
    %v2178 = vmul.f32 %v2167, %v2176
    %v2179 = vmul.f32 %v2169, %v2177
    %v2180 = vpack.c.bf16 %v2178, %v2178
    %v2181 = vpack.c.bf16 %v2179, %v2179
    %2182 = vrot.lane.b32.xlu0 %v1950, 32
    %v2183 = vpop.permute.xlu0 %2182
    %v2185 = vsel %vm587, %v2180, 0
    %v2188 = vsel %vm615, %v2183, 0
    %2190 = vmatpush.bf16.msra.mxu0 0
    %2191 = vmatpush.bf16.msra.mxu0 0
    %2192 = vmatpush.bf16.msra.mxu0 0
    %2193 = vmatpush.bf16.msra.mxu0 0
    %2194 = vmatpush.bf16.msra.mxu0 0
    %2195 = vmatpush.bf16.msra.mxu0 0
    %2196 = vmatpush.bf16.msra.mxu0 0
    %2197 = vmatpush.bf16.msra.mxu0 %v2188
    %2198 = vmatmul.bf16.gmra.mxu0 %v2185
    %v2199 = vpop.f32.mrf.mxu0
    %v2200 = vadd.f32 0.0, %v2199
    %v2201 = vpop.f32.mrf.mxu0
    %2202 = vdwg.mxu0
    %2203 = vrot.lane.b32.xlu0 %v1974, 32
    %v2204 = vpop.permute.xlu0 %2203
    %v2206 = vsel %vm587, %v2181, 0
    %v2209 = vsel %vm615, %v2204, 0
    %2211 = vmatpush.bf16.msra.mxu0 0
    %2212 = vmatpush.bf16.msra.mxu0 0
    %2213 = vmatpush.bf16.msra.mxu0 0
    %2214 = vmatpush.bf16.msra.mxu0 0
    %2215 = vmatpush.bf16.msra.mxu0 0
    %2216 = vmatpush.bf16.msra.mxu0 0
    %2217 = vmatpush.bf16.msra.mxu0 0
    %2218 = vmatpush.bf16.msra.mxu0 %v2209
    %2219 = vmatmul.bf16.gmra.mxu0 %v2206
    %v2220 = vpop.f32.mrf.mxu0
    %v2221 = vadd.f32 0.0, %v2220
    %v2222 = vpop.f32.mrf.mxu0
    %2223 = vdwg.mxu0
    %v2224 = vpack.c.bf16 %v2200, %v2200
    %v2225 = vpack.c.bf16 %v2221, %v2221
    %v2228 = vunpack.c.l.b16 %v1864
    %v2229 = vunpack.c.l.b16 %v1865
    %v2230 = vpack.c.b16 %v2229, %v2228
    %v2233 = vunpack.c.l.b16 %v1996
    %v2234 = vunpack.c.l.b16 %v1997
    %v2235 = vpack.c.b16 %v2234, %v2233
    %2236 = vrot.lane.b32.xlu0 %v2235, 32
    %v2237 = vpop.permute.xlu0 %2236
    %v2240 = vunpack.c.l.b16 %v2110
    %v2241 = vunpack.c.l.b16 %v2111
    %v2242 = vpack.c.b16 %v2241, %v2240
    %2243 = vrot.lane.b32.xlu0 %v2242, 64
    %v2244 = vpop.permute.xlu0 %2243
    %v2247 = vunpack.c.l.b16 %v2224
    %v2248 = vunpack.c.l.b16 %v2225
    %v2249 = vpack.c.b16 %v2248, %v2247
    %2250 = vrot.lane.b32.xlu0 %v2249, 96
    %v2251 = vpop.permute.xlu0 %2250
    %v2254 = vsel %vm548, %v2230, %v2237
    %v2256 = vsel %vm1042, %v2254, %v2244
    %v2258 = vsel %vm1045, %v2256, %v2251
    %s2260 = scalar_lea.vmem [#allocation6], 64
    %v2261 = vld [vmem:[%s2260] sm:$0xf]
    %v2262 = vld [vmem:[%s2260 + $0x4] sm:$0xf]
    %v2263 = vld [vmem:[%s2260 + $0x8] sm:$0xf]
    %v2264 = vld [vmem:[%s2260 + $0xc] sm:$0xf]
    %v2265 = vld [vmem:[%s2260 + $0x10] sm:$0xf]
    %v2266 = vld [vmem:[%s2260 + $0x14] sm:$0xf]
    %v2267 = vld [vmem:[%s2260 + $0x18] sm:$0xf]
    %v2268 = vld [vmem:[%s2260 + $0x1c] sm:$0xf]
    %v2269 = vld [vmem:[%s2260 + $0x20] sm:$0xf]
    %v2270 = vld [vmem:[%s2260 + $0x24] sm:$0xf]
    %v2271 = vld [vmem:[%s2260 + $0x28] sm:$0xf]
    %v2272 = vld [vmem:[%s2260 + $0x2c] sm:$0xf]
    %v2273 = vld [vmem:[%s2260 + $0x30] sm:$0xf]
    %v2274 = vld [vmem:[%s2260 + $0x34] sm:$0xf]
    %v2275 = vld [vmem:[%s2260 + $0x38] sm:$0xf]
    %v2276 = vld [vmem:[%s2260 + $0x3c] sm:$0xf]
    %s2277 = scalar_lea.vmem %s5, 1
    %v2278 = vld [vmem:[%s2277] sm:$0x1]
    %v2280 = vperm.slane %v2278, 0
    %v2298 = vunpack.c.l.b16 %v2261
    %v2299 = vunpack.c.l.b16 %v2262
    %v2300 = vunpack.c.l.b16 %v2263
    %v2301 = vunpack.c.l.b16 %v2264
    %v2302 = vunpack.c.l.b16 %v2265
    %v2303 = vunpack.c.l.b16 %v2266
    %v2304 = vunpack.c.l.b16 %v2267
    %v2305 = vunpack.c.l.b16 %v2268
    %v2306 = vunpack.c.l.b16 %v2269
    %v2307 = vunpack.c.l.b16 %v2270
    %v2308 = vunpack.c.l.b16 %v2271
    %v2309 = vunpack.c.l.b16 %v2272
    %v2310 = vunpack.c.l.b16 %v2273
    %v2311 = vunpack.c.l.b16 %v2274
    %v2312 = vunpack.c.l.b16 %v2275
    %v2313 = vunpack.c.l.b16 %v2276
    %v2314 = vpack.c.b16 %v2299, %v2298
    %v2315 = vpack.c.b16 %v2301, %v2300
    %v2316 = vpack.c.b16 %v2303, %v2302
    %v2317 = vpack.c.b16 %v2305, %v2304
    %v2318 = vpack.c.b16 %v2307, %v2306
    %v2319 = vpack.c.b16 %v2309, %v2308
    %v2320 = vpack.c.b16 %v2311, %v2310
    %v2321 = vpack.c.b16 %v2313, %v2312
    %2330 = vmatpush.bf16.msra.mxu0 %v2321
    %2331 = vmatpush.bf16.msra.mxu0 %v2320
    %2332 = vmatpush.bf16.msra.mxu0 %v2319
    %2333 = vmatpush.bf16.msra.mxu0 %v2318
    %2334 = vmatpush.bf16.msra.mxu0 %v2317
    %2335 = vmatpush.bf16.msra.mxu0 %v2316
    %2336 = vmatpush.bf16.msra.mxu0 %v2315
    %2337 = vmatpush.bf16.msra.mxu0 %v2314
    %2338 = vmatmul.bf16.gmra.mxu0 %v2258
    %v2339 = vpop.f32.mrf.mxu0
    %v2340 = vadd.f32 %v2280, %v2339
    %v2341 = vpop.f32.mrf.mxu0
    %v2342 = vadd.f32 %v2280, %v2341
    %2343 = vdwg.mxu0
    %v2344 = vadd.f32 %v1541, %v2340
    %v2345 = vadd.f32 %v1542, %v2342
    %s2346 = scalar_lea.vmem %s6, 1
    %v2347 = vld [vmem:[%s2346] sm:$0x1]
    %s2348 = scalar_lea.vmem %s7, 1
    %v2349 = vld [vmem:[%s2348] sm:$0x1]
    %2350 = vadd.xlane.f32.xlu0 %v2344
    %v2351 = vpop.xlane.xlu0 %2350
    %2352 = vadd.xlane.f32.xlu0 %v2345
    %v2353 = vpop.xlane.xlu0 %2352
    %v2354 = vmul.f32 %v2351, %v1145
    %v2355 = vmul.f32 %v2353, %v1145
    %v2356 = vsub.f32 %v2344, %v2354
    %v2357 = vsub.f32 %v2345, %v2355
    %v2358 = vmul.f32 %v2356, %v2356
    %v2359 = vmul.f32 %v2357, %v2357
    %2360 = vadd.xlane.f32.xlu0 %v2358
    %v2361 = vpop.xlane.xlu0 %2360
    %2362 = vadd.xlane.f32.xlu0 %v2359
    %v2363 = vpop.xlane.xlu0 %2362
    %v2364 = vmul.f32 %v2361, %v1145
    %v2365 = vmul.f32 %v2363, %v1145
    %v2366 = vadd.f32 %v2364, 1e-05
    %v2367 = vadd.f32 %v2365, 1e-05
    %v2368 = vrsqrt.pop %v2366
    %v2369 = vmul.f32 %v2368, %v2366
    %v2370 = vmul.f32 %v2369, %v2368
    %v2371 = vmul.f32 0.5, %v2370
    %v2372 = vsub.f32 1.5, %v2371
    %v2373 = vmul.f32 %v2368, %v2372
    %vm2374 = vweird.f32 %v2366
    %vm2375 = vweird.f32 %v2368
    %vm2376 = vmor %vm2374, %vm2375
    %v2377 = vsel %vm2376, %v2368, %v2373
    %v2378 = vrsqrt.pop %v2367
    %v2379 = vmul.f32 %v2378, %v2367
    %v2380 = vmul.f32 %v2379, %v2378
    %v2381 = vmul.f32 0.5, %v2380
    %v2382 = vsub.f32 1.5, %v2381
    %v2383 = vmul.f32 %v2378, %v2382
    %vm2384 = vweird.f32 %v2367
    %vm2385 = vweird.f32 %v2378
    %vm2386 = vmor %vm2384, %vm2385
    %v2387 = vsel %vm2386, %v2378, %v2383
    %v2388 = vmul.f32 %v2356, %v2377
    %v2389 = vmul.f32 %v2357, %v2387
    %v2391 = vperm.slane %v2347, 0
    %v2393 = vmul.f32 %v2388, %v2391
    %v2394 = vmul.f32 %v2389, %v2391
    %v2396 = vperm.slane %v2349, 0
    %v2398 = vadd.f32 %v2393, %v2396
    %v2399 = vadd.f32 %v2394, %v2396
    %v2400 = vpack.c.bf16 %v2399, %v2398
    %s2401 = scalar_lea.vmem [#allocation7], 128
    %v2402 = vld [vmem:[%s2401] sm:$0xff]
    %v2403 = vld [vmem:[%s2401 + $0x8] sm:$0xff]
    %v2404 = vld [vmem:[%s2401 + $0x10] sm:$0xff]
    %v2405 = vld [vmem:[%s2401 + $0x18] sm:$0xff]
    %v2406 = vld [vmem:[%s2401 + $0x20] sm:$0xff]
    %v2407 = vld [vmem:[%s2401 + $0x28] sm:$0xff]
    %v2408 = vld [vmem:[%s2401 + $0x30] sm:$0xff]
    %v2409 = vld [vmem:[%s2401 + $0x38] sm:$0xff]
    %v2410 = vld [vmem:[%s2401 + $0x40] sm:$0xff]
    %v2411 = vld [vmem:[%s2401 + $0x48] sm:$0xff]
    %v2412 = vld [vmem:[%s2401 + $0x50] sm:$0xff]
    %v2413 = vld [vmem:[%s2401 + $0x58] sm:$0xff]
    %v2414 = vld [vmem:[%s2401 + $0x60] sm:$0xff]
    %v2415 = vld [vmem:[%s2401 + $0x68] sm:$0xff]
    %v2416 = vld [vmem:[%s2401 + $0x70] sm:$0xff]
    %v2417 = vld [vmem:[%s2401 + $0x78] sm:$0xff]
    %s2418 = scalar_lea.vmem %s9, 2
    %v2419 = vld [vmem:[%s2418] sm:$0x3]
    %v2421 = vperm.slane %v2419, 0
    %v2422 = vperm.slane %v2419, 1
    %v2441 = vunpack.c.l.b16 %v2402
    %v2442 = vunpack.c.h.b16 %v2402
    %v2443 = vunpack.c.l.b16 %v2403
    %v2444 = vunpack.c.h.b16 %v2403
    %v2445 = vunpack.c.l.b16 %v2404
    %v2446 = vunpack.c.h.b16 %v2404
    %v2447 = vunpack.c.l.b16 %v2405
    %v2448 = vunpack.c.h.b16 %v2405
    %v2449 = vunpack.c.l.b16 %v2406
    %v2450 = vunpack.c.h.b16 %v2406
    %v2451 = vunpack.c.l.b16 %v2407
    %v2452 = vunpack.c.h.b16 %v2407
    %v2453 = vunpack.c.l.b16 %v2408
    %v2454 = vunpack.c.h.b16 %v2408
    %v2455 = vunpack.c.l.b16 %v2409
    %v2456 = vunpack.c.h.b16 %v2409
    %v2457 = vunpack.c.l.b16 %v2410
    %v2458 = vunpack.c.h.b16 %v2410
    %v2459 = vunpack.c.l.b16 %v2411
    %v2460 = vunpack.c.h.b16 %v2411
    %v2461 = vunpack.c.l.b16 %v2412
    %v2462 = vunpack.c.h.b16 %v2412
    %v2463 = vunpack.c.l.b16 %v2413
    %v2464 = vunpack.c.h.b16 %v2413
    %v2465 = vunpack.c.l.b16 %v2414
    %v2466 = vunpack.c.h.b16 %v2414
    %v2467 = vunpack.c.l.b16 %v2415
    %v2468 = vunpack.c.h.b16 %v2415
    %v2469 = vunpack.c.l.b16 %v2416
    %v2470 = vunpack.c.h.b16 %v2416
    %v2471 = vunpack.c.l.b16 %v2417
    %v2472 = vunpack.c.h.b16 %v2417
    %v2473 = vpack.c.b16 %v2443, %v2441
    %v2474 = vpack.c.b16 %v2444, %v2442
    %v2475 = vpack.c.b16 %v2447, %v2445
    %v2476 = vpack.c.b16 %v2448, %v2446
    %v2477 = vpack.c.b16 %v2451, %v2449
    %v2478 = vpack.c.b16 %v2452, %v2450
    %v2479 = vpack.c.b16 %v2455, %v2453
    %v2480 = vpack.c.b16 %v2456, %v2454
    %v2481 = vpack.c.b16 %v2459, %v2457
    %v2482 = vpack.c.b16 %v2460, %v2458
    %v2483 = vpack.c.b16 %v2463, %v2461
    %v2484 = vpack.c.b16 %v2464, %v2462
    %v2485 = vpack.c.b16 %v2467, %v2465
    %v2486 = vpack.c.b16 %v2468, %v2466
    %v2487 = vpack.c.b16 %v2471, %v2469
    %v2488 = vpack.c.b16 %v2472, %v2470
    %2505 = vmatpush.bf16.msra.mxu0 %v2487
    %2506 = vmatpush.bf16.msra.mxu0 %v2485
    %2507 = vmatpush.bf16.msra.mxu0 %v2483
    %2508 = vmatpush.bf16.msra.mxu0 %v2481
    %2509 = vmatpush.bf16.msra.mxu0 %v2479
    %2510 = vmatpush.bf16.msra.mxu0 %v2477
    %2511 = vmatpush.bf16.msra.mxu0 %v2475
    %2512 = vmatpush.bf16.msra.mxu0 %v2473
    %2513 = vmatmul.bf16.gmra.mxu0 %v2400
    %v2514 = vpop.f32.mrf.mxu0
    %v2515 = vadd.f32 %v2421, %v2514
    %v2516 = vpop.f32.mrf.mxu0
    %v2517 = vadd.f32 %v2421, %v2516
    %2518 = vdwg.mxu0
    %2519 = vmatpush.bf16.msra.mxu0 %v2488
    %2520 = vmatpush.bf16.msra.mxu0 %v2486
    %2521 = vmatpush.bf16.msra.mxu0 %v2484
    %2522 = vmatpush.bf16.msra.mxu0 %v2482
    %2523 = vmatpush.bf16.msra.mxu0 %v2480
    %2524 = vmatpush.bf16.msra.mxu0 %v2478
    %2525 = vmatpush.bf16.msra.mxu0 %v2476
    %2526 = vmatpush.bf16.msra.mxu0 %v2474
    %2527 = vmatmul.bf16.gmra.mxu0 %v2400
    %v2528 = vpop.f32.mrf.mxu0
    %v2529 = vadd.f32 %v2422, %v2528
    %v2530 = vpop.f32.mrf.mxu0
    %v2531 = vadd.f32 %v2422, %v2530
    %2532 = vdwg.mxu0
    %v2533 = vmax.f32 %v2515, 0.0
    %v2534 = vmax.f32 %v2529, 0.0
    %v2535 = vmax.f32 %v2517, 0.0
    %v2536 = vmax.f32 %v2531, 0.0
    %v2537 = vpack.c.bf16 %v2535, %v2533
    %v2538 = vpack.c.bf16 %v2536, %v2534
    %s2539 = scalar_lea.vmem [#allocation9], 128
    %v2540 = vld [vmem:[%s2539] sm:$0xf]
    %v2541 = vld [vmem:[%s2539 + $0x4] sm:$0xf]
    %v2542 = vld [vmem:[%s2539 + $0x8] sm:$0xf]
    %v2543 = vld [vmem:[%s2539 + $0xc] sm:$0xf]
    %v2544 = vld [vmem:[%s2539 + $0x10] sm:$0xf]
    %v2545 = vld [vmem:[%s2539 + $0x14] sm:$0xf]
    %v2546 = vld [vmem:[%s2539 + $0x18] sm:$0xf]
    %v2547 = vld [vmem:[%s2539 + $0x1c] sm:$0xf]
    %v2548 = vld [vmem:[%s2539 + $0x20] sm:$0xf]
    %v2549 = vld [vmem:[%s2539 + $0x24] sm:$0xf]
    %v2550 = vld [vmem:[%s2539 + $0x28] sm:$0xf]
    %v2551 = vld [vmem:[%s2539 + $0x2c] sm:$0xf]
    %v2552 = vld [vmem:[%s2539 + $0x30] sm:$0xf]
    %v2553 = vld [vmem:[%s2539 + $0x34] sm:$0xf]
    %v2554 = vld [vmem:[%s2539 + $0x38] sm:$0xf]
    %v2555 = vld [vmem:[%s2539 + $0x3c] sm:$0xf]
    %v2556 = vld [vmem:[%s2539 + $0x40] sm:$0xf]
    %v2557 = vld [vmem:[%s2539 + $0x44] sm:$0xf]
    %v2558 = vld [vmem:[%s2539 + $0x48] sm:$0xf]
    %v2559 = vld [vmem:[%s2539 + $0x4c] sm:$0xf]
    %v2560 = vld [vmem:[%s2539 + $0x50] sm:$0xf]
    %v2561 = vld [vmem:[%s2539 + $0x54] sm:$0xf]
    %v2562 = vld [vmem:[%s2539 + $0x58] sm:$0xf]
    %v2563 = vld [vmem:[%s2539 + $0x5c] sm:$0xf]
    %v2564 = vld [vmem:[%s2539 + $0x60] sm:$0xf]
    %v2565 = vld [vmem:[%s2539 + $0x64] sm:$0xf]
    %v2566 = vld [vmem:[%s2539 + $0x68] sm:$0xf]
    %v2567 = vld [vmem:[%s2539 + $0x6c] sm:$0xf]
    %v2568 = vld [vmem:[%s2539 + $0x70] sm:$0xf]
    %v2569 = vld [vmem:[%s2539 + $0x74] sm:$0xf]
    %v2570 = vld [vmem:[%s2539 + $0x78] sm:$0xf]
    %v2571 = vld [vmem:[%s2539 + $0x7c] sm:$0xf]
    %s2572 = scalar_lea.vmem %s11, 1
    %v2573 = vld [vmem:[%s2572] sm:$0x1]
    %v2575 = vperm.slane %v2573, 0
    %v2609 = vunpack.c.l.b16 %v2540
    %v2610 = vunpack.c.l.b16 %v2541
    %v2611 = vunpack.c.l.b16 %v2542
    %v2612 = vunpack.c.l.b16 %v2543
    %v2613 = vunpack.c.l.b16 %v2544
    %v2614 = vunpack.c.l.b16 %v2545
    %v2615 = vunpack.c.l.b16 %v2546
    %v2616 = vunpack.c.l.b16 %v2547
    %v2617 = vunpack.c.l.b16 %v2548
    %v2618 = vunpack.c.l.b16 %v2549
    %v2619 = vunpack.c.l.b16 %v2550
    %v2620 = vunpack.c.l.b16 %v2551
    %v2621 = vunpack.c.l.b16 %v2552
    %v2622 = vunpack.c.l.b16 %v2553
    %v2623 = vunpack.c.l.b16 %v2554
    %v2624 = vunpack.c.l.b16 %v2555
    %v2625 = vunpack.c.l.b16 %v2556
    %v2626 = vunpack.c.l.b16 %v2557
    %v2627 = vunpack.c.l.b16 %v2558
    %v2628 = vunpack.c.l.b16 %v2559
    %v2629 = vunpack.c.l.b16 %v2560
    %v2630 = vunpack.c.l.b16 %v2561
    %v2631 = vunpack.c.l.b16 %v2562
    %v2632 = vunpack.c.l.b16 %v2563
    %v2633 = vunpack.c.l.b16 %v2564
    %v2634 = vunpack.c.l.b16 %v2565
    %v2635 = vunpack.c.l.b16 %v2566
    %v2636 = vunpack.c.l.b16 %v2567
    %v2637 = vunpack.c.l.b16 %v2568
    %v2638 = vunpack.c.l.b16 %v2569
    %v2639 = vunpack.c.l.b16 %v2570
    %v2640 = vunpack.c.l.b16 %v2571
    %v2641 = vpack.c.b16 %v2610, %v2609
    %v2642 = vpack.c.b16 %v2612, %v2611
    %v2643 = vpack.c.b16 %v2614, %v2613
    %v2644 = vpack.c.b16 %v2616, %v2615
    %v2645 = vpack.c.b16 %v2618, %v2617
    %v2646 = vpack.c.b16 %v2620, %v2619
    %v2647 = vpack.c.b16 %v2622, %v2621
    %v2648 = vpack.c.b16 %v2624, %v2623
    %v2649 = vpack.c.b16 %v2626, %v2625
    %v2650 = vpack.c.b16 %v2628, %v2627
    %v2651 = vpack.c.b16 %v2630, %v2629
    %v2652 = vpack.c.b16 %v2632, %v2631
    %v2653 = vpack.c.b16 %v2634, %v2633
    %v2654 = vpack.c.b16 %v2636, %v2635
    %v2655 = vpack.c.b16 %v2638, %v2637
    %v2656 = vpack.c.b16 %v2640, %v2639
    %2673 = vmatpush.bf16.msra.mxu0 %v2648
    %2674 = vmatpush.bf16.msra.mxu0 %v2647
    %2675 = vmatpush.bf16.msra.mxu0 %v2646
    %2676 = vmatpush.bf16.msra.mxu0 %v2645
    %2677 = vmatpush.bf16.msra.mxu0 %v2644
    %2678 = vmatpush.bf16.msra.mxu0 %v2643
    %2679 = vmatpush.bf16.msra.mxu0 %v2642
    %2680 = vmatpush.bf16.msra.mxu0 %v2641
    %2681 = vmatmul.bf16.gmra.mxu0 %v2537
    %v2682 = vpop.f32.mrf.mxu0
    %v2683 = vadd.f32 %v2575, %v2682
    %v2684 = vpop.f32.mrf.mxu0
    %v2685 = vadd.f32 %v2575, %v2684
    %2686 = vdwg.mxu0
    %2687 = vmatpush.bf16.msra.mxu0 %v2656
    %2688 = vmatpush.bf16.msra.mxu0 %v2655
    %2689 = vmatpush.bf16.msra.mxu0 %v2654
    %2690 = vmatpush.bf16.msra.mxu0 %v2653
    %2691 = vmatpush.bf16.msra.mxu0 %v2652
    %2692 = vmatpush.bf16.msra.mxu0 %v2651
    %2693 = vmatpush.bf16.msra.mxu0 %v2650
    %2694 = vmatpush.bf16.msra.mxu0 %v2649
    %2695 = vmatmul.bf16.gmra.mxu0 %v2538
    %v2696 = vpop.f32.mrf.mxu0
    %v2697 = vadd.f32 %v2683, %v2696
    %v2698 = vpop.f32.mrf.mxu0
    %v2699 = vadd.f32 %v2685, %v2698
    %2700 = vdwg.mxu0
    %v2701 = vadd.f32 %v2398, %v2697
    %v2702 = vadd.f32 %v2399, %v2699
    %s2703 = scalar_lea.vmem %s12, 1
    %v2704 = vld [vmem:[%s2703] sm:$0x1]
    %s2705 = scalar_lea.vmem %s13, 1
    %v2706 = vld [vmem:[%s2705] sm:$0x1]
    %2707 = vadd.xlane.f32.xlu0 %v2701
    %v2708 = vpop.xlane.xlu0 %2707
    %2709 = vadd.xlane.f32.xlu0 %v2702
    %v2710 = vpop.xlane.xlu0 %2709
    %v2711 = vmul.f32 %v2708, %v1145
    %v2712 = vmul.f32 %v2710, %v1145
    %v2713 = vsub.f32 %v2701, %v2711
    %v2714 = vsub.f32 %v2702, %v2712
    %v2715 = vmul.f32 %v2713, %v2713
    %v2716 = vmul.f32 %v2714, %v2714
    %2717 = vadd.xlane.f32.xlu0 %v2715
    %v2718 = vpop.xlane.xlu0 %2717
    %2719 = vadd.xlane.f32.xlu0 %v2716
    %v2720 = vpop.xlane.xlu0 %2719
    %v2721 = vmul.f32 %v2718, %v1145
    %v2722 = vmul.f32 %v2720, %v1145
    %v2723 = vadd.f32 %v2721, 1e-05
    %v2724 = vadd.f32 %v2722, 1e-05
    %v2725 = vrsqrt.pop %v2723
    %v2726 = vmul.f32 %v2725, %v2723
    %v2727 = vmul.f32 %v2726, %v2725
    %v2728 = vmul.f32 0.5, %v2727
    %v2729 = vsub.f32 1.5, %v2728
    %v2730 = vmul.f32 %v2725, %v2729
    %vm2731 = vweird.f32 %v2723
    %vm2732 = vweird.f32 %v2725
    %vm2733 = vmor %vm2731, %vm2732
    %v2734 = vsel %vm2733, %v2725, %v2730
    %v2735 = vrsqrt.pop %v2724
    %v2736 = vmul.f32 %v2735, %v2724
    %v2737 = vmul.f32 %v2736, %v2735
    %v2738 = vmul.f32 0.5, %v2737
    %v2739 = vsub.f32 1.5, %v2738
    %v2740 = vmul.f32 %v2735, %v2739
    %vm2741 = vweird.f32 %v2724
    %vm2742 = vweird.f32 %v2735
    %vm2743 = vmor %vm2741, %vm2742
    %v2744 = vsel %vm2743, %v2735, %v2740
    %v2745 = vmul.f32 %v2713, %v2734
    %v2746 = vmul.f32 %v2714, %v2744
    %v2748 = vperm.slane %v2704, 0
    %v2750 = vmul.f32 %v2745, %v2748
    %v2751 = vmul.f32 %v2746, %v2748
    %v2753 = vperm.slane %v2706, 0
    %v2755 = vadd.f32 %v2750, %v2753
    %v2756 = vadd.f32 %v2751, %v2753
    %v2757 = vpack.c.bf16 %v2756, %v2755
    %v2758 = vld [vmem:[#allocation10] sm:$0xff]
    %v2759 = vld [vmem:[#allocation10 + $0x8] sm:$0xff]
    %v2760 = vld [vmem:[#allocation10 + $0x10] sm:$0xff]
    %v2761 = vld [vmem:[#allocation10 + $0x18] sm:$0xff]
    %v2762 = vld [vmem:[#allocation10 + $0x20] sm:$0xff]
    %v2763 = vld [vmem:[#allocation10 + $0x28] sm:$0xff]
    %v2764 = vld [vmem:[#allocation10 + $0x30] sm:$0xff]
    %v2765 = vld [vmem:[#allocation10 + $0x38] sm:$0xff]
    %v2766 = vld [vmem:[#allocation10 + $0x40] sm:$0xff]
    %v2767 = vld [vmem:[#allocation10 + $0x48] sm:$0xff]
    %v2768 = vld [vmem:[#allocation10 + $0x50] sm:$0xff]
    %v2769 = vld [vmem:[#allocation10 + $0x58] sm:$0xff]
    %v2770 = vld [vmem:[#allocation10 + $0x60] sm:$0xff]
    %v2771 = vld [vmem:[#allocation10 + $0x68] sm:$0xff]
    %v2772 = vld [vmem:[#allocation10 + $0x70] sm:$0xff]
    %v2773 = vld [vmem:[#allocation10 + $0x78] sm:$0xff]
    %v2774 = vld [vmem:[%s15] sm:$0x3]
    %v2776 = vperm.slane %v2774, 0
    %v2777 = vperm.slane %v2774, 1
    %v2796 = vunpack.c.l.b16 %v2758
    %v2797 = vunpack.c.h.b16 %v2758
    %v2798 = vunpack.c.l.b16 %v2759
    %v2799 = vunpack.c.h.b16 %v2759
    %v2800 = vunpack.c.l.b16 %v2760
    %v2801 = vunpack.c.h.b16 %v2760
    %v2802 = vunpack.c.l.b16 %v2761
    %v2803 = vunpack.c.h.b16 %v2761
    %v2804 = vunpack.c.l.b16 %v2762
    %v2805 = vunpack.c.h.b16 %v2762
    %v2806 = vunpack.c.l.b16 %v2763
    %v2807 = vunpack.c.h.b16 %v2763
    %v2808 = vunpack.c.l.b16 %v2764
    %v2809 = vunpack.c.h.b16 %v2764
    %v2810 = vunpack.c.l.b16 %v2765
    %v2811 = vunpack.c.h.b16 %v2765
    %v2812 = vunpack.c.l.b16 %v2766
    %v2813 = vunpack.c.h.b16 %v2766
    %v2814 = vunpack.c.l.b16 %v2767
    %v2815 = vunpack.c.h.b16 %v2767
    %v2816 = vunpack.c.l.b16 %v2768
    %v2817 = vunpack.c.h.b16 %v2768
    %v2818 = vunpack.c.l.b16 %v2769
    %v2819 = vunpack.c.h.b16 %v2769
    %v2820 = vunpack.c.l.b16 %v2770
    %v2821 = vunpack.c.h.b16 %v2770
    %v2822 = vunpack.c.l.b16 %v2771
    %v2823 = vunpack.c.h.b16 %v2771
    %v2824 = vunpack.c.l.b16 %v2772
    %v2825 = vunpack.c.h.b16 %v2772
    %v2826 = vunpack.c.l.b16 %v2773
    %v2827 = vunpack.c.h.b16 %v2773
    %v2828 = vpack.c.b16 %v2798, %v2796
    %v2829 = vpack.c.b16 %v2799, %v2797
    %v2830 = vpack.c.b16 %v2802, %v2800
    %v2831 = vpack.c.b16 %v2803, %v2801
    %v2832 = vpack.c.b16 %v2806, %v2804
    %v2833 = vpack.c.b16 %v2807, %v2805
    %v2834 = vpack.c.b16 %v2810, %v2808
    %v2835 = vpack.c.b16 %v2811, %v2809
    %v2836 = vpack.c.b16 %v2814, %v2812
    %v2837 = vpack.c.b16 %v2815, %v2813
    %v2838 = vpack.c.b16 %v2818, %v2816
    %v2839 = vpack.c.b16 %v2819, %v2817
    %v2840 = vpack.c.b16 %v2822, %v2820
    %v2841 = vpack.c.b16 %v2823, %v2821
    %v2842 = vpack.c.b16 %v2826, %v2824
    %v2843 = vpack.c.b16 %v2827, %v2825
    %2860 = vmatpush.bf16.msra.mxu0 %v2842
    %2861 = vmatpush.bf16.msra.mxu0 %v2840
    %2862 = vmatpush.bf16.msra.mxu0 %v2838
    %2863 = vmatpush.bf16.msra.mxu0 %v2836
    %2864 = vmatpush.bf16.msra.mxu0 %v2834
    %2865 = vmatpush.bf16.msra.mxu0 %v2832
    %2866 = vmatpush.bf16.msra.mxu0 %v2830
    %2867 = vmatpush.bf16.msra.mxu0 %v2828
    %2868 = vmatmul.bf16.gmra.mxu0 %v2757
    %v2869 = vpop.f32.mrf.mxu0
    %v2870 = vadd.f32 %v2776, %v2869
    %v2871 = vpop.f32.mrf.mxu0
    %v2872 = vadd.f32 %v2776, %v2871
    %2873 = vdwg.mxu0
    %2874 = vmatpush.bf16.msra.mxu0 %v2843
    %2875 = vmatpush.bf16.msra.mxu0 %v2841
    %2876 = vmatpush.bf16.msra.mxu0 %v2839
    %2877 = vmatpush.bf16.msra.mxu0 %v2837
    %2878 = vmatpush.bf16.msra.mxu0 %v2835
    %2879 = vmatpush.bf16.msra.mxu0 %v2833
    %2880 = vmatpush.bf16.msra.mxu0 %v2831
    %2881 = vmatpush.bf16.msra.mxu0 %v2829
    %2882 = vmatmul.bf16.gmra.mxu0 %v2757
    %v2883 = vpop.f32.mrf.mxu0
    %v2884 = vadd.f32 %v2777, %v2883
    %v2885 = vpop.f32.mrf.mxu0
    %v2886 = vadd.f32 %v2777, %v2885
    %2887 = vdwg.mxu0
    %2888 = vst [vmem:[%s16] sm:$0xff] %v2870
    %2889 = vst [vmem:[%s16 + $0x8] sm:$0xff] %v2884
    %2890 = vst [vmem:[%s16 + $0x10] sm:$0xff] %v2872
    %2891 = vst [vmem:[%s16 + $0x18] sm:$0xff] %v2886
    // Predicated region
    $region90: #{simple_transformer_forward.1} parent=1 // pred_check
      _
    $region91: #{simple_transformer_forward.1} parent=1 // pred_check_branch
      %2893 = sbr.rel (0) target = $region93
    $region92: #{simple_transformer_forward.1} parent=1 // pred_region
      _
    $region93: #{simple_transformer_forward.1} parent=1 // pred_fallthru
      _
    // Predicated region
    $region94: #{simple_transformer_forward.1} parent=1 // pred_check
      _
    $region95: #{simple_transformer_forward.1} parent=1 // pred_check_branch
      %2895 = sbr.rel (0) target = $region97
    $region96: #{simple_transformer_forward.1} parent=1 // pred_region
      _
    $region97: #{simple_transformer_forward.1} parent=1 // pred_fallthru
      _
    %2896 = vsyncpa [#allocation3], 1
    %2897 = vsyncpa [#allocation5], 1
    %2898 = vsyncpa [#allocation8], 1
    %2899 = vsyncpa [#allocation11], 1

</llo_original>
